<compile_context>
chip_gen: v5e
topology: v5e:2x2
jax: 0.10.0
libtpu: 0.0.40
codegen_flags: <defaults>
</compile_context>

<pallas_src>
import functools

import jax
import jax.numpy as jnp
from jax import lax
from jax.experimental import pallas as pl
from jax.experimental.pallas import tpu as pltpu

VMEM_SPEC = pl.BlockSpec(memory_space=pltpu.MemorySpace.VMEM)
F32 = jnp.float32


def _leaky_relu(x, slope=0.2):
    return jnp.where(x > 0, x, slope * x)


def _type_attention(xs, w, b, a1, a2, idx):
    """Type-level SelfAttention over T same-shape per-type inputs.

    xs : list of T arrays, each (N, F)   (un-projected per-type representations)
    w  : (F, H) linear weight    b : (1, H) linear bias
    a1 : (H, 1) first half of `a` (center part)    a2 : (H, 1) second half
    """
    T = len(xs)
    N = xs[0].shape[0]
    # One projection matmul + one bias broadcast for all T types (no per-type re-broadcast).
    xcat = jnp.concatenate(xs, axis=0)                                     # (T*N, F)
    hcat = jnp.dot(xcat, w, preferred_element_type=F32) + b                # (T*N, H)
    ecat = jnp.dot(hcat, a2, preferred_element_type=F32)                   # (T*N, 1)
    center = jnp.dot(hcat[idx * N:(idx + 1) * N, :], a1,
                     preferred_element_type=F32)                           # (N, 1)
    es = [_leaky_relu(center + ecat[t * N:(t + 1) * N, :]) for t in range(T)]
    # Online softmax over types, kept in (N, 1) columns (avoids lane-masked (N, T) tensor).
    m = es[0]
    for t in range(1, T):
        m = jnp.maximum(m, es[t])
    ps = [jnp.exp(e - m) for e in es]
    denom = ps[0]
    for t in range(1, T):
        denom = denom + ps[t]
    inv = 1.0 / denom
    out = (ps[0] * inv) * xs[0]
    for t in range(1, T):
        out = out + (ps[t] * inv) * xs[t]                                  # attn^T @ inputs
    return out


def _hgat_fused_kernel(ntype, gamma, *refs):
    it = iter(refs)

    def take(n):
        return [next(it) for _ in range(n)]

    x_refs = take(ntype)
    adj_refs = take(ntype * ntype)          # row-major: adj[t1 * ntype + t2]
    gc1_W = take(ntype)
    (gc1_b,) = take(1)
    gc1_a1 = take(ntype)
    gc1_a2 = take(ntype)
    (gc2_W,) = take(1)
    (gc2_b,) = take(1)
    at1_W = take(ntype); at1_b = take(ntype); at1_a1 = take(ntype); at1_a2 = take(ntype)
    at2_W = take(ntype); at2_b = take(ntype); at2_a1 = take(ntype); at2_a2 = take(ntype)
    out_refs = take(ntype)

    adj = [[adj_refs[t1 * ntype + t2][...] for t2 in range(ntype)] for t1 in range(ntype)]
    bias1 = gc1_b[...]                      # (1, nhid) shared GraphAttentionConvolution bias
    w2 = gc2_W[...]                         # (nhid, dim2) shared layer-2 GraphConvolution weight
    b2 = gc2_b[...]                         # (1, dim2)

    # ----- Layer 1: GraphAttentionConvolution + type attention + ReLU -----
    # hoisted: each source-type projection computed exactly once (not per destination type)
    h = [jnp.dot(x_refs[t][...], gc1_W[t][...], preferred_element_type=F32)
         for t in range(ntype)]

    x1 = []
    for t1 in range(ntype):
        a1 = gc1_a1[t1][...]                # (nhid, 1)
        a2 = gc1_a2[t1][...]                # (1, nhid), stored as a row -> no transposes
        # e1 depends only on t1 -> hoisted out of the t2 loop
        e1 = jnp.dot(h[t1], a1, preferred_element_type=F32)               # (N1, 1)
        per_src = []
        for t2 in range(ntype):
            a = adj[t1][t2]                                               # (N1, N2)
            # a2 is per-destination-type (att_list[t1]) so e2 cannot be hoisted across t1.
            e2 = lax.dot_general(a2, h[t2], (((1,), (1,)), ((), ())),
                                 preferred_element_type=F32)              # (1, N2)
            e = _leaky_relu(e1 + e2)                                      # (N1, N2)
            e = jnp.where(a > 0, e, -9e15)                                # mask non-edges
            m = jnp.max(e, axis=1, keepdims=True)
            p = jnp.exp(e - m)
            attn = p / jnp.sum(p, axis=1, keepdims=True)                  # softmax(dim=1)
            attn = gamma * attn + (1.0 - gamma) * a                       # blend with adj
            per_src.append(jnp.dot(attn, h[t2], preferred_element_type=F32) + bias1)
        out = _type_attention(per_src, at1_W[t1][...], at1_b[t1][...],
                              at1_a1[t1][...], at1_a2[t1][...], idx=t1)
        out = jnp.maximum(out, 0.0)                                       # F.relu_
        # TODO(synk): F.dropout omitted — evaluated with training=False (identity);
        # stochastic dropout masks are not reproduced.
        x1.append(out)

    # ----- Layer 2: shared GraphConvolution + type attention + log_softmax -----
    # hoisted: support[t2] = x1[t2] @ W2 computed once per source type (not per t1)
    support = [jnp.dot(x1[t2], w2, preferred_element_type=F32) for t2 in range(ntype)]
    for t1 in range(ntype):
        per_src = [jnp.dot(adj[t1][t2], support[t2], preferred_element_type=F32) + b2
                   for t2 in range(ntype)]
        out = _type_attention(per_src, at2_W[t1][...], at2_b[t1][...],
                              at2_a1[t1][...], at2_a2[t1][...], idx=t1)
        mo = jnp.max(out, axis=1, keepdims=True)                          # log_softmax(dim=1)
        out = out - mo - jnp.log(jnp.sum(jnp.exp(out - mo), axis=1, keepdims=True))
        out_refs[t1][...] = out


def hgat_forward(x_list, adj_list, params, gamma=0.1):
    """Entire HGAT forward as one fused pallas_call (all operands VMEM-resident)."""
    ntype = len(x_list)
    dim2 = params["gc2_W"].shape[1]

    args = []
    args += list(x_list)
    for t1 in range(ntype):
        args += list(adj_list[t1])
    args += list(params["gc1_W"])
    args += [params["gc1_bias"]]
    args += list(params["gc1_a1"])
    args += list(params["gc1_a2"])
    args += [params["gc2_W"], params["gc2_b"]]
    for name in ("at1_W", "at1_b", "at1_a1", "at1_a2",
                 "at2_W", "at2_b", "at2_a1", "at2_a2"):
        args += list(params[name])

    out_shapes = tuple(jax.ShapeDtypeStruct((x_list[t].shape[0], dim2), F32)
                       for t in range(ntype))
    kernel = functools.partial(_hgat_fused_kernel, ntype, float(gamma))
    return pl.pallas_call(
        kernel,
        out_shape=out_shapes,
        in_specs=[VMEM_SPEC] * len(args),
        out_specs=tuple([VMEM_SPEC] * ntype),
    )(*args)


# ---------------------------------------------------------------------------
if __name__ == "__main__":
    key = jax.random.PRNGKey(0)
    ntype = 3
    nfeat_list = [40, 24, 16]          # per-type input feature dims
    n_nodes = [32, 24, 16]             # per-type node counts
    nhid = 32                          # dim_1st
    nclass = 4
    dim2 = nclass + ntype - 1          # orphan=True -> nclass + ntype - 1
    att_hidden = 50                    # SelfAttention hidden dim
    gamma = 0.1

    keys = iter(jax.random.split(key, 256))

    def nrm(shape, scale=0.1):
        return (scale * jax.random.normal(next(keys), shape)).astype(jnp.float32)

    # deterministic inputs
    x_list = [nrm((n_nodes[t], nfeat_list[t]), 1.0) for t in range(ntype)]
    adj_list = []
    for t1 in range(ntype):
        row = []
        for t2 in range(ntype):
            mask = (jax.random.uniform(next(keys), (n_nodes[t1], n_nodes[t2])) < 0.3)
            mask = mask.astype(jnp.float32).at[:, 0].set(1.0)      # ensure non-empty rows
            deg = jnp.sum(mask, axis=1, keepdims=True)
            row.append((mask / deg).astype(jnp.float32))           # row-normalized adjacency
        adj_list.append(row)

    # deterministic parameters (shapes per HGAT.__init__)
    params = {
        "gc1_W":   [nrm((nfeat_list[t], nhid)) for t in range(ntype)],
        "gc1_bias": nrm((1, nhid)),
        "gc1_a1":  [nrm((nhid, 1)) for _ in range(ntype)],
        "gc1_a2":  [nrm((1, nhid)) for _ in range(ntype)],   # stored as row to avoid transposes
        "gc2_W":    nrm((nhid, dim2)),
        "gc2_b":    nrm((1, dim2)),
        "at1_W":   [nrm((nhid, att_hidden)) for _ in range(ntype)],
        "at1_b":   [nrm((1, att_hidden)) for _ in range(ntype)],
        "at1_a1":  [nrm((att_hidden, 1)) for _ in range(ntype)],
        "at1_a2":  [nrm((att_hidden, 1)) for _ in range(ntype)],
        "at2_W":   [nrm((dim2, att_hidden)) for _ in range(ntype)],
        "at2_b":   [nrm((1, att_hidden)) for _ in range(ntype)],
        "at2_a1":  [nrm((att_hidden, 1)) for _ in range(ntype)],
        "at2_a2":  [nrm((att_hidden, 1)) for _ in range(ntype)],
    }

    outs = hgat_forward(x_list, adj_list, params, gamma=gamma)
    for t, o in enumerate(outs):
        jax.block_until_ready(o)
        assert o.shape == (n_nodes[t], dim2)
        assert bool(jnp.all(jnp.isfinite(o)))
    print("KERNEL_OK")
</pallas_src>

<mosaic_0001>
module attributes {stable_mosaic.version = 11 : i64} {
  func.func @_hgat_fused_kernel(%arg0: memref<32x40xf32, #tpu.memory_space<vmem>>, %arg1: memref<24x24xf32, #tpu.memory_space<vmem>>, %arg2: memref<16x16xf32, #tpu.memory_space<vmem>>, %arg3: memref<32x32xf32, #tpu.memory_space<vmem>>, %arg4: memref<32x24xf32, #tpu.memory_space<vmem>>, %arg5: memref<32x16xf32, #tpu.memory_space<vmem>>, %arg6: memref<24x32xf32, #tpu.memory_space<vmem>>, %arg7: memref<24x24xf32, #tpu.memory_space<vmem>>, %arg8: memref<24x16xf32, #tpu.memory_space<vmem>>, %arg9: memref<16x32xf32, #tpu.memory_space<vmem>>, %arg10: memref<16x24xf32, #tpu.memory_space<vmem>>, %arg11: memref<16x16xf32, #tpu.memory_space<vmem>>, %arg12: memref<40x32xf32, #tpu.memory_space<vmem>>, %arg13: memref<24x32xf32, #tpu.memory_space<vmem>>, %arg14: memref<16x32xf32, #tpu.memory_space<vmem>>, %arg15: memref<1x32xf32, #tpu.memory_space<vmem>>, %arg16: memref<32x1xf32, #tpu.memory_space<vmem>>, %arg17: memref<32x1xf32, #tpu.memory_space<vmem>>, %arg18: memref<32x1xf32, #tpu.memory_space<vmem>>, %arg19: memref<1x32xf32, #tpu.memory_space<vmem>>, %arg20: memref<1x32xf32, #tpu.memory_space<vmem>>, %arg21: memref<1x32xf32, #tpu.memory_space<vmem>>, %arg22: memref<32x6xf32, #tpu.memory_space<vmem>>, %arg23: memref<1x6xf32, #tpu.memory_space<vmem>>, %arg24: memref<32x50xf32, #tpu.memory_space<vmem>>, %arg25: memref<32x50xf32, #tpu.memory_space<vmem>>, %arg26: memref<32x50xf32, #tpu.memory_space<vmem>>, %arg27: memref<1x50xf32, #tpu.memory_space<vmem>>, %arg28: memref<1x50xf32, #tpu.memory_space<vmem>>, %arg29: memref<1x50xf32, #tpu.memory_space<vmem>>, %arg30: memref<50x1xf32, #tpu.memory_space<vmem>>, %arg31: memref<50x1xf32, #tpu.memory_space<vmem>>, %arg32: memref<50x1xf32, #tpu.memory_space<vmem>>, %arg33: memref<50x1xf32, #tpu.memory_space<vmem>>, %arg34: memref<50x1xf32, #tpu.memory_space<vmem>>, %arg35: memref<50x1xf32, #tpu.memory_space<vmem>>, %arg36: memref<6x50xf32, #tpu.memory_space<vmem>>, %arg37: memref<6x50xf32, #tpu.memory_space<vmem>>, %arg38: memref<6x50xf32, #tpu.memory_space<vmem>>, %arg39: memref<1x50xf32, #tpu.memory_space<vmem>>, %arg40: memref<1x50xf32, #tpu.memory_space<vmem>>, %arg41: memref<1x50xf32, #tpu.memory_space<vmem>>, %arg42: memref<50x1xf32, #tpu.memory_space<vmem>>, %arg43: memref<50x1xf32, #tpu.memory_space<vmem>>, %arg44: memref<50x1xf32, #tpu.memory_space<vmem>>, %arg45: memref<50x1xf32, #tpu.memory_space<vmem>>, %arg46: memref<50x1xf32, #tpu.memory_space<vmem>>, %arg47: memref<50x1xf32, #tpu.memory_space<vmem>>, %arg48: memref<32x6xf32, #tpu.memory_space<vmem>>, %arg49: memref<24x6xf32, #tpu.memory_space<vmem>>, %arg50: memref<16x6xf32, #tpu.memory_space<vmem>>) attributes {dimension_semantics = [], scalar_prefetch = 0 : i64, scratch_operands = 0 : i64, tpu.core_type = #tpu.core_type<tc>} {
    %c0 = arith.constant 0 : index
    %c0_0 = arith.constant 0 : index
    %0 = vector.load %arg3[%c0, %c0_0] : memref<32x32xf32, #tpu.memory_space<vmem>>, vector<32x32xf32>
    %c0_1 = arith.constant 0 : index
    %c0_2 = arith.constant 0 : index
    %1 = vector.load %arg4[%c0_1, %c0_2] : memref<32x24xf32, #tpu.memory_space<vmem>>, vector<32x24xf32>
    %c0_3 = arith.constant 0 : index
    %c0_4 = arith.constant 0 : index
    %2 = vector.load %arg5[%c0_3, %c0_4] : memref<32x16xf32, #tpu.memory_space<vmem>>, vector<32x16xf32>
    %c0_5 = arith.constant 0 : index
    %c0_6 = arith.constant 0 : index
    %3 = vector.load %arg6[%c0_5, %c0_6] : memref<24x32xf32, #tpu.memory_space<vmem>>, vector<24x32xf32>
    %c0_7 = arith.constant 0 : index
    %c0_8 = arith.constant 0 : index
    %4 = vector.load %arg7[%c0_7, %c0_8] : memref<24x24xf32, #tpu.memory_space<vmem>>, vector<24x24xf32>
    %c0_9 = arith.constant 0 : index
    %c0_10 = arith.constant 0 : index
    %5 = vector.load %arg8[%c0_9, %c0_10] : memref<24x16xf32, #tpu.memory_space<vmem>>, vector<24x16xf32>
    %c0_11 = arith.constant 0 : index
    %c0_12 = arith.constant 0 : index
    %6 = vector.load %arg9[%c0_11, %c0_12] : memref<16x32xf32, #tpu.memory_space<vmem>>, vector<16x32xf32>
    %c0_13 = arith.constant 0 : index
    %c0_14 = arith.constant 0 : index
    %7 = vector.load %arg10[%c0_13, %c0_14] : memref<16x24xf32, #tpu.memory_space<vmem>>, vector<16x24xf32>
    %c0_15 = arith.constant 0 : index
    %c0_16 = arith.constant 0 : index
    %8 = vector.load %arg11[%c0_15, %c0_16] : memref<16x16xf32, #tpu.memory_space<vmem>>, vector<16x16xf32>
    %c0_17 = arith.constant 0 : index
    %c0_18 = arith.constant 0 : index
    %9 = vector.load %arg15[%c0_17, %c0_18] : memref<1x32xf32, #tpu.memory_space<vmem>>, vector<1x32xf32>
    %c0_19 = arith.constant 0 : index
    %c0_20 = arith.constant 0 : index
    %10 = vector.load %arg22[%c0_19, %c0_20] : memref<32x6xf32, #tpu.memory_space<vmem>>, vector<32x6xf32>
    %c0_21 = arith.constant 0 : index
    %c0_22 = arith.constant 0 : index
    %11 = vector.load %arg23[%c0_21, %c0_22] : memref<1x6xf32, #tpu.memory_space<vmem>>, vector<1x6xf32>
    %c0_23 = arith.constant 0 : index
    %c0_24 = arith.constant 0 : index
    %12 = vector.load %arg0[%c0_23, %c0_24] : memref<32x40xf32, #tpu.memory_space<vmem>>, vector<32x40xf32>
    %c0_25 = arith.constant 0 : index
    %c0_26 = arith.constant 0 : index
    %13 = vector.load %arg12[%c0_25, %c0_26] : memref<40x32xf32, #tpu.memory_space<vmem>>, vector<40x32xf32>
    %cst = arith.constant dense<0.000000e+00> : vector<32x32xf32>
    %14 = tpu.matmul %12, %13, %cst {dimension_numbers = #tpu.dot_dimension_numbers<[1], [0], [0], [1], [0, 0, 1, 1], [], []>} : vector<32x40xf32>, vector<40x32xf32>, vector<32x32xf32> -> vector<32x32xf32>
    %c0_27 = arith.constant 0 : index
    %c0_28 = arith.constant 0 : index
    %15 = vector.load %arg1[%c0_27, %c0_28] : memref<24x24xf32, #tpu.memory_space<vmem>>, vector<24x24xf32>
    %c0_29 = arith.constant 0 : index
    %c0_30 = arith.constant 0 : index
    %16 = vector.load %arg13[%c0_29, %c0_30] : memref<24x32xf32, #tpu.memory_space<vmem>>, vector<24x32xf32>
    %cst_31 = arith.constant dense<0.000000e+00> : vector<24x32xf32>
    %17 = tpu.matmul %15, %16, %cst_31 {dimension_numbers = #tpu.dot_dimension_numbers<[1], [0], [0], [1], [0, 0, 1, 1], [], []>} : vector<24x24xf32>, vector<24x32xf32>, vector<24x32xf32> -> vector<24x32xf32>
    %c0_32 = arith.constant 0 : index
    %c0_33 = arith.constant 0 : index
    %18 = vector.load %arg2[%c0_32, %c0_33] : memref<16x16xf32, #tpu.memory_space<vmem>>, vector<16x16xf32>
    %c0_34 = arith.constant 0 : index
    %c0_35 = arith.constant 0 : index
    %19 = vector.load %arg14[%c0_34, %c0_35] : memref<16x32xf32, #tpu.memory_space<vmem>>, vector<16x32xf32>
    %cst_36 = arith.constant dense<0.000000e+00> : vector<16x32xf32>
    %20 = tpu.matmul %18, %19, %cst_36 {dimension_numbers = #tpu.dot_dimension_numbers<[1], [0], [0], [1], [0, 0, 1, 1], [], []>} : vector<16x16xf32>, vector<16x32xf32>, vector<16x32xf32> -> vector<16x32xf32>
    %c0_37 = arith.constant 0 : index
    %c0_38 = arith.constant 0 : index
    %21 = vector.load %arg16[%c0_37, %c0_38] : memref<32x1xf32, #tpu.memory_space<vmem>>, vector<32x1xf32>
    %c0_39 = arith.constant 0 : index
    %c0_40 = arith.constant 0 : index
    %22 = vector.load %arg19[%c0_39, %c0_40] : memref<1x32xf32, #tpu.memory_space<vmem>>, vector<1x32xf32>
    %cst_41 = arith.constant dense<0.000000e+00> : vector<32x1xf32>
    %23 = tpu.matmul %14, %21, %cst_41 {dimension_numbers = #tpu.dot_dimension_numbers<[1], [0], [0], [1], [0, 0, 1, 1], [], []>} : vector<32x32xf32>, vector<32x1xf32>, vector<32x1xf32> -> vector<32x1xf32>
    %cst_42 = arith.constant dense<0.000000e+00> : vector<1x32xf32>
    %24 = tpu.matmul %22, %14, %cst_42 {dimension_numbers = #tpu.dot_dimension_numbers<[1], [1], [0], [0], [0, 0, 1, 0], [], []>} : vector<1x32xf32>, vector<32x32xf32>, vector<1x32xf32> -> vector<1x32xf32>
    %25 = vector.broadcast %23 : vector<32x1xf32> to vector<32x32xf32>
    %26 = vector.broadcast %24 : vector<1x32xf32> to vector<32x32xf32>
    %27 = arith.addf %25, %26 : vector<32x32xf32>
    %cst_43 = arith.constant 0.000000e+00 : f32
    %28 = vector.broadcast %cst_43 : f32 to vector<32x32xf32>
    %29 = arith.cmpf ogt, %27, %28 : vector<32x32xf32>
    %cst_44 = arith.constant 2.000000e-01 : f32
    %30 = vector.broadcast %cst_44 : f32 to vector<32x32xf32>
    %31 = arith.mulf %30, %27 : vector<32x32xf32>
    %32 = arith.select %29, %27, %31 : vector<32x32xi1>, vector<32x32xf32>
    %cst_45 = arith.constant 0.000000e+00 : f32
    %33 = vector.broadcast %cst_45 : f32 to vector<32x32xf32>
    %34 = arith.cmpf ogt, %0, %33 : vector<32x32xf32>
    %cst_46 = arith.constant -9.000000e+15 : f32
    %35 = vector.broadcast %cst_46 : f32 to vector<32x32xf32>
    %36 = arith.select %34, %32, %35 : vector<32x32xi1>, vector<32x32xf32>
    %cst_47 = arith.constant dense<0xFF800000> : vector<32xf32>
    %37 = vector.multi_reduction <maximumf>, %36, %cst_47 [1] : vector<32x32xf32> to vector<32xf32>
    %38 = vector.shape_cast %37 : vector<32xf32> to vector<32x1xf32>
    %39 = vector.broadcast %38 : vector<32x1xf32> to vector<32x32xf32>
    %40 = arith.subf %36, %39 : vector<32x32xf32>
    %41 = math.exp %40 : vector<32x32xf32>
    %cst_48 = arith.constant dense<0.000000e+00> : vector<32xf32>
    %42 = vector.multi_reduction <add>, %41, %cst_48 [1] : vector<32x32xf32> to vector<32xf32>
    %43 = vector.shape_cast %42 : vector<32xf32> to vector<32x1xf32>
    %44 = vector.broadcast %43 : vector<32x1xf32> to vector<32x32xf32>
    %45 = arith.divf %41, %44 : vector<32x32xf32>
    %cst_49 = arith.constant 1.000000e-01 : f32
    %46 = vector.broadcast %cst_49 : f32 to vector<32x32xf32>
    %47 = arith.mulf %46, %45 : vector<32x32xf32>
    %cst_50 = arith.constant 0.899999976 : f32
    %48 = vector.broadcast %cst_50 : f32 to vector<32x32xf32>
    %49 = arith.mulf %48, %0 : vector<32x32xf32>
    %50 = arith.addf %47, %49 : vector<32x32xf32>
    %cst_51 = arith.constant dense<0.000000e+00> : vector<32x32xf32>
    %51 = tpu.matmul %50, %14, %cst_51 {dimension_numbers = #tpu.dot_dimension_numbers<[1], [0], [0], [1], [0, 0, 1, 1], [], []>} : vector<32x32xf32>, vector<32x32xf32>, vector<32x32xf32> -> vector<32x32xf32>
    %52 = vector.broadcast %9 : vector<1x32xf32> to vector<32x32xf32>
    %53 = arith.addf %51, %52 : vector<32x32xf32>
    %cst_52 = arith.constant dense<0.000000e+00> : vector<1x24xf32>
    %54 = tpu.matmul %22, %17, %cst_52 {dimension_numbers = #tpu.dot_dimension_numbers<[1], [1], [0], [0], [0, 0, 1, 0], [], []>} : vector<1x32xf32>, vector<24x32xf32>, vector<1x24xf32> -> vector<1x24xf32>
    %55 = vector.broadcast %23 : vector<32x1xf32> to vector<32x24xf32>
    %56 = vector.broadcast %54 : vector<1x24xf32> to vector<32x24xf32>
    %57 = arith.addf %55, %56 : vector<32x24xf32>
    %cst_53 = arith.constant 0.000000e+00 : f32
    %58 = vector.broadcast %cst_53 : f32 to vector<32x24xf32>
    %59 = arith.cmpf ogt, %57, %58 : vector<32x24xf32>
    %cst_54 = arith.constant 2.000000e-01 : f32
    %60 = vector.broadcast %cst_54 : f32 to vector<32x24xf32>
    %61 = arith.mulf %60, %57 : vector<32x24xf32>
    %62 = arith.select %59, %57, %61 : vector<32x24xi1>, vector<32x24xf32>
    %cst_55 = arith.constant 0.000000e+00 : f32
    %63 = vector.broadcast %cst_55 : f32 to vector<32x24xf32>
    %64 = arith.cmpf ogt, %1, %63 : vector<32x24xf32>
    %cst_56 = arith.constant -9.000000e+15 : f32
    %65 = vector.broadcast %cst_56 : f32 to vector<32x24xf32>
    %66 = arith.select %64, %62, %65 : vector<32x24xi1>, vector<32x24xf32>
    %cst_57 = arith.constant dense<0xFF800000> : vector<32xf32>
    %67 = vector.multi_reduction <maximumf>, %66, %cst_57 [1] : vector<32x24xf32> to vector<32xf32>
    %68 = vector.shape_cast %67 : vector<32xf32> to vector<32x1xf32>
    %69 = vector.broadcast %68 : vector<32x1xf32> to vector<32x24xf32>
    %70 = arith.subf %66, %69 : vector<32x24xf32>
    %71 = math.exp %70 : vector<32x24xf32>
    %cst_58 = arith.constant dense<0.000000e+00> : vector<32xf32>
    %72 = vector.multi_reduction <add>, %71, %cst_58 [1] : vector<32x24xf32> to vector<32xf32>
    %73 = vector.shape_cast %72 : vector<32xf32> to vector<32x1xf32>
    %74 = vector.broadcast %73 : vector<32x1xf32> to vector<32x24xf32>
    %75 = arith.divf %71, %74 : vector<32x24xf32>
    %cst_59 = arith.constant 1.000000e-01 : f32
    %76 = vector.broadcast %cst_59 : f32 to vector<32x24xf32>
    %77 = arith.mulf %76, %75 : vector<32x24xf32>
    %cst_60 = arith.constant 0.899999976 : f32
    %78 = vector.broadcast %cst_60 : f32 to vector<32x24xf32>
    %79 = arith.mulf %78, %1 : vector<32x24xf32>
    %80 = arith.addf %77, %79 : vector<32x24xf32>
    %cst_61 = arith.constant dense<0.000000e+00> : vector<32x32xf32>
    %81 = tpu.matmul %80, %17, %cst_61 {dimension_numbers = #tpu.dot_dimension_numbers<[1], [0], [0], [1], [0, 0, 1, 1], [], []>} : vector<32x24xf32>, vector<24x32xf32>, vector<32x32xf32> -> vector<32x32xf32>
    %82 = vector.broadcast %9 : vector<1x32xf32> to vector<32x32xf32>
    %83 = arith.addf %81, %82 : vector<32x32xf32>
    %cst_62 = arith.constant dense<0.000000e+00> : vector<1x16xf32>
    %84 = tpu.matmul %22, %20, %cst_62 {dimension_numbers = #tpu.dot_dimension_numbers<[1], [1], [0], [0], [0, 0, 1, 0], [], []>} : vector<1x32xf32>, vector<16x32xf32>, vector<1x16xf32> -> vector<1x16xf32>
    %85 = vector.broadcast %23 : vector<32x1xf32> to vector<32x16xf32>
    %86 = vector.broadcast %84 : vector<1x16xf32> to vector<32x16xf32>
    %87 = arith.addf %85, %86 : vector<32x16xf32>
    %cst_63 = arith.constant 0.000000e+00 : f32
    %88 = vector.broadcast %cst_63 : f32 to vector<32x16xf32>
    %89 = arith.cmpf ogt, %87, %88 : vector<32x16xf32>
    %cst_64 = arith.constant 2.000000e-01 : f32
    %90 = vector.broadcast %cst_64 : f32 to vector<32x16xf32>
    %91 = arith.mulf %90, %87 : vector<32x16xf32>
    %92 = arith.select %89, %87, %91 : vector<32x16xi1>, vector<32x16xf32>
    %cst_65 = arith.constant 0.000000e+00 : f32
    %93 = vector.broadcast %cst_65 : f32 to vector<32x16xf32>
    %94 = arith.cmpf ogt, %2, %93 : vector<32x16xf32>
    %cst_66 = arith.constant -9.000000e+15 : f32
    %95 = vector.broadcast %cst_66 : f32 to vector<32x16xf32>
    %96 = arith.select %94, %92, %95 : vector<32x16xi1>, vector<32x16xf32>
    %cst_67 = arith.constant dense<0xFF800000> : vector<32xf32>
    %97 = vector.multi_reduction <maximumf>, %96, %cst_67 [1] : vector<32x16xf32> to vector<32xf32>
    %98 = vector.shape_cast %97 : vector<32xf32> to vector<32x1xf32>
    %99 = vector.broadcast %98 : vector<32x1xf32> to vector<32x16xf32>
    %100 = arith.subf %96, %99 : vector<32x16xf32>
    %101 = math.exp %100 : vector<32x16xf32>
    %cst_68 = arith.constant dense<0.000000e+00> : vector<32xf32>
    %102 = vector.multi_reduction <add>, %101, %cst_68 [1] : vector<32x16xf32> to vector<32xf32>
    %103 = vector.shape_cast %102 : vector<32xf32> to vector<32x1xf32>
    %104 = vector.broadcast %103 : vector<32x1xf32> to vector<32x16xf32>
    %105 = arith.divf %101, %104 : vector<32x16xf32>
    %cst_69 = arith.constant 1.000000e-01 : f32
    %106 = vector.broadcast %cst_69 : f32 to vector<32x16xf32>
    %107 = arith.mulf %106, %105 : vector<32x16xf32>
    %cst_70 = arith.constant 0.899999976 : f32
    %108 = vector.broadcast %cst_70 : f32 to vector<32x16xf32>
    %109 = arith.mulf %108, %2 : vector<32x16xf32>
    %110 = arith.addf %107, %109 : vector<32x16xf32>
    %cst_71 = arith.constant dense<0.000000e+00> : vector<32x32xf32>
    %111 = tpu.matmul %110, %20, %cst_71 {dimension_numbers = #tpu.dot_dimension_numbers<[1], [0], [0], [1], [0, 0, 1, 1], [], []>} : vector<32x16xf32>, vector<16x32xf32>, vector<32x32xf32> -> vector<32x32xf32>
    %112 = vector.broadcast %9 : vector<1x32xf32> to vector<32x32xf32>
    %113 = arith.addf %111, %112 : vector<32x32xf32>
    %c0_72 = arith.constant 0 : index
    %c0_73 = arith.constant 0 : index
    %114 = vector.load %arg24[%c0_72, %c0_73] : memref<32x50xf32, #tpu.memory_space<vmem>>, vector<32x50xf32>
    %c0_74 = arith.constant 0 : index
    %c0_75 = arith.constant 0 : index
    %115 = vector.load %arg27[%c0_74, %c0_75] : memref<1x50xf32, #tpu.memory_space<vmem>>, vector<1x50xf32>
    %c0_76 = arith.constant 0 : index
    %c0_77 = arith.constant 0 : index
    %116 = vector.load %arg30[%c0_76, %c0_77] : memref<50x1xf32, #tpu.memory_space<vmem>>, vector<50x1xf32>
    %c0_78 = arith.constant 0 : index
    %c0_79 = arith.constant 0 : index
    %117 = vector.load %arg33[%c0_78, %c0_79] : memref<50x1xf32, #tpu.memory_space<vmem>>, vector<50x1xf32>
    %118 = tpu.concatenate %53, %83, %113 in 0 : vector<32x32xf32>, vector<32x32xf32>, vector<32x32xf32> -> vector<96x32xf32>
    %cst_80 = arith.constant dense<0.000000e+00> : vector<96x50xf32>
    %119 = tpu.matmul %118, %114, %cst_80 {dimension_numbers = #tpu.dot_dimension_numbers<[1], [0], [0], [1], [0, 0, 1, 1], [], []>} : vector<96x32xf32>, vector<32x50xf32>, vector<96x50xf32> -> vector<96x50xf32>
    %120 = vector.broadcast %115 : vector<1x50xf32> to vector<96x50xf32>
    %121 = arith.addf %119, %120 : vector<96x50xf32>
    %cst_81 = arith.constant dense<0.000000e+00> : vector<96x1xf32>
    %122 = tpu.matmul %121, %117, %cst_81 {dimension_numbers = #tpu.dot_dimension_numbers<[1], [0], [0], [1], [0, 0, 1, 1], [], []>} : vector<96x50xf32>, vector<50x1xf32>, vector<96x1xf32> -> vector<96x1xf32>
    %123 = vector.extract_strided_slice %121 {offsets = [0, 0], sizes = [32, 50], strides = [1, 1]} : vector<96x50xf32> to vector<32x50xf32>
    %cst_82 = arith.constant dense<0.000000e+00> : vector<32x1xf32>
    %124 = tpu.matmul %123, %116, %cst_82 {dimension_numbers = #tpu.dot_dimension_numbers<[1], [0], [0], [1], [0, 0, 1, 1], [], []>} : vector<32x50xf32>, vector<50x1xf32>, vector<32x1xf32> -> vector<32x1xf32>
    %125 = vector.extract_strided_slice %122 {offsets = [0, 0], sizes = [32, 1], strides = [1, 1]} : vector<96x1xf32> to vector<32x1xf32>
    %126 = arith.addf %124, %125 : vector<32x1xf32>
    %cst_83 = arith.constant 0.000000e+00 : f32
    %127 = vector.broadcast %cst_83 : f32 to vector<32x1xf32>
    %128 = arith.cmpf ogt, %126, %127 : vector<32x1xf32>
    %cst_84 = arith.constant 2.000000e-01 : f32
    %129 = vector.broadcast %cst_84 : f32 to vector<32x1xf32>
    %130 = arith.mulf %129, %126 : vector<32x1xf32>
    %131 = arith.select %128, %126, %130 : vector<32x1xi1>, vector<32x1xf32>
    %132 = vector.extract_strided_slice %122 {offsets = [32, 0], sizes = [32, 1], strides = [1, 1]} : vector<96x1xf32> to vector<32x1xf32>
    %133 = arith.addf %124, %132 : vector<32x1xf32>
    %cst_85 = arith.constant 0.000000e+00 : f32
    %134 = vector.broadcast %cst_85 : f32 to vector<32x1xf32>
    %135 = arith.cmpf ogt, %133, %134 : vector<32x1xf32>
    %cst_86 = arith.constant 2.000000e-01 : f32
    %136 = vector.broadcast %cst_86 : f32 to vector<32x1xf32>
    %137 = arith.mulf %136, %133 : vector<32x1xf32>
    %138 = arith.select %135, %133, %137 : vector<32x1xi1>, vector<32x1xf32>
    %139 = vector.extract_strided_slice %122 {offsets = [64, 0], sizes = [32, 1], strides = [1, 1]} : vector<96x1xf32> to vector<32x1xf32>
    %140 = arith.addf %124, %139 : vector<32x1xf32>
    %cst_87 = arith.constant 0.000000e+00 : f32
    %141 = vector.broadcast %cst_87 : f32 to vector<32x1xf32>
    %142 = arith.cmpf ogt, %140, %141 : vector<32x1xf32>
    %cst_88 = arith.constant 2.000000e-01 : f32
    %143 = vector.broadcast %cst_88 : f32 to vector<32x1xf32>
    %144 = arith.mulf %143, %140 : vector<32x1xf32>
    %145 = arith.select %142, %140, %144 : vector<32x1xi1>, vector<32x1xf32>
    %146 = arith.maximumf %131, %138 : vector<32x1xf32>
    %147 = arith.maximumf %146, %145 : vector<32x1xf32>
    %148 = arith.subf %131, %147 : vector<32x1xf32>
    %149 = math.exp %148 : vector<32x1xf32>
    %150 = arith.subf %138, %147 : vector<32x1xf32>
    %151 = math.exp %150 : vector<32x1xf32>
    %152 = arith.subf %145, %147 : vector<32x1xf32>
    %153 = math.exp %152 : vector<32x1xf32>
    %154 = arith.addf %149, %151 : vector<32x1xf32>
    %155 = arith.addf %154, %153 : vector<32x1xf32>
    %cst_89 = arith.constant 1.000000e+00 : f32
    %156 = vector.broadcast %cst_89 : f32 to vector<32x1xf32>
    %157 = arith.divf %156, %155 : vector<32x1xf32>
    %158 = arith.mulf %149, %157 : vector<32x1xf32>
    %159 = vector.broadcast %158 : vector<32x1xf32> to vector<32x32xf32>
    %160 = arith.mulf %159, %53 : vector<32x32xf32>
    %161 = arith.mulf %151, %157 : vector<32x1xf32>
    %162 = vector.broadcast %161 : vector<32x1xf32> to vector<32x32xf32>
    %163 = arith.mulf %162, %83 : vector<32x32xf32>
    %164 = arith.addf %160, %163 : vector<32x32xf32>
    %165 = arith.mulf %153, %157 : vector<32x1xf32>
    %166 = vector.broadcast %165 : vector<32x1xf32> to vector<32x32xf32>
    %167 = arith.mulf %166, %113 : vector<32x32xf32>
    %168 = arith.addf %164, %167 : vector<32x32xf32>
    %cst_90 = arith.constant 0.000000e+00 : f32
    %169 = vector.broadcast %cst_90 : f32 to vector<32x32xf32>
    %170 = arith.maximumf %168, %169 : vector<32x32xf32>
    %c0_91 = arith.constant 0 : index
    %c0_92 = arith.constant 0 : index
    %171 = vector.load %arg17[%c0_91, %c0_92] : memref<32x1xf32, #tpu.memory_space<vmem>>, vector<32x1xf32>
    %c0_93 = arith.constant 0 : index
    %c0_94 = arith.constant 0 : index
    %172 = vector.load %arg20[%c0_93, %c0_94] : memref<1x32xf32, #tpu.memory_space<vmem>>, vector<1x32xf32>
    %cst_95 = arith.constant dense<0.000000e+00> : vector<24x1xf32>
    %173 = tpu.matmul %17, %171, %cst_95 {dimension_numbers = #tpu.dot_dimension_numbers<[1], [0], [0], [1], [0, 0, 1, 1], [], []>} : vector<24x32xf32>, vector<32x1xf32>, vector<24x1xf32> -> vector<24x1xf32>
    %cst_96 = arith.constant dense<0.000000e+00> : vector<1x32xf32>
    %174 = tpu.matmul %172, %14, %cst_96 {dimension_numbers = #tpu.dot_dimension_numbers<[1], [1], [0], [0], [0, 0, 1, 0], [], []>} : vector<1x32xf32>, vector<32x32xf32>, vector<1x32xf32> -> vector<1x32xf32>
    %175 = vector.broadcast %173 : vector<24x1xf32> to vector<24x32xf32>
    %176 = vector.broadcast %174 : vector<1x32xf32> to vector<24x32xf32>
    %177 = arith.addf %175, %176 : vector<24x32xf32>
    %cst_97 = arith.constant 0.000000e+00 : f32
    %178 = vector.broadcast %cst_97 : f32 to vector<24x32xf32>
    %179 = arith.cmpf ogt, %177, %178 : vector<24x32xf32>
    %cst_98 = arith.constant 2.000000e-01 : f32
    %180 = vector.broadcast %cst_98 : f32 to vector<24x32xf32>
    %181 = arith.mulf %180, %177 : vector<24x32xf32>
    %182 = arith.select %179, %177, %181 : vector<24x32xi1>, vector<24x32xf32>
    %cst_99 = arith.constant 0.000000e+00 : f32
    %183 = vector.broadcast %cst_99 : f32 to vector<24x32xf32>
    %184 = arith.cmpf ogt, %3, %183 : vector<24x32xf32>
    %cst_100 = arith.constant -9.000000e+15 : f32
    %185 = vector.broadcast %cst_100 : f32 to vector<24x32xf32>
    %186 = arith.select %184, %182, %185 : vector<24x32xi1>, vector<24x32xf32>
    %cst_101 = arith.constant dense<0xFF800000> : vector<24xf32>
    %187 = vector.multi_reduction <maximumf>, %186, %cst_101 [1] : vector<24x32xf32> to vector<24xf32>
    %188 = vector.shape_cast %187 : vector<24xf32> to vector<24x1xf32>
    %189 = vector.broadcast %188 : vector<24x1xf32> to vector<24x32xf32>
    %190 = arith.subf %186, %189 : vector<24x32xf32>
    %191 = math.exp %190 : vector<24x32xf32>
    %cst_102 = arith.constant dense<0.000000e+00> : vector<24xf32>
    %192 = vector.multi_reduction <add>, %191, %cst_102 [1] : vector<24x32xf32> to vector<24xf32>
    %193 = vector.shape_cast %192 : vector<24xf32> to vector<24x1xf32>
    %194 = vector.broadcast %193 : vector<24x1xf32> to vector<24x32xf32>
    %195 = arith.divf %191, %194 : vector<24x32xf32>
    %cst_103 = arith.constant 1.000000e-01 : f32
    %196 = vector.broadcast %cst_103 : f32 to vector<24x32xf32>
    %197 = arith.mulf %196, %195 : vector<24x32xf32>
    %cst_104 = arith.constant 0.899999976 : f32
    %198 = vector.broadcast %cst_104 : f32 to vector<24x32xf32>
    %199 = arith.mulf %198, %3 : vector<24x32xf32>
    %200 = arith.addf %197, %199 : vector<24x32xf32>
    %cst_105 = arith.constant dense<0.000000e+00> : vector<24x32xf32>
    %201 = tpu.matmul %200, %14, %cst_105 {dimension_numbers = #tpu.dot_dimension_numbers<[1], [0], [0], [1], [0, 0, 1, 1], [], []>} : vector<24x32xf32>, vector<32x32xf32>, vector<24x32xf32> -> vector<24x32xf32>
    %202 = vector.broadcast %9 : vector<1x32xf32> to vector<24x32xf32>
    %203 = arith.addf %201, %202 : vector<24x32xf32>
    %cst_106 = arith.constant dense<0.000000e+00> : vector<1x24xf32>
    %204 = tpu.matmul %172, %17, %cst_106 {dimension_numbers = #tpu.dot_dimension_numbers<[1], [1], [0], [0], [0, 0, 1, 0], [], []>} : vector<1x32xf32>, vector<24x32xf32>, vector<1x24xf32> -> vector<1x24xf32>
    %205 = vector.broadcast %173 : vector<24x1xf32> to vector<24x24xf32>
    %206 = vector.broadcast %204 : vector<1x24xf32> to vector<24x24xf32>
    %207 = arith.addf %205, %206 : vector<24x24xf32>
    %cst_107 = arith.constant 0.000000e+00 : f32
    %208 = vector.broadcast %cst_107 : f32 to vector<24x24xf32>
    %209 = arith.cmpf ogt, %207, %208 : vector<24x24xf32>
    %cst_108 = arith.constant 2.000000e-01 : f32
    %210 = vector.broadcast %cst_108 : f32 to vector<24x24xf32>
    %211 = arith.mulf %210, %207 : vector<24x24xf32>
    %212 = arith.select %209, %207, %211 : vector<24x24xi1>, vector<24x24xf32>
    %cst_109 = arith.constant 0.000000e+00 : f32
    %213 = vector.broadcast %cst_109 : f32 to vector<24x24xf32>
    %214 = arith.cmpf ogt, %4, %213 : vector<24x24xf32>
    %cst_110 = arith.constant -9.000000e+15 : f32
    %215 = vector.broadcast %cst_110 : f32 to vector<24x24xf32>
    %216 = arith.select %214, %212, %215 : vector<24x24xi1>, vector<24x24xf32>
    %cst_111 = arith.constant dense<0xFF800000> : vector<24xf32>
    %217 = vector.multi_reduction <maximumf>, %216, %cst_111 [1] : vector<24x24xf32> to vector<24xf32>
    %218 = vector.shape_cast %217 : vector<24xf32> to vector<24x1xf32>
    %219 = vector.broadcast %218 : vector<24x1xf32> to vector<24x24xf32>
    %220 = arith.subf %216, %219 : vector<24x24xf32>
    %221 = math.exp %220 : vector<24x24xf32>
    %cst_112 = arith.constant dense<0.000000e+00> : vector<24xf32>
    %222 = vector.multi_reduction <add>, %221, %cst_112 [1] : vector<24x24xf32> to vector<24xf32>
    %223 = vector.shape_cast %222 : vector<24xf32> to vector<24x1xf32>
    %224 = vector.broadcast %223 : vector<24x1xf32> to vector<24x24xf32>
    %225 = arith.divf %221, %224 : vector<24x24xf32>
    %cst_113 = arith.constant 1.000000e-01 : f32
    %226 = vector.broadcast %cst_113 : f32 to vector<24x24xf32>
    %227 = arith.mulf %226, %225 : vector<24x24xf32>
    %cst_114 = arith.constant 0.899999976 : f32
    %228 = vector.broadcast %cst_114 : f32 to vector<24x24xf32>
    %229 = arith.mulf %228, %4 : vector<24x24xf32>
    %230 = arith.addf %227, %229 : vector<24x24xf32>
    %cst_115 = arith.constant dense<0.000000e+00> : vector<24x32xf32>
    %231 = tpu.matmul %230, %17, %cst_115 {dimension_numbers = #tpu.dot_dimension_numbers<[1], [0], [0], [1], [0, 0, 1, 1], [], []>} : vector<24x24xf32>, vector<24x32xf32>, vector<24x32xf32> -> vector<24x32xf32>
    %232 = vector.broadcast %9 : vector<1x32xf32> to vector<24x32xf32>
    %233 = arith.addf %231, %232 : vector<24x32xf32>
    %cst_116 = arith.constant dense<0.000000e+00> : vector<1x16xf32>
    %234 = tpu.matmul %172, %20, %cst_116 {dimension_numbers = #tpu.dot_dimension_numbers<[1], [1], [0], [0], [0, 0, 1, 0], [], []>} : vector<1x32xf32>, vector<16x32xf32>, vector<1x16xf32> -> vector<1x16xf32>
    %235 = vector.broadcast %173 : vector<24x1xf32> to vector<24x16xf32>
    %236 = vector.broadcast %234 : vector<1x16xf32> to vector<24x16xf32>
    %237 = arith.addf %235, %236 : vector<24x16xf32>
    %cst_117 = arith.constant 0.000000e+00 : f32
    %238 = vector.broadcast %cst_117 : f32 to vector<24x16xf32>
    %239 = arith.cmpf ogt, %237, %238 : vector<24x16xf32>
    %cst_118 = arith.constant 2.000000e-01 : f32
    %240 = vector.broadcast %cst_118 : f32 to vector<24x16xf32>
    %241 = arith.mulf %240, %237 : vector<24x16xf32>
    %242 = arith.select %239, %237, %241 : vector<24x16xi1>, vector<24x16xf32>
    %cst_119 = arith.constant 0.000000e+00 : f32
    %243 = vector.broadcast %cst_119 : f32 to vector<24x16xf32>
    %244 = arith.cmpf ogt, %5, %243 : vector<24x16xf32>
    %cst_120 = arith.constant -9.000000e+15 : f32
    %245 = vector.broadcast %cst_120 : f32 to vector<24x16xf32>
    %246 = arith.select %244, %242, %245 : vector<24x16xi1>, vector<24x16xf32>
    %cst_121 = arith.constant dense<0xFF800000> : vector<24xf32>
    %247 = vector.multi_reduction <maximumf>, %246, %cst_121 [1] : vector<24x16xf32> to vector<24xf32>
    %248 = vector.shape_cast %247 : vector<24xf32> to vector<24x1xf32>
    %249 = vector.broadcast %248 : vector<24x1xf32> to vector<24x16xf32>
    %250 = arith.subf %246, %249 : vector<24x16xf32>
    %251 = math.exp %250 : vector<24x16xf32>
    %cst_122 = arith.constant dense<0.000000e+00> : vector<24xf32>
    %252 = vector.multi_reduction <add>, %251, %cst_122 [1] : vector<24x16xf32> to vector<24xf32>
    %253 = vector.shape_cast %252 : vector<24xf32> to vector<24x1xf32>
    %254 = vector.broadcast %253 : vector<24x1xf32> to vector<24x16xf32>
    %255 = arith.divf %251, %254 : vector<24x16xf32>
    %cst_123 = arith.constant 1.000000e-01 : f32
    %256 = vector.broadcast %cst_123 : f32 to vector<24x16xf32>
    %257 = arith.mulf %256, %255 : vector<24x16xf32>
    %cst_124 = arith.constant 0.899999976 : f32
    %258 = vector.broadcast %cst_124 : f32 to vector<24x16xf32>
    %259 = arith.mulf %258, %5 : vector<24x16xf32>
    %260 = arith.addf %257, %259 : vector<24x16xf32>
    %cst_125 = arith.constant dense<0.000000e+00> : vector<24x32xf32>
    %261 = tpu.matmul %260, %20, %cst_125 {dimension_numbers = #tpu.dot_dimension_numbers<[1], [0], [0], [1], [0, 0, 1, 1], [], []>} : vector<24x16xf32>, vector<16x32xf32>, vector<24x32xf32> -> vector<24x32xf32>
    %262 = vector.broadcast %9 : vector<1x32xf32> to vector<24x32xf32>
    %263 = arith.addf %261, %262 : vector<24x32xf32>
    %c0_126 = arith.constant 0 : index
    %c0_127 = arith.constant 0 : index
    %264 = vector.load %arg25[%c0_126, %c0_127] : memref<32x50xf32, #tpu.memory_space<vmem>>, vector<32x50xf32>
    %c0_128 = arith.constant 0 : index
    %c0_129 = arith.constant 0 : index
    %265 = vector.load %arg28[%c0_128, %c0_129] : memref<1x50xf32, #tpu.memory_space<vmem>>, vector<1x50xf32>
    %c0_130 = arith.constant 0 : index
    %c0_131 = arith.constant 0 : index
    %266 = vector.load %arg31[%c0_130, %c0_131] : memref<50x1xf32, #tpu.memory_space<vmem>>, vector<50x1xf32>
    %c0_132 = arith.constant 0 : index
    %c0_133 = arith.constant 0 : index
    %267 = vector.load %arg34[%c0_132, %c0_133] : memref<50x1xf32, #tpu.memory_space<vmem>>, vector<50x1xf32>
    %268 = tpu.concatenate %203, %233, %263 in 0 : vector<24x32xf32>, vector<24x32xf32>, vector<24x32xf32> -> vector<72x32xf32>
    %cst_134 = arith.constant dense<0.000000e+00> : vector<72x50xf32>
    %269 = tpu.matmul %268, %264, %cst_134 {dimension_numbers = #tpu.dot_dimension_numbers<[1], [0], [0], [1], [0, 0, 1, 1], [], []>} : vector<72x32xf32>, vector<32x50xf32>, vector<72x50xf32> -> vector<72x50xf32>
    %270 = vector.broadcast %265 : vector<1x50xf32> to vector<72x50xf32>
    %271 = arith.addf %269, %270 : vector<72x50xf32>
    %cst_135 = arith.constant dense<0.000000e+00> : vector<72x1xf32>
    %272 = tpu.matmul %271, %267, %cst_135 {dimension_numbers = #tpu.dot_dimension_numbers<[1], [0], [0], [1], [0, 0, 1, 1], [], []>} : vector<72x50xf32>, vector<50x1xf32>, vector<72x1xf32> -> vector<72x1xf32>
    %273 = vector.extract_strided_slice %271 {offsets = [24, 0], sizes = [24, 50], strides = [1, 1]} : vector<72x50xf32> to vector<24x50xf32>
    %cst_136 = arith.constant dense<0.000000e+00> : vector<24x1xf32>
    %274 = tpu.matmul %273, %266, %cst_136 {dimension_numbers = #tpu.dot_dimension_numbers<[1], [0], [0], [1], [0, 0, 1, 1], [], []>} : vector<24x50xf32>, vector<50x1xf32>, vector<24x1xf32> -> vector<24x1xf32>
    %275 = vector.extract_strided_slice %272 {offsets = [0, 0], sizes = [24, 1], strides = [1, 1]} : vector<72x1xf32> to vector<24x1xf32>
    %276 = arith.addf %274, %275 : vector<24x1xf32>
    %cst_137 = arith.constant 0.000000e+00 : f32
    %277 = vector.broadcast %cst_137 : f32 to vector<24x1xf32>
    %278 = arith.cmpf ogt, %276, %277 : vector<24x1xf32>
    %cst_138 = arith.constant 2.000000e-01 : f32
    %279 = vector.broadcast %cst_138 : f32 to vector<24x1xf32>
    %280 = arith.mulf %279, %276 : vector<24x1xf32>
    %281 = arith.select %278, %276, %280 : vector<24x1xi1>, vector<24x1xf32>
    %282 = vector.extract_strided_slice %272 {offsets = [24, 0], sizes = [24, 1], strides = [1, 1]} : vector<72x1xf32> to vector<24x1xf32>
    %283 = arith.addf %274, %282 : vector<24x1xf32>
    %cst_139 = arith.constant 0.000000e+00 : f32
    %284 = vector.broadcast %cst_139 : f32 to vector<24x1xf32>
    %285 = arith.cmpf ogt, %283, %284 : vector<24x1xf32>
    %cst_140 = arith.constant 2.000000e-01 : f32
    %286 = vector.broadcast %cst_140 : f32 to vector<24x1xf32>
    %287 = arith.mulf %286, %283 : vector<24x1xf32>
    %288 = arith.select %285, %283, %287 : vector<24x1xi1>, vector<24x1xf32>
    %289 = vector.extract_strided_slice %272 {offsets = [48, 0], sizes = [24, 1], strides = [1, 1]} : vector<72x1xf32> to vector<24x1xf32>
    %290 = arith.addf %274, %289 : vector<24x1xf32>
    %cst_141 = arith.constant 0.000000e+00 : f32
    %291 = vector.broadcast %cst_141 : f32 to vector<24x1xf32>
    %292 = arith.cmpf ogt, %290, %291 : vector<24x1xf32>
    %cst_142 = arith.constant 2.000000e-01 : f32
    %293 = vector.broadcast %cst_142 : f32 to vector<24x1xf32>
    %294 = arith.mulf %293, %290 : vector<24x1xf32>
    %295 = arith.select %292, %290, %294 : vector<24x1xi1>, vector<24x1xf32>
    %296 = arith.maximumf %281, %288 : vector<24x1xf32>
    %297 = arith.maximumf %296, %295 : vector<24x1xf32>
    %298 = arith.subf %281, %297 : vector<24x1xf32>
    %299 = math.exp %298 : vector<24x1xf32>
    %300 = arith.subf %288, %297 : vector<24x1xf32>
    %301 = math.exp %300 : vector<24x1xf32>
    %302 = arith.subf %295, %297 : vector<24x1xf32>
    %303 = math.exp %302 : vector<24x1xf32>
    %304 = arith.addf %299, %301 : vector<24x1xf32>
    %305 = arith.addf %304, %303 : vector<24x1xf32>
    %cst_143 = arith.constant 1.000000e+00 : f32
    %306 = vector.broadcast %cst_143 : f32 to vector<24x1xf32>
    %307 = arith.divf %306, %305 : vector<24x1xf32>
    %308 = arith.mulf %299, %307 : vector<24x1xf32>
    %309 = vector.broadcast %308 : vector<24x1xf32> to vector<24x32xf32>
    %310 = arith.mulf %309, %203 : vector<24x32xf32>
    %311 = arith.mulf %301, %307 : vector<24x1xf32>
    %312 = vector.broadcast %311 : vector<24x1xf32> to vector<24x32xf32>
    %313 = arith.mulf %312, %233 : vector<24x32xf32>
    %314 = arith.addf %310, %313 : vector<24x32xf32>
    %315 = arith.mulf %303, %307 : vector<24x1xf32>
    %316 = vector.broadcast %315 : vector<24x1xf32> to vector<24x32xf32>
    %317 = arith.mulf %316, %263 : vector<24x32xf32>
    %318 = arith.addf %314, %317 : vector<24x32xf32>
    %cst_144 = arith.constant 0.000000e+00 : f32
    %319 = vector.broadcast %cst_144 : f32 to vector<24x32xf32>
    %320 = arith.maximumf %318, %319 : vector<24x32xf32>
    %c0_145 = arith.constant 0 : index
    %c0_146 = arith.constant 0 : index
    %321 = vector.load %arg18[%c0_145, %c0_146] : memref<32x1xf32, #tpu.memory_space<vmem>>, vector<32x1xf32>
    %c0_147 = arith.constant 0 : index
    %c0_148 = arith.constant 0 : index
    %322 = vector.load %arg21[%c0_147, %c0_148] : memref<1x32xf32, #tpu.memory_space<vmem>>, vector<1x32xf32>
    %cst_149 = arith.constant dense<0.000000e+00> : vector<16x1xf32>
    %323 = tpu.matmul %20, %321, %cst_149 {dimension_numbers = #tpu.dot_dimension_numbers<[1], [0], [0], [1], [0, 0, 1, 1], [], []>} : vector<16x32xf32>, vector<32x1xf32>, vector<16x1xf32> -> vector<16x1xf32>
    %cst_150 = arith.constant dense<0.000000e+00> : vector<1x32xf32>
    %324 = tpu.matmul %322, %14, %cst_150 {dimension_numbers = #tpu.dot_dimension_numbers<[1], [1], [0], [0], [0, 0, 1, 0], [], []>} : vector<1x32xf32>, vector<32x32xf32>, vector<1x32xf32> -> vector<1x32xf32>
    %325 = vector.broadcast %323 : vector<16x1xf32> to vector<16x32xf32>
    %326 = vector.broadcast %324 : vector<1x32xf32> to vector<16x32xf32>
    %327 = arith.addf %325, %326 : vector<16x32xf32>
    %cst_151 = arith.constant 0.000000e+00 : f32
    %328 = vector.broadcast %cst_151 : f32 to vector<16x32xf32>
    %329 = arith.cmpf ogt, %327, %328 : vector<16x32xf32>
    %cst_152 = arith.constant 2.000000e-01 : f32
    %330 = vector.broadcast %cst_152 : f32 to vector<16x32xf32>
    %331 = arith.mulf %330, %327 : vector<16x32xf32>
    %332 = arith.select %329, %327, %331 : vector<16x32xi1>, vector<16x32xf32>
    %cst_153 = arith.constant 0.000000e+00 : f32
    %333 = vector.broadcast %cst_153 : f32 to vector<16x32xf32>
    %334 = arith.cmpf ogt, %6, %333 : vector<16x32xf32>
    %cst_154 = arith.constant -9.000000e+15 : f32
    %335 = vector.broadcast %cst_154 : f32 to vector<16x32xf32>
    %336 = arith.select %334, %332, %335 : vector<16x32xi1>, vector<16x32xf32>
    %cst_155 = arith.constant dense<0xFF800000> : vector<16xf32>
    %337 = vector.multi_reduction <maximumf>, %336, %cst_155 [1] : vector<16x32xf32> to vector<16xf32>
    %338 = vector.shape_cast %337 : vector<16xf32> to vector<16x1xf32>
    %339 = vector.broadcast %338 : vector<16x1xf32> to vector<16x32xf32>
    %340 = arith.subf %336, %339 : vector<16x32xf32>
    %341 = math.exp %340 : vector<16x32xf32>
    %cst_156 = arith.constant dense<0.000000e+00> : vector<16xf32>
    %342 = vector.multi_reduction <add>, %341, %cst_156 [1] : vector<16x32xf32> to vector<16xf32>
    %343 = vector.shape_cast %342 : vector<16xf32> to vector<16x1xf32>
    %344 = vector.broadcast %343 : vector<16x1xf32> to vector<16x32xf32>
    %345 = arith.divf %341, %344 : vector<16x32xf32>
    %cst_157 = arith.constant 1.000000e-01 : f32
    %346 = vector.broadcast %cst_157 : f32 to vector<16x32xf32>
    %347 = arith.mulf %346, %345 : vector<16x32xf32>
    %cst_158 = arith.constant 0.899999976 : f32
    %348 = vector.broadcast %cst_158 : f32 to vector<16x32xf32>
    %349 = arith.mulf %348, %6 : vector<16x32xf32>
    %350 = arith.addf %347, %349 : vector<16x32xf32>
    %cst_159 = arith.constant dense<0.000000e+00> : vector<16x32xf32>
    %351 = tpu.matmul %350, %14, %cst_159 {dimension_numbers = #tpu.dot_dimension_numbers<[1], [0], [0], [1], [0, 0, 1, 1], [], []>} : vector<16x32xf32>, vector<32x32xf32>, vector<16x32xf32> -> vector<16x32xf32>
    %352 = vector.broadcast %9 : vector<1x32xf32> to vector<16x32xf32>
    %353 = arith.addf %351, %352 : vector<16x32xf32>
    %cst_160 = arith.constant dense<0.000000e+00> : vector<1x24xf32>
    %354 = tpu.matmul %322, %17, %cst_160 {dimension_numbers = #tpu.dot_dimension_numbers<[1], [1], [0], [0], [0, 0, 1, 0], [], []>} : vector<1x32xf32>, vector<24x32xf32>, vector<1x24xf32> -> vector<1x24xf32>
    %355 = vector.broadcast %323 : vector<16x1xf32> to vector<16x24xf32>
    %356 = vector.broadcast %354 : vector<1x24xf32> to vector<16x24xf32>
    %357 = arith.addf %355, %356 : vector<16x24xf32>
    %cst_161 = arith.constant 0.000000e+00 : f32
    %358 = vector.broadcast %cst_161 : f32 to vector<16x24xf32>
    %359 = arith.cmpf ogt, %357, %358 : vector<16x24xf32>
    %cst_162 = arith.constant 2.000000e-01 : f32
    %360 = vector.broadcast %cst_162 : f32 to vector<16x24xf32>
    %361 = arith.mulf %360, %357 : vector<16x24xf32>
    %362 = arith.select %359, %357, %361 : vector<16x24xi1>, vector<16x24xf32>
    %cst_163 = arith.constant 0.000000e+00 : f32
    %363 = vector.broadcast %cst_163 : f32 to vector<16x24xf32>
    %364 = arith.cmpf ogt, %7, %363 : vector<16x24xf32>
    %cst_164 = arith.constant -9.000000e+15 : f32
    %365 = vector.broadcast %cst_164 : f32 to vector<16x24xf32>
    %366 = arith.select %364, %362, %365 : vector<16x24xi1>, vector<16x24xf32>
    %cst_165 = arith.constant dense<0xFF800000> : vector<16xf32>
    %367 = vector.multi_reduction <maximumf>, %366, %cst_165 [1] : vector<16x24xf32> to vector<16xf32>
    %368 = vector.shape_cast %367 : vector<16xf32> to vector<16x1xf32>
    %369 = vector.broadcast %368 : vector<16x1xf32> to vector<16x24xf32>
    %370 = arith.subf %366, %369 : vector<16x24xf32>
    %371 = math.exp %370 : vector<16x24xf32>
    %cst_166 = arith.constant dense<0.000000e+00> : vector<16xf32>
    %372 = vector.multi_reduction <add>, %371, %cst_166 [1] : vector<16x24xf32> to vector<16xf32>
    %373 = vector.shape_cast %372 : vector<16xf32> to vector<16x1xf32>
    %374 = vector.broadcast %373 : vector<16x1xf32> to vector<16x24xf32>
    %375 = arith.divf %371, %374 : vector<16x24xf32>
    %cst_167 = arith.constant 1.000000e-01 : f32
    %376 = vector.broadcast %cst_167 : f32 to vector<16x24xf32>
    %377 = arith.mulf %376, %375 : vector<16x24xf32>
    %cst_168 = arith.constant 0.899999976 : f32
    %378 = vector.broadcast %cst_168 : f32 to vector<16x24xf32>
    %379 = arith.mulf %378, %7 : vector<16x24xf32>
    %380 = arith.addf %377, %379 : vector<16x24xf32>
    %cst_169 = arith.constant dense<0.000000e+00> : vector<16x32xf32>
    %381 = tpu.matmul %380, %17, %cst_169 {dimension_numbers = #tpu.dot_dimension_numbers<[1], [0], [0], [1], [0, 0, 1, 1], [], []>} : vector<16x24xf32>, vector<24x32xf32>, vector<16x32xf32> -> vector<16x32xf32>
    %382 = vector.broadcast %9 : vector<1x32xf32> to vector<16x32xf32>
    %383 = arith.addf %381, %382 : vector<16x32xf32>
    %cst_170 = arith.constant dense<0.000000e+00> : vector<1x16xf32>
    %384 = tpu.matmul %322, %20, %cst_170 {dimension_numbers = #tpu.dot_dimension_numbers<[1], [1], [0], [0], [0, 0, 1, 0], [], []>} : vector<1x32xf32>, vector<16x32xf32>, vector<1x16xf32> -> vector<1x16xf32>
    %385 = vector.broadcast %323 : vector<16x1xf32> to vector<16x16xf32>
    %386 = vector.broadcast %384 : vector<1x16xf32> to vector<16x16xf32>
    %387 = arith.addf %385, %386 : vector<16x16xf32>
    %cst_171 = arith.constant 0.000000e+00 : f32
    %388 = vector.broadcast %cst_171 : f32 to vector<16x16xf32>
    %389 = arith.cmpf ogt, %387, %388 : vector<16x16xf32>
    %cst_172 = arith.constant 2.000000e-01 : f32
    %390 = vector.broadcast %cst_172 : f32 to vector<16x16xf32>
    %391 = arith.mulf %390, %387 : vector<16x16xf32>
    %392 = arith.select %389, %387, %391 : vector<16x16xi1>, vector<16x16xf32>
    %cst_173 = arith.constant 0.000000e+00 : f32
    %393 = vector.broadcast %cst_173 : f32 to vector<16x16xf32>
    %394 = arith.cmpf ogt, %8, %393 : vector<16x16xf32>
    %cst_174 = arith.constant -9.000000e+15 : f32
    %395 = vector.broadcast %cst_174 : f32 to vector<16x16xf32>
    %396 = arith.select %394, %392, %395 : vector<16x16xi1>, vector<16x16xf32>
    %cst_175 = arith.constant dense<0xFF800000> : vector<16xf32>
    %397 = vector.multi_reduction <maximumf>, %396, %cst_175 [1] : vector<16x16xf32> to vector<16xf32>
    %398 = vector.shape_cast %397 : vector<16xf32> to vector<16x1xf32>
    %399 = vector.broadcast %398 : vector<16x1xf32> to vector<16x16xf32>
    %400 = arith.subf %396, %399 : vector<16x16xf32>
    %401 = math.exp %400 : vector<16x16xf32>
    %cst_176 = arith.constant dense<0.000000e+00> : vector<16xf32>
    %402 = vector.multi_reduction <add>, %401, %cst_176 [1] : vector<16x16xf32> to vector<16xf32>
    %403 = vector.shape_cast %402 : vector<16xf32> to vector<16x1xf32>
    %404 = vector.broadcast %403 : vector<16x1xf32> to vector<16x16xf32>
    %405 = arith.divf %401, %404 : vector<16x16xf32>
    %cst_177 = arith.constant 1.000000e-01 : f32
    %406 = vector.broadcast %cst_177 : f32 to vector<16x16xf32>
    %407 = arith.mulf %406, %405 : vector<16x16xf32>
    %cst_178 = arith.constant 0.899999976 : f32
    %408 = vector.broadcast %cst_178 : f32 to vector<16x16xf32>
    %409 = arith.mulf %408, %8 : vector<16x16xf32>
    %410 = arith.addf %407, %409 : vector<16x16xf32>
    %cst_179 = arith.constant dense<0.000000e+00> : vector<16x32xf32>
    %411 = tpu.matmul %410, %20, %cst_179 {dimension_numbers = #tpu.dot_dimension_numbers<[1], [0], [0], [1], [0, 0, 1, 1], [], []>} : vector<16x16xf32>, vector<16x32xf32>, vector<16x32xf32> -> vector<16x32xf32>
    %412 = vector.broadcast %9 : vector<1x32xf32> to vector<16x32xf32>
    %413 = arith.addf %411, %412 : vector<16x32xf32>
    %c0_180 = arith.constant 0 : index
    %c0_181 = arith.constant 0 : index
    %414 = vector.load %arg26[%c0_180, %c0_181] : memref<32x50xf32, #tpu.memory_space<vmem>>, vector<32x50xf32>
    %c0_182 = arith.constant 0 : index
    %c0_183 = arith.constant 0 : index
    %415 = vector.load %arg29[%c0_182, %c0_183] : memref<1x50xf32, #tpu.memory_space<vmem>>, vector<1x50xf32>
    %c0_184 = arith.constant 0 : index
    %c0_185 = arith.constant 0 : index
    %416 = vector.load %arg32[%c0_184, %c0_185] : memref<50x1xf32, #tpu.memory_space<vmem>>, vector<50x1xf32>
    %c0_186 = arith.constant 0 : index
    %c0_187 = arith.constant 0 : index
    %417 = vector.load %arg35[%c0_186, %c0_187] : memref<50x1xf32, #tpu.memory_space<vmem>>, vector<50x1xf32>
    %418 = tpu.concatenate %353, %383, %413 in 0 : vector<16x32xf32>, vector<16x32xf32>, vector<16x32xf32> -> vector<48x32xf32>
    %cst_188 = arith.constant dense<0.000000e+00> : vector<48x50xf32>
    %419 = tpu.matmul %418, %414, %cst_188 {dimension_numbers = #tpu.dot_dimension_numbers<[1], [0], [0], [1], [0, 0, 1, 1], [], []>} : vector<48x32xf32>, vector<32x50xf32>, vector<48x50xf32> -> vector<48x50xf32>
    %420 = vector.broadcast %415 : vector<1x50xf32> to vector<48x50xf32>
    %421 = arith.addf %419, %420 : vector<48x50xf32>
    %cst_189 = arith.constant dense<0.000000e+00> : vector<48x1xf32>
    %422 = tpu.matmul %421, %417, %cst_189 {dimension_numbers = #tpu.dot_dimension_numbers<[1], [0], [0], [1], [0, 0, 1, 1], [], []>} : vector<48x50xf32>, vector<50x1xf32>, vector<48x1xf32> -> vector<48x1xf32>
    %423 = vector.extract_strided_slice %421 {offsets = [32, 0], sizes = [16, 50], strides = [1, 1]} : vector<48x50xf32> to vector<16x50xf32>
    %cst_190 = arith.constant dense<0.000000e+00> : vector<16x1xf32>
    %424 = tpu.matmul %423, %416, %cst_190 {dimension_numbers = #tpu.dot_dimension_numbers<[1], [0], [0], [1], [0, 0, 1, 1], [], []>} : vector<16x50xf32>, vector<50x1xf32>, vector<16x1xf32> -> vector<16x1xf32>
    %425 = vector.extract_strided_slice %422 {offsets = [0, 0], sizes = [16, 1], strides = [1, 1]} : vector<48x1xf32> to vector<16x1xf32>
    %426 = arith.addf %424, %425 : vector<16x1xf32>
    %cst_191 = arith.constant 0.000000e+00 : f32
    %427 = vector.broadcast %cst_191 : f32 to vector<16x1xf32>
    %428 = arith.cmpf ogt, %426, %427 : vector<16x1xf32>
    %cst_192 = arith.constant 2.000000e-01 : f32
    %429 = vector.broadcast %cst_192 : f32 to vector<16x1xf32>
    %430 = arith.mulf %429, %426 : vector<16x1xf32>
    %431 = arith.select %428, %426, %430 : vector<16x1xi1>, vector<16x1xf32>
    %432 = vector.extract_strided_slice %422 {offsets = [16, 0], sizes = [16, 1], strides = [1, 1]} : vector<48x1xf32> to vector<16x1xf32>
    %433 = arith.addf %424, %432 : vector<16x1xf32>
    %cst_193 = arith.constant 0.000000e+00 : f32
    %434 = vector.broadcast %cst_193 : f32 to vector<16x1xf32>
    %435 = arith.cmpf ogt, %433, %434 : vector<16x1xf32>
    %cst_194 = arith.constant 2.000000e-01 : f32
    %436 = vector.broadcast %cst_194 : f32 to vector<16x1xf32>
    %437 = arith.mulf %436, %433 : vector<16x1xf32>
    %438 = arith.select %435, %433, %437 : vector<16x1xi1>, vector<16x1xf32>
    %439 = vector.extract_strided_slice %422 {offsets = [32, 0], sizes = [16, 1], strides = [1, 1]} : vector<48x1xf32> to vector<16x1xf32>
    %440 = arith.addf %424, %439 : vector<16x1xf32>
    %cst_195 = arith.constant 0.000000e+00 : f32
    %441 = vector.broadcast %cst_195 : f32 to vector<16x1xf32>
    %442 = arith.cmpf ogt, %440, %441 : vector<16x1xf32>
    %cst_196 = arith.constant 2.000000e-01 : f32
    %443 = vector.broadcast %cst_196 : f32 to vector<16x1xf32>
    %444 = arith.mulf %443, %440 : vector<16x1xf32>
    %445 = arith.select %442, %440, %444 : vector<16x1xi1>, vector<16x1xf32>
    %446 = arith.maximumf %431, %438 : vector<16x1xf32>
    %447 = arith.maximumf %446, %445 : vector<16x1xf32>
    %448 = arith.subf %431, %447 : vector<16x1xf32>
    %449 = math.exp %448 : vector<16x1xf32>
    %450 = arith.subf %438, %447 : vector<16x1xf32>
    %451 = math.exp %450 : vector<16x1xf32>
    %452 = arith.subf %445, %447 : vector<16x1xf32>
    %453 = math.exp %452 : vector<16x1xf32>
    %454 = arith.addf %449, %451 : vector<16x1xf32>
    %455 = arith.addf %454, %453 : vector<16x1xf32>
    %cst_197 = arith.constant 1.000000e+00 : f32
    %456 = vector.broadcast %cst_197 : f32 to vector<16x1xf32>
    %457 = arith.divf %456, %455 : vector<16x1xf32>
    %458 = arith.mulf %449, %457 : vector<16x1xf32>
    %459 = vector.broadcast %458 : vector<16x1xf32> to vector<16x32xf32>
    %460 = arith.mulf %459, %353 : vector<16x32xf32>
    %461 = arith.mulf %451, %457 : vector<16x1xf32>
    %462 = vector.broadcast %461 : vector<16x1xf32> to vector<16x32xf32>
    %463 = arith.mulf %462, %383 : vector<16x32xf32>
    %464 = arith.addf %460, %463 : vector<16x32xf32>
    %465 = arith.mulf %453, %457 : vector<16x1xf32>
    %466 = vector.broadcast %465 : vector<16x1xf32> to vector<16x32xf32>
    %467 = arith.mulf %466, %413 : vector<16x32xf32>
    %468 = arith.addf %464, %467 : vector<16x32xf32>
    %cst_198 = arith.constant 0.000000e+00 : f32
    %469 = vector.broadcast %cst_198 : f32 to vector<16x32xf32>
    %470 = arith.maximumf %468, %469 : vector<16x32xf32>
    %cst_199 = arith.constant dense<0.000000e+00> : vector<32x6xf32>
    %471 = tpu.matmul %170, %10, %cst_199 {dimension_numbers = #tpu.dot_dimension_numbers<[1], [0], [0], [1], [0, 0, 1, 1], [], []>} : vector<32x32xf32>, vector<32x6xf32>, vector<32x6xf32> -> vector<32x6xf32>
    %cst_200 = arith.constant dense<0.000000e+00> : vector<24x6xf32>
    %472 = tpu.matmul %320, %10, %cst_200 {dimension_numbers = #tpu.dot_dimension_numbers<[1], [0], [0], [1], [0, 0, 1, 1], [], []>} : vector<24x32xf32>, vector<32x6xf32>, vector<24x6xf32> -> vector<24x6xf32>
    %cst_201 = arith.constant dense<0.000000e+00> : vector<16x6xf32>
    %473 = tpu.matmul %470, %10, %cst_201 {dimension_numbers = #tpu.dot_dimension_numbers<[1], [0], [0], [1], [0, 0, 1, 1], [], []>} : vector<16x32xf32>, vector<32x6xf32>, vector<16x6xf32> -> vector<16x6xf32>
    %cst_202 = arith.constant dense<0.000000e+00> : vector<32x6xf32>
    %474 = tpu.matmul %0, %471, %cst_202 {dimension_numbers = #tpu.dot_dimension_numbers<[1], [0], [0], [1], [0, 0, 1, 1], [], []>} : vector<32x32xf32>, vector<32x6xf32>, vector<32x6xf32> -> vector<32x6xf32>
    %475 = vector.broadcast %11 : vector<1x6xf32> to vector<32x6xf32>
    %476 = arith.addf %474, %475 : vector<32x6xf32>
    %cst_203 = arith.constant dense<0.000000e+00> : vector<32x6xf32>
    %477 = tpu.matmul %1, %472, %cst_203 {dimension_numbers = #tpu.dot_dimension_numbers<[1], [0], [0], [1], [0, 0, 1, 1], [], []>} : vector<32x24xf32>, vector<24x6xf32>, vector<32x6xf32> -> vector<32x6xf32>
    %478 = vector.broadcast %11 : vector<1x6xf32> to vector<32x6xf32>
    %479 = arith.addf %477, %478 : vector<32x6xf32>
    %cst_204 = arith.constant dense<0.000000e+00> : vector<32x6xf32>
    %480 = tpu.matmul %2, %473, %cst_204 {dimension_numbers = #tpu.dot_dimension_numbers<[1], [0], [0], [1], [0, 0, 1, 1], [], []>} : vector<32x16xf32>, vector<16x6xf32>, vector<32x6xf32> -> vector<32x6xf32>
    %481 = vector.broadcast %11 : vector<1x6xf32> to vector<32x6xf32>
    %482 = arith.addf %480, %481 : vector<32x6xf32>
    %c0_205 = arith.constant 0 : index
    %c0_206 = arith.constant 0 : index
    %483 = vector.load %arg36[%c0_205, %c0_206] : memref<6x50xf32, #tpu.memory_space<vmem>>, vector<6x50xf32>
    %c0_207 = arith.constant 0 : index
    %c0_208 = arith.constant 0 : index
    %484 = vector.load %arg39[%c0_207, %c0_208] : memref<1x50xf32, #tpu.memory_space<vmem>>, vector<1x50xf32>
    %c0_209 = arith.constant 0 : index
    %c0_210 = arith.constant 0 : index
    %485 = vector.load %arg42[%c0_209, %c0_210] : memref<50x1xf32, #tpu.memory_space<vmem>>, vector<50x1xf32>
    %c0_211 = arith.constant 0 : index
    %c0_212 = arith.constant 0 : index
    %486 = vector.load %arg45[%c0_211, %c0_212] : memref<50x1xf32, #tpu.memory_space<vmem>>, vector<50x1xf32>
    %487 = tpu.concatenate %476, %479, %482 in 0 : vector<32x6xf32>, vector<32x6xf32>, vector<32x6xf32> -> vector<96x6xf32>
    %cst_213 = arith.constant dense<0.000000e+00> : vector<96x50xf32>
    %488 = tpu.matmul %487, %483, %cst_213 {dimension_numbers = #tpu.dot_dimension_numbers<[1], [0], [0], [1], [0, 0, 1, 1], [], []>} : vector<96x6xf32>, vector<6x50xf32>, vector<96x50xf32> -> vector<96x50xf32>
    %489 = vector.broadcast %484 : vector<1x50xf32> to vector<96x50xf32>
    %490 = arith.addf %488, %489 : vector<96x50xf32>
    %cst_214 = arith.constant dense<0.000000e+00> : vector<96x1xf32>
    %491 = tpu.matmul %490, %486, %cst_214 {dimension_numbers = #tpu.dot_dimension_numbers<[1], [0], [0], [1], [0, 0, 1, 1], [], []>} : vector<96x50xf32>, vector<50x1xf32>, vector<96x1xf32> -> vector<96x1xf32>
    %492 = vector.extract_strided_slice %490 {offsets = [0, 0], sizes = [32, 50], strides = [1, 1]} : vector<96x50xf32> to vector<32x50xf32>
    %cst_215 = arith.constant dense<0.000000e+00> : vector<32x1xf32>
    %493 = tpu.matmul %492, %485, %cst_215 {dimension_numbers = #tpu.dot_dimension_numbers<[1], [0], [0], [1], [0, 0, 1, 1], [], []>} : vector<32x50xf32>, vector<50x1xf32>, vector<32x1xf32> -> vector<32x1xf32>
    %494 = vector.extract_strided_slice %491 {offsets = [0, 0], sizes = [32, 1], strides = [1, 1]} : vector<96x1xf32> to vector<32x1xf32>
    %495 = arith.addf %493, %494 : vector<32x1xf32>
    %cst_216 = arith.constant 0.000000e+00 : f32
    %496 = vector.broadcast %cst_216 : f32 to vector<32x1xf32>
    %497 = arith.cmpf ogt, %495, %496 : vector<32x1xf32>
    %cst_217 = arith.constant 2.000000e-01 : f32
    %498 = vector.broadcast %cst_217 : f32 to vector<32x1xf32>
    %499 = arith.mulf %498, %495 : vector<32x1xf32>
    %500 = arith.select %497, %495, %499 : vector<32x1xi1>, vector<32x1xf32>
    %501 = vector.extract_strided_slice %491 {offsets = [32, 0], sizes = [32, 1], strides = [1, 1]} : vector<96x1xf32> to vector<32x1xf32>
    %502 = arith.addf %493, %501 : vector<32x1xf32>
    %cst_218 = arith.constant 0.000000e+00 : f32
    %503 = vector.broadcast %cst_218 : f32 to vector<32x1xf32>
    %504 = arith.cmpf ogt, %502, %503 : vector<32x1xf32>
    %cst_219 = arith.constant 2.000000e-01 : f32
    %505 = vector.broadcast %cst_219 : f32 to vector<32x1xf32>
    %506 = arith.mulf %505, %502 : vector<32x1xf32>
    %507 = arith.select %504, %502, %506 : vector<32x1xi1>, vector<32x1xf32>
    %508 = vector.extract_strided_slice %491 {offsets = [64, 0], sizes = [32, 1], strides = [1, 1]} : vector<96x1xf32> to vector<32x1xf32>
    %509 = arith.addf %493, %508 : vector<32x1xf32>
    %cst_220 = arith.constant 0.000000e+00 : f32
    %510 = vector.broadcast %cst_220 : f32 to vector<32x1xf32>
    %511 = arith.cmpf ogt, %509, %510 : vector<32x1xf32>
    %cst_221 = arith.constant 2.000000e-01 : f32
    %512 = vector.broadcast %cst_221 : f32 to vector<32x1xf32>
    %513 = arith.mulf %512, %509 : vector<32x1xf32>
    %514 = arith.select %511, %509, %513 : vector<32x1xi1>, vector<32x1xf32>
    %515 = arith.maximumf %500, %507 : vector<32x1xf32>
    %516 = arith.maximumf %515, %514 : vector<32x1xf32>
    %517 = arith.subf %500, %516 : vector<32x1xf32>
    %518 = math.exp %517 : vector<32x1xf32>
    %519 = arith.subf %507, %516 : vector<32x1xf32>
    %520 = math.exp %519 : vector<32x1xf32>
    %521 = arith.subf %514, %516 : vector<32x1xf32>
    %522 = math.exp %521 : vector<32x1xf32>
    %523 = arith.addf %518, %520 : vector<32x1xf32>
    %524 = arith.addf %523, %522 : vector<32x1xf32>
    %cst_222 = arith.constant 1.000000e+00 : f32
    %525 = vector.broadcast %cst_222 : f32 to vector<32x1xf32>
    %526 = arith.divf %525, %524 : vector<32x1xf32>
    %527 = arith.mulf %518, %526 : vector<32x1xf32>
    %528 = vector.broadcast %527 : vector<32x1xf32> to vector<32x6xf32>
    %529 = arith.mulf %528, %476 : vector<32x6xf32>
    %530 = arith.mulf %520, %526 : vector<32x1xf32>
    %531 = vector.broadcast %530 : vector<32x1xf32> to vector<32x6xf32>
    %532 = arith.mulf %531, %479 : vector<32x6xf32>
    %533 = arith.addf %529, %532 : vector<32x6xf32>
    %534 = arith.mulf %522, %526 : vector<32x1xf32>
    %535 = vector.broadcast %534 : vector<32x1xf32> to vector<32x6xf32>
    %536 = arith.mulf %535, %482 : vector<32x6xf32>
    %537 = arith.addf %533, %536 : vector<32x6xf32>
    %cst_223 = arith.constant dense<0xFF800000> : vector<32xf32>
    %538 = vector.multi_reduction <maximumf>, %537, %cst_223 [1] : vector<32x6xf32> to vector<32xf32>
    %539 = vector.shape_cast %538 : vector<32xf32> to vector<32x1xf32>
    %540 = vector.broadcast %539 : vector<32x1xf32> to vector<32x6xf32>
    %541 = arith.subf %537, %540 : vector<32x6xf32>
    %542 = vector.broadcast %539 : vector<32x1xf32> to vector<32x6xf32>
    %543 = arith.subf %537, %542 : vector<32x6xf32>
    %544 = math.exp %543 : vector<32x6xf32>
    %cst_224 = arith.constant dense<0.000000e+00> : vector<32xf32>
    %545 = vector.multi_reduction <add>, %544, %cst_224 [1] : vector<32x6xf32> to vector<32xf32>
    %546 = vector.shape_cast %545 : vector<32xf32> to vector<32x1xf32>
    %547 = math.log %546 : vector<32x1xf32>
    %548 = vector.broadcast %547 : vector<32x1xf32> to vector<32x6xf32>
    %549 = arith.subf %541, %548 : vector<32x6xf32>
    %c0_225 = arith.constant 0 : index
    %c0_226 = arith.constant 0 : index
    %550 = vector.load %arg48[%c0_225, %c0_226] : memref<32x6xf32, #tpu.memory_space<vmem>>, vector<32x6xf32>
    tpu.vector_store %arg48[%c0_225, %c0_226], %549 {strides = array<i32>} : memref<32x6xf32, #tpu.memory_space<vmem>>, vector<32x6xf32>,
    %cst_227 = arith.constant dense<0.000000e+00> : vector<24x6xf32>
    %551 = tpu.matmul %3, %471, %cst_227 {dimension_numbers = #tpu.dot_dimension_numbers<[1], [0], [0], [1], [0, 0, 1, 1], [], []>} : vector<24x32xf32>, vector<32x6xf32>, vector<24x6xf32> -> vector<24x6xf32>
    %552 = vector.broadcast %11 : vector<1x6xf32> to vector<24x6xf32>
    %553 = arith.addf %551, %552 : vector<24x6xf32>
    %cst_228 = arith.constant dense<0.000000e+00> : vector<24x6xf32>
    %554 = tpu.matmul %4, %472, %cst_228 {dimension_numbers = #tpu.dot_dimension_numbers<[1], [0], [0], [1], [0, 0, 1, 1], [], []>} : vector<24x24xf32>, vector<24x6xf32>, vector<24x6xf32> -> vector<24x6xf32>
    %555 = vector.broadcast %11 : vector<1x6xf32> to vector<24x6xf32>
    %556 = arith.addf %554, %555 : vector<24x6xf32>
    %cst_229 = arith.constant dense<0.000000e+00> : vector<24x6xf32>
    %557 = tpu.matmul %5, %473, %cst_229 {dimension_numbers = #tpu.dot_dimension_numbers<[1], [0], [0], [1], [0, 0, 1, 1], [], []>} : vector<24x16xf32>, vector<16x6xf32>, vector<24x6xf32> -> vector<24x6xf32>
    %558 = vector.broadcast %11 : vector<1x6xf32> to vector<24x6xf32>
    %559 = arith.addf %557, %558 : vector<24x6xf32>
    %c0_230 = arith.constant 0 : index
    %c0_231 = arith.constant 0 : index
    %560 = vector.load %arg37[%c0_230, %c0_231] : memref<6x50xf32, #tpu.memory_space<vmem>>, vector<6x50xf32>
    %c0_232 = arith.constant 0 : index
    %c0_233 = arith.constant 0 : index
    %561 = vector.load %arg40[%c0_232, %c0_233] : memref<1x50xf32, #tpu.memory_space<vmem>>, vector<1x50xf32>
    %c0_234 = arith.constant 0 : index
    %c0_235 = arith.constant 0 : index
    %562 = vector.load %arg43[%c0_234, %c0_235] : memref<50x1xf32, #tpu.memory_space<vmem>>, vector<50x1xf32>
    %c0_236 = arith.constant 0 : index
    %c0_237 = arith.constant 0 : index
    %563 = vector.load %arg46[%c0_236, %c0_237] : memref<50x1xf32, #tpu.memory_space<vmem>>, vector<50x1xf32>
    %564 = tpu.concatenate %553, %556, %559 in 0 : vector<24x6xf32>, vector<24x6xf32>, vector<24x6xf32> -> vector<72x6xf32>
    %cst_238 = arith.constant dense<0.000000e+00> : vector<72x50xf32>
    %565 = tpu.matmul %564, %560, %cst_238 {dimension_numbers = #tpu.dot_dimension_numbers<[1], [0], [0], [1], [0, 0, 1, 1], [], []>} : vector<72x6xf32>, vector<6x50xf32>, vector<72x50xf32> -> vector<72x50xf32>
    %566 = vector.broadcast %561 : vector<1x50xf32> to vector<72x50xf32>
    %567 = arith.addf %565, %566 : vector<72x50xf32>
    %cst_239 = arith.constant dense<0.000000e+00> : vector<72x1xf32>
    %568 = tpu.matmul %567, %563, %cst_239 {dimension_numbers = #tpu.dot_dimension_numbers<[1], [0], [0], [1], [0, 0, 1, 1], [], []>} : vector<72x50xf32>, vector<50x1xf32>, vector<72x1xf32> -> vector<72x1xf32>
    %569 = vector.extract_strided_slice %567 {offsets = [24, 0], sizes = [24, 50], strides = [1, 1]} : vector<72x50xf32> to vector<24x50xf32>
    %cst_240 = arith.constant dense<0.000000e+00> : vector<24x1xf32>
    %570 = tpu.matmul %569, %562, %cst_240 {dimension_numbers = #tpu.dot_dimension_numbers<[1], [0], [0], [1], [0, 0, 1, 1], [], []>} : vector<24x50xf32>, vector<50x1xf32>, vector<24x1xf32> -> vector<24x1xf32>
    %571 = vector.extract_strided_slice %568 {offsets = [0, 0], sizes = [24, 1], strides = [1, 1]} : vector<72x1xf32> to vector<24x1xf32>
    %572 = arith.addf %570, %571 : vector<24x1xf32>
    %cst_241 = arith.constant 0.000000e+00 : f32
    %573 = vector.broadcast %cst_241 : f32 to vector<24x1xf32>
    %574 = arith.cmpf ogt, %572, %573 : vector<24x1xf32>
    %cst_242 = arith.constant 2.000000e-01 : f32
    %575 = vector.broadcast %cst_242 : f32 to vector<24x1xf32>
    %576 = arith.mulf %575, %572 : vector<24x1xf32>
    %577 = arith.select %574, %572, %576 : vector<24x1xi1>, vector<24x1xf32>
    %578 = vector.extract_strided_slice %568 {offsets = [24, 0], sizes = [24, 1], strides = [1, 1]} : vector<72x1xf32> to vector<24x1xf32>
    %579 = arith.addf %570, %578 : vector<24x1xf32>
    %cst_243 = arith.constant 0.000000e+00 : f32
    %580 = vector.broadcast %cst_243 : f32 to vector<24x1xf32>
    %581 = arith.cmpf ogt, %579, %580 : vector<24x1xf32>
    %cst_244 = arith.constant 2.000000e-01 : f32
    %582 = vector.broadcast %cst_244 : f32 to vector<24x1xf32>
    %583 = arith.mulf %582, %579 : vector<24x1xf32>
    %584 = arith.select %581, %579, %583 : vector<24x1xi1>, vector<24x1xf32>
    %585 = vector.extract_strided_slice %568 {offsets = [48, 0], sizes = [24, 1], strides = [1, 1]} : vector<72x1xf32> to vector<24x1xf32>
    %586 = arith.addf %570, %585 : vector<24x1xf32>
    %cst_245 = arith.constant 0.000000e+00 : f32
    %587 = vector.broadcast %cst_245 : f32 to vector<24x1xf32>
    %588 = arith.cmpf ogt, %586, %587 : vector<24x1xf32>
    %cst_246 = arith.constant 2.000000e-01 : f32
    %589 = vector.broadcast %cst_246 : f32 to vector<24x1xf32>
    %590 = arith.mulf %589, %586 : vector<24x1xf32>
    %591 = arith.select %588, %586, %590 : vector<24x1xi1>, vector<24x1xf32>
    %592 = arith.maximumf %577, %584 : vector<24x1xf32>
    %593 = arith.maximumf %592, %591 : vector<24x1xf32>
    %594 = arith.subf %577, %593 : vector<24x1xf32>
    %595 = math.exp %594 : vector<24x1xf32>
    %596 = arith.subf %584, %593 : vector<24x1xf32>
    %597 = math.exp %596 : vector<24x1xf32>
    %598 = arith.subf %591, %593 : vector<24x1xf32>
    %599 = math.exp %598 : vector<24x1xf32>
    %600 = arith.addf %595, %597 : vector<24x1xf32>
    %601 = arith.addf %600, %599 : vector<24x1xf32>
    %cst_247 = arith.constant 1.000000e+00 : f32
    %602 = vector.broadcast %cst_247 : f32 to vector<24x1xf32>
    %603 = arith.divf %602, %601 : vector<24x1xf32>
    %604 = arith.mulf %595, %603 : vector<24x1xf32>
    %605 = vector.broadcast %604 : vector<24x1xf32> to vector<24x6xf32>
    %606 = arith.mulf %605, %553 : vector<24x6xf32>
    %607 = arith.mulf %597, %603 : vector<24x1xf32>
    %608 = vector.broadcast %607 : vector<24x1xf32> to vector<24x6xf32>
    %609 = arith.mulf %608, %556 : vector<24x6xf32>
    %610 = arith.addf %606, %609 : vector<24x6xf32>
    %611 = arith.mulf %599, %603 : vector<24x1xf32>
    %612 = vector.broadcast %611 : vector<24x1xf32> to vector<24x6xf32>
    %613 = arith.mulf %612, %559 : vector<24x6xf32>
    %614 = arith.addf %610, %613 : vector<24x6xf32>
    %cst_248 = arith.constant dense<0xFF800000> : vector<24xf32>
    %615 = vector.multi_reduction <maximumf>, %614, %cst_248 [1] : vector<24x6xf32> to vector<24xf32>
    %616 = vector.shape_cast %615 : vector<24xf32> to vector<24x1xf32>
    %617 = vector.broadcast %616 : vector<24x1xf32> to vector<24x6xf32>
    %618 = arith.subf %614, %617 : vector<24x6xf32>
    %619 = vector.broadcast %616 : vector<24x1xf32> to vector<24x6xf32>
    %620 = arith.subf %614, %619 : vector<24x6xf32>
    %621 = math.exp %620 : vector<24x6xf32>
    %cst_249 = arith.constant dense<0.000000e+00> : vector<24xf32>
    %622 = vector.multi_reduction <add>, %621, %cst_249 [1] : vector<24x6xf32> to vector<24xf32>
    %623 = vector.shape_cast %622 : vector<24xf32> to vector<24x1xf32>
    %624 = math.log %623 : vector<24x1xf32>
    %625 = vector.broadcast %624 : vector<24x1xf32> to vector<24x6xf32>
    %626 = arith.subf %618, %625 : vector<24x6xf32>
    %c0_250 = arith.constant 0 : index
    %c0_251 = arith.constant 0 : index
    %627 = vector.load %arg49[%c0_250, %c0_251] : memref<24x6xf32, #tpu.memory_space<vmem>>, vector<24x6xf32>
    tpu.vector_store %arg49[%c0_250, %c0_251], %626 {strides = array<i32>} : memref<24x6xf32, #tpu.memory_space<vmem>>, vector<24x6xf32>,
    %cst_252 = arith.constant dense<0.000000e+00> : vector<16x6xf32>
    %628 = tpu.matmul %6, %471, %cst_252 {dimension_numbers = #tpu.dot_dimension_numbers<[1], [0], [0], [1], [0, 0, 1, 1], [], []>} : vector<16x32xf32>, vector<32x6xf32>, vector<16x6xf32> -> vector<16x6xf32>
    %629 = vector.broadcast %11 : vector<1x6xf32> to vector<16x6xf32>
    %630 = arith.addf %628, %629 : vector<16x6xf32>
    %cst_253 = arith.constant dense<0.000000e+00> : vector<16x6xf32>
    %631 = tpu.matmul %7, %472, %cst_253 {dimension_numbers = #tpu.dot_dimension_numbers<[1], [0], [0], [1], [0, 0, 1, 1], [], []>} : vector<16x24xf32>, vector<24x6xf32>, vector<16x6xf32> -> vector<16x6xf32>
    %632 = vector.broadcast %11 : vector<1x6xf32> to vector<16x6xf32>
    %633 = arith.addf %631, %632 : vector<16x6xf32>
    %cst_254 = arith.constant dense<0.000000e+00> : vector<16x6xf32>
    %634 = tpu.matmul %8, %473, %cst_254 {dimension_numbers = #tpu.dot_dimension_numbers<[1], [0], [0], [1], [0, 0, 1, 1], [], []>} : vector<16x16xf32>, vector<16x6xf32>, vector<16x6xf32> -> vector<16x6xf32>
    %635 = vector.broadcast %11 : vector<1x6xf32> to vector<16x6xf32>
    %636 = arith.addf %634, %635 : vector<16x6xf32>
    %c0_255 = arith.constant 0 : index
    %c0_256 = arith.constant 0 : index
    %637 = vector.load %arg38[%c0_255, %c0_256] : memref<6x50xf32, #tpu.memory_space<vmem>>, vector<6x50xf32>
    %c0_257 = arith.constant 0 : index
    %c0_258 = arith.constant 0 : index
    %638 = vector.load %arg41[%c0_257, %c0_258] : memref<1x50xf32, #tpu.memory_space<vmem>>, vector<1x50xf32>
    %c0_259 = arith.constant 0 : index
    %c0_260 = arith.constant 0 : index
    %639 = vector.load %arg44[%c0_259, %c0_260] : memref<50x1xf32, #tpu.memory_space<vmem>>, vector<50x1xf32>
    %c0_261 = arith.constant 0 : index
    %c0_262 = arith.constant 0 : index
    %640 = vector.load %arg47[%c0_261, %c0_262] : memref<50x1xf32, #tpu.memory_space<vmem>>, vector<50x1xf32>
    %641 = tpu.concatenate %630, %633, %636 in 0 : vector<16x6xf32>, vector<16x6xf32>, vector<16x6xf32> -> vector<48x6xf32>
    %cst_263 = arith.constant dense<0.000000e+00> : vector<48x50xf32>
    %642 = tpu.matmul %641, %637, %cst_263 {dimension_numbers = #tpu.dot_dimension_numbers<[1], [0], [0], [1], [0, 0, 1, 1], [], []>} : vector<48x6xf32>, vector<6x50xf32>, vector<48x50xf32> -> vector<48x50xf32>
    %643 = vector.broadcast %638 : vector<1x50xf32> to vector<48x50xf32>
    %644 = arith.addf %642, %643 : vector<48x50xf32>
    %cst_264 = arith.constant dense<0.000000e+00> : vector<48x1xf32>
    %645 = tpu.matmul %644, %640, %cst_264 {dimension_numbers = #tpu.dot_dimension_numbers<[1], [0], [0], [1], [0, 0, 1, 1], [], []>} : vector<48x50xf32>, vector<50x1xf32>, vector<48x1xf32> -> vector<48x1xf32>
    %646 = vector.extract_strided_slice %644 {offsets = [32, 0], sizes = [16, 50], strides = [1, 1]} : vector<48x50xf32> to vector<16x50xf32>
    %cst_265 = arith.constant dense<0.000000e+00> : vector<16x1xf32>
    %647 = tpu.matmul %646, %639, %cst_265 {dimension_numbers = #tpu.dot_dimension_numbers<[1], [0], [0], [1], [0, 0, 1, 1], [], []>} : vector<16x50xf32>, vector<50x1xf32>, vector<16x1xf32> -> vector<16x1xf32>
    %648 = vector.extract_strided_slice %645 {offsets = [0, 0], sizes = [16, 1], strides = [1, 1]} : vector<48x1xf32> to vector<16x1xf32>
    %649 = arith.addf %647, %648 : vector<16x1xf32>
    %cst_266 = arith.constant 0.000000e+00 : f32
    %650 = vector.broadcast %cst_266 : f32 to vector<16x1xf32>
    %651 = arith.cmpf ogt, %649, %650 : vector<16x1xf32>
    %cst_267 = arith.constant 2.000000e-01 : f32
    %652 = vector.broadcast %cst_267 : f32 to vector<16x1xf32>
    %653 = arith.mulf %652, %649 : vector<16x1xf32>
    %654 = arith.select %651, %649, %653 : vector<16x1xi1>, vector<16x1xf32>
    %655 = vector.extract_strided_slice %645 {offsets = [16, 0], sizes = [16, 1], strides = [1, 1]} : vector<48x1xf32> to vector<16x1xf32>
    %656 = arith.addf %647, %655 : vector<16x1xf32>
    %cst_268 = arith.constant 0.000000e+00 : f32
    %657 = vector.broadcast %cst_268 : f32 to vector<16x1xf32>
    %658 = arith.cmpf ogt, %656, %657 : vector<16x1xf32>
    %cst_269 = arith.constant 2.000000e-01 : f32
    %659 = vector.broadcast %cst_269 : f32 to vector<16x1xf32>
    %660 = arith.mulf %659, %656 : vector<16x1xf32>
    %661 = arith.select %658, %656, %660 : vector<16x1xi1>, vector<16x1xf32>
    %662 = vector.extract_strided_slice %645 {offsets = [32, 0], sizes = [16, 1], strides = [1, 1]} : vector<48x1xf32> to vector<16x1xf32>
    %663 = arith.addf %647, %662 : vector<16x1xf32>
    %cst_270 = arith.constant 0.000000e+00 : f32
    %664 = vector.broadcast %cst_270 : f32 to vector<16x1xf32>
    %665 = arith.cmpf ogt, %663, %664 : vector<16x1xf32>
    %cst_271 = arith.constant 2.000000e-01 : f32
    %666 = vector.broadcast %cst_271 : f32 to vector<16x1xf32>
    %667 = arith.mulf %666, %663 : vector<16x1xf32>
    %668 = arith.select %665, %663, %667 : vector<16x1xi1>, vector<16x1xf32>
    %669 = arith.maximumf %654, %661 : vector<16x1xf32>
    %670 = arith.maximumf %669, %668 : vector<16x1xf32>
    %671 = arith.subf %654, %670 : vector<16x1xf32>
    %672 = math.exp %671 : vector<16x1xf32>
    %673 = arith.subf %661, %670 : vector<16x1xf32>
    %674 = math.exp %673 : vector<16x1xf32>
    %675 = arith.subf %668, %670 : vector<16x1xf32>
    %676 = math.exp %675 : vector<16x1xf32>
    %677 = arith.addf %672, %674 : vector<16x1xf32>
    %678 = arith.addf %677, %676 : vector<16x1xf32>
    %cst_272 = arith.constant 1.000000e+00 : f32
    %679 = vector.broadcast %cst_272 : f32 to vector<16x1xf32>
    %680 = arith.divf %679, %678 : vector<16x1xf32>
    %681 = arith.mulf %672, %680 : vector<16x1xf32>
    %682 = vector.broadcast %681 : vector<16x1xf32> to vector<16x6xf32>
    %683 = arith.mulf %682, %630 : vector<16x6xf32>
    %684 = arith.mulf %674, %680 : vector<16x1xf32>
    %685 = vector.broadcast %684 : vector<16x1xf32> to vector<16x6xf32>
    %686 = arith.mulf %685, %633 : vector<16x6xf32>
    %687 = arith.addf %683, %686 : vector<16x6xf32>
    %688 = arith.mulf %676, %680 : vector<16x1xf32>
    %689 = vector.broadcast %688 : vector<16x1xf32> to vector<16x6xf32>
    %690 = arith.mulf %689, %636 : vector<16x6xf32>
    %691 = arith.addf %687, %690 : vector<16x6xf32>
    %cst_273 = arith.constant dense<0xFF800000> : vector<16xf32>
    %692 = vector.multi_reduction <maximumf>, %691, %cst_273 [1] : vector<16x6xf32> to vector<16xf32>
    %693 = vector.shape_cast %692 : vector<16xf32> to vector<16x1xf32>
    %694 = vector.broadcast %693 : vector<16x1xf32> to vector<16x6xf32>
    %695 = arith.subf %691, %694 : vector<16x6xf32>
    %696 = vector.broadcast %693 : vector<16x1xf32> to vector<16x6xf32>
    %697 = arith.subf %691, %696 : vector<16x6xf32>
    %698 = math.exp %697 : vector<16x6xf32>
    %cst_274 = arith.constant dense<0.000000e+00> : vector<16xf32>
    %699 = vector.multi_reduction <add>, %698, %cst_274 [1] : vector<16x6xf32> to vector<16xf32>
    %700 = vector.shape_cast %699 : vector<16xf32> to vector<16x1xf32>
    %701 = math.log %700 : vector<16x1xf32>
    %702 = vector.broadcast %701 : vector<16x1xf32> to vector<16x6xf32>
    %703 = arith.subf %695, %702 : vector<16x6xf32>
    %c0_275 = arith.constant 0 : index
    %c0_276 = arith.constant 0 : index
    %704 = vector.load %arg50[%c0_275, %c0_276] : memref<16x6xf32, #tpu.memory_space<vmem>>, vector<16x6xf32>
    tpu.vector_store %arg50[%c0_275, %c0_276], %703 {strides = array<i32>} : memref<16x6xf32, #tpu.memory_space<vmem>>, vector<16x6xf32>,
    return
  }
}

</mosaic_0001>

<llo_original>
// kernel: tpu_custom_call.1
$region0: #{tpu_custom_call.1}
  #allocation0 [shape = 'u32[]', space=smem, size = 0x4, offset = 0x4, fixed_abs, tag = 'smem constant byte address 0x4 - core index']
  #allocation1 [shape = 'u32[72,128]{1,0:T(1,128)}', space=vmem, size = 0x9000, scoped, tag = 'internal scratch']
  %s0 = inlined_call_operand.smem [shape: u32[51], index: -1, kind: input, shape index: {}]
  %s1 = sld [smem:[%s0]]
  %s2 = scalar_lea.smem %s0, 1
  %s3 = sld [smem:[%s2]]
  %s4 = scalar_lea.smem %s0, 2
  %s5 = sld [smem:[%s4]]
  %s6 = scalar_lea.smem %s0, 3
  %s7 = sld [smem:[%s6]]
  %s8 = scalar_lea.smem %s0, 4
  %s9 = sld [smem:[%s8]]
  %s10 = scalar_lea.smem %s0, 5
  %s11 = sld [smem:[%s10]]
  %s12 = scalar_lea.smem %s0, 6
  %s13 = sld [smem:[%s12]]
  %s14 = scalar_lea.smem %s0, 7
  %s15 = sld [smem:[%s14]]
  %s16 = scalar_lea.smem %s0, 8
  %s17 = sld [smem:[%s16]]
  %s18 = scalar_lea.smem %s0, 9
  %s19 = sld [smem:[%s18]]
  %s20 = scalar_lea.smem %s0, 10
  %s21 = sld [smem:[%s20]]
  %s22 = scalar_lea.smem %s0, 11
  %s23 = sld [smem:[%s22]]
  %s24 = scalar_lea.smem %s0, 12
  %s25 = sld [smem:[%s24]]
  %s26 = scalar_lea.smem %s0, 13
  %s27 = sld [smem:[%s26]]
  %s28 = scalar_lea.smem %s0, 14
  %s29 = sld [smem:[%s28]]
  %s30 = scalar_lea.smem %s0, 15
  %s31 = sld [smem:[%s30]]
  %s32 = scalar_lea.smem %s0, 16
  %s33 = sld [smem:[%s32]]
  %s34 = scalar_lea.smem %s0, 17
  %s35 = sld [smem:[%s34]]
  %s36 = scalar_lea.smem %s0, 18
  %s37 = sld [smem:[%s36]]
  %s38 = scalar_lea.smem %s0, 19
  %s39 = sld [smem:[%s38]]
  %s40 = scalar_lea.smem %s0, 20
  %s41 = sld [smem:[%s40]]
  %s42 = scalar_lea.smem %s0, 21
  %s43 = sld [smem:[%s42]]
  %s44 = scalar_lea.smem %s0, 22
  %s45 = sld [smem:[%s44]]
  %s46 = scalar_lea.smem %s0, 23
  %s47 = sld [smem:[%s46]]
  %s48 = scalar_lea.smem %s0, 24
  %s49 = sld [smem:[%s48]]
  %s50 = scalar_lea.smem %s0, 25
  %s51 = sld [smem:[%s50]]
  %s52 = scalar_lea.smem %s0, 26
  %s53 = sld [smem:[%s52]]
  %s54 = scalar_lea.smem %s0, 27
  %s55 = sld [smem:[%s54]]
  %s56 = scalar_lea.smem %s0, 28
  %s57 = sld [smem:[%s56]]
  %s58 = scalar_lea.smem %s0, 29
  %s59 = sld [smem:[%s58]]
  %s60 = scalar_lea.smem %s0, 30
  %s61 = sld [smem:[%s60]]
  %s62 = scalar_lea.smem %s0, 31
  %s63 = sld [smem:[%s62]]
  %s64 = scalar_lea.smem %s0, 32
  %s65 = sld [smem:[%s64]]
  %s66 = scalar_lea.smem %s0, 33
  %s67 = sld [smem:[%s66]]
  %s68 = scalar_lea.smem %s0, 34
  %s69 = sld [smem:[%s68]]
  %s70 = scalar_lea.smem %s0, 35
  %s71 = sld [smem:[%s70]]
  %s72 = scalar_lea.smem %s0, 36
  %s73 = sld [smem:[%s72]]
  %s74 = scalar_lea.smem %s0, 37
  %s75 = sld [smem:[%s74]]
  %s76 = scalar_lea.smem %s0, 38
  %s77 = sld [smem:[%s76]]
  %s78 = scalar_lea.smem %s0, 39
  %s79 = sld [smem:[%s78]]
  %s80 = scalar_lea.smem %s0, 40
  %s81 = sld [smem:[%s80]]
  %s82 = scalar_lea.smem %s0, 41
  %s83 = sld [smem:[%s82]]
  %s84 = scalar_lea.smem %s0, 42
  %s85 = sld [smem:[%s84]]
  %s86 = scalar_lea.smem %s0, 43
  %s87 = sld [smem:[%s86]]
  %s88 = scalar_lea.smem %s0, 44
  %s89 = sld [smem:[%s88]]
  %s90 = scalar_lea.smem %s0, 45
  %s91 = sld [smem:[%s90]]
  %s92 = scalar_lea.smem %s0, 46
  %s93 = sld [smem:[%s92]]
  %s94 = scalar_lea.smem %s0, 47
  %s95 = sld [smem:[%s94]]
  %s96 = scalar_lea.smem %s0, 48
  %s97 = sld [smem:[%s96]]
  %s98 = scalar_lea.smem %s0, 49
  %s99 = sld [smem:[%s98]]
  %s100 = scalar_lea.smem %s0, 50
  %s101 = sld [smem:[%s100]]
  %102 = xla_tuple %s97, %s99, %s101
  %s103 = sld [smem:[#allocation0]]
  $region218: #{tpu_custom_call.1} parent=0
    _
  %s105 = ssub.s32 1, %s103
  %s106 = scalar_select 0, %s105, %s103
  // Predicated region
  $region2: #{tpu_custom_call.1} parent=0 // pred_check
    _
  $region3: #{tpu_custom_call.1} parent=0 // pred_check_branch
    %108 = sbr.rel (0) target = $region5
  $region4: #{tpu_custom_call.1} parent=0 // pred_region
    _
  $region5: #{tpu_custom_call.1} parent=0 // pred_fallthru
    _
  // Predicated region
  $region6: #{tpu_custom_call.1} parent=0 // pred_check
    _
  $region7: #{tpu_custom_call.1} parent=0 // pred_check_branch
    %110 = sbr.rel (0) target = $region9
  $region8: #{tpu_custom_call.1} parent=0 // pred_region
    _
  $region9: #{tpu_custom_call.1} parent=0 // pred_fallthru
    _
  // Predicated region
  $region10: #{tpu_custom_call.1} parent=0 // pred_check
    _
  $region11: #{tpu_custom_call.1} parent=0 // pred_check_branch
    %112 = sbr.rel (0) target = $region13
  $region12: #{tpu_custom_call.1} parent=0 // pred_region
    _
  $region13: #{tpu_custom_call.1} parent=0 // pred_fallthru
    _
  // Predicated region
  $region14: #{tpu_custom_call.1} parent=0 // pred_check
    _
  $region15: #{tpu_custom_call.1} parent=0 // pred_check_branch
    %114 = sbr.rel (0) target = $region17
  $region16: #{tpu_custom_call.1} parent=0 // pred_region
    _
  $region17: #{tpu_custom_call.1} parent=0 // pred_fallthru
    _
  // Predicated region
  $region18: #{tpu_custom_call.1} parent=0 // pred_check
    _
  $region19: #{tpu_custom_call.1} parent=0 // pred_check_branch
    %116 = sbr.rel (0) target = $region21
  $region20: #{tpu_custom_call.1} parent=0 // pred_region
    _
  $region21: #{tpu_custom_call.1} parent=0 // pred_fallthru
    _
  // Predicated region
  $region22: #{tpu_custom_call.1} parent=0 // pred_check
    _
  $region23: #{tpu_custom_call.1} parent=0 // pred_check_branch
    %118 = sbr.rel (0) target = $region25
  $region24: #{tpu_custom_call.1} parent=0 // pred_region
    _
  $region25: #{tpu_custom_call.1} parent=0 // pred_fallthru
    _
  // Predicated region
  $region26: #{tpu_custom_call.1} parent=0 // pred_check
    _
  $region27: #{tpu_custom_call.1} parent=0 // pred_check_branch
    %120 = sbr.rel (0) target = $region29
  $region28: #{tpu_custom_call.1} parent=0 // pred_region
    _
  $region29: #{tpu_custom_call.1} parent=0 // pred_fallthru
    _
  // Predicated region
  $region30: #{tpu_custom_call.1} parent=0 // pred_check
    _
  $region31: #{tpu_custom_call.1} parent=0 // pred_check_branch
    %122 = sbr.rel (0) target = $region33
  $region32: #{tpu_custom_call.1} parent=0 // pred_region
    _
  $region33: #{tpu_custom_call.1} parent=0 // pred_fallthru
    _
  // Predicated region
  $region34: #{tpu_custom_call.1} parent=0 // pred_check
    _
  $region35: #{tpu_custom_call.1} parent=0 // pred_check_branch
    %124 = sbr.rel (0) target = $region37
  $region36: #{tpu_custom_call.1} parent=0 // pred_region
    _
  $region37: #{tpu_custom_call.1} parent=0 // pred_fallthru
    _
  // Predicated region
  $region38: #{tpu_custom_call.1} parent=0 // pred_check
    _
  $region39: #{tpu_custom_call.1} parent=0 // pred_check_branch
    %126 = sbr.rel (0) target = $region41
  $region40: #{tpu_custom_call.1} parent=0 // pred_region
    _
  $region41: #{tpu_custom_call.1} parent=0 // pred_fallthru
    _
  // Predicated region
  $region42: #{tpu_custom_call.1} parent=0 // pred_check
    _
  $region43: #{tpu_custom_call.1} parent=0 // pred_check_branch
    %128 = sbr.rel (0) target = $region45
  $region44: #{tpu_custom_call.1} parent=0 // pred_region
    _
  $region45: #{tpu_custom_call.1} parent=0 // pred_fallthru
    _
  // Predicated region
  $region46: #{tpu_custom_call.1} parent=0 // pred_check
    _
  $region47: #{tpu_custom_call.1} parent=0 // pred_check_branch
    %130 = sbr.rel (0) target = $region49
  $region48: #{tpu_custom_call.1} parent=0 // pred_region
    _
  $region49: #{tpu_custom_call.1} parent=0 // pred_fallthru
    _
  // Predicated region
  $region50: #{tpu_custom_call.1} parent=0 // pred_check
    _
  $region51: #{tpu_custom_call.1} parent=0 // pred_check_branch
    %132 = sbr.rel (0) target = $region53
  $region52: #{tpu_custom_call.1} parent=0 // pred_region
    _
  $region53: #{tpu_custom_call.1} parent=0 // pred_fallthru
    _
  // Predicated region
  $region54: #{tpu_custom_call.1} parent=0 // pred_check
    _
  $region55: #{tpu_custom_call.1} parent=0 // pred_check_branch
    %134 = sbr.rel (0) target = $region57
  $region56: #{tpu_custom_call.1} parent=0 // pred_region
    _
  $region57: #{tpu_custom_call.1} parent=0 // pred_fallthru
    _
  // Predicated region
  $region58: #{tpu_custom_call.1} parent=0 // pred_check
    _
  $region59: #{tpu_custom_call.1} parent=0 // pred_check_branch
    %136 = sbr.rel (0) target = $region61
  $region60: #{tpu_custom_call.1} parent=0 // pred_region
    _
  $region61: #{tpu_custom_call.1} parent=0 // pred_fallthru
    _
  // Predicated region
  $region62: #{tpu_custom_call.1} parent=0 // pred_check
    _
  $region63: #{tpu_custom_call.1} parent=0 // pred_check_branch
    %138 = sbr.rel (0) target = $region65
  $region64: #{tpu_custom_call.1} parent=0 // pred_region
    _
  $region65: #{tpu_custom_call.1} parent=0 // pred_fallthru
    _
  // Predicated region
  $region66: #{tpu_custom_call.1} parent=0 // pred_check
    _
  $region67: #{tpu_custom_call.1} parent=0 // pred_check_branch
    %140 = sbr.rel (0) target = $region69
  $region68: #{tpu_custom_call.1} parent=0 // pred_region
    _
  $region69: #{tpu_custom_call.1} parent=0 // pred_fallthru
    _
  // Predicated region
  $region70: #{tpu_custom_call.1} parent=0 // pred_check
    _
  $region71: #{tpu_custom_call.1} parent=0 // pred_check_branch
    %142 = sbr.rel (0) target = $region73
  $region72: #{tpu_custom_call.1} parent=0 // pred_region
    _
  $region73: #{tpu_custom_call.1} parent=0 // pred_fallthru
    _
  // Predicated region
  $region74: #{tpu_custom_call.1} parent=0 // pred_check
    _
  $region75: #{tpu_custom_call.1} parent=0 // pred_check_branch
    %144 = sbr.rel (0) target = $region77
  $region76: #{tpu_custom_call.1} parent=0 // pred_region
    _
  $region77: #{tpu_custom_call.1} parent=0 // pred_fallthru
    _
  // Predicated region
  $region78: #{tpu_custom_call.1} parent=0 // pred_check
    _
  $region79: #{tpu_custom_call.1} parent=0 // pred_check_branch
    %146 = sbr.rel (0) target = $region81
  $region80: #{tpu_custom_call.1} parent=0 // pred_region
    _
  $region81: #{tpu_custom_call.1} parent=0 // pred_fallthru
    _
  // Predicated region
  $region82: #{tpu_custom_call.1} parent=0 // pred_check
    _
  $region83: #{tpu_custom_call.1} parent=0 // pred_check_branch
    %148 = sbr.rel (0) target = $region85
  $region84: #{tpu_custom_call.1} parent=0 // pred_region
    _
  $region85: #{tpu_custom_call.1} parent=0 // pred_fallthru
    _
  // Predicated region
  $region86: #{tpu_custom_call.1} parent=0 // pred_check
    _
  $region87: #{tpu_custom_call.1} parent=0 // pred_check_branch
    %150 = sbr.rel (0) target = $region89
  $region88: #{tpu_custom_call.1} parent=0 // pred_region
    _
  $region89: #{tpu_custom_call.1} parent=0 // pred_fallthru
    _
  // Predicated region
  $region90: #{tpu_custom_call.1} parent=0 // pred_check
    _
  $region91: #{tpu_custom_call.1} parent=0 // pred_check_branch
    %152 = sbr.rel (0) target = $region93
  $region92: #{tpu_custom_call.1} parent=0 // pred_region
    _
  $region93: #{tpu_custom_call.1} parent=0 // pred_fallthru
    _
  // Predicated region
  $region94: #{tpu_custom_call.1} parent=0 // pred_check
    _
  $region95: #{tpu_custom_call.1} parent=0 // pred_check_branch
    %154 = sbr.rel (0) target = $region97
  $region96: #{tpu_custom_call.1} parent=0 // pred_region
    _
  $region97: #{tpu_custom_call.1} parent=0 // pred_fallthru
    _
  // Predicated region
  $region98: #{tpu_custom_call.1} parent=0 // pred_check
    _
  $region99: #{tpu_custom_call.1} parent=0 // pred_check_branch
    %156 = sbr.rel (0) target = $region101
  $region100: #{tpu_custom_call.1} parent=0 // pred_region
    _
  $region101: #{tpu_custom_call.1} parent=0 // pred_fallthru
    _
  // Predicated region
  $region102: #{tpu_custom_call.1} parent=0 // pred_check
    _
  $region103: #{tpu_custom_call.1} parent=0 // pred_check_branch
    %158 = sbr.rel (0) target = $region105
  $region104: #{tpu_custom_call.1} parent=0 // pred_region
    _
  $region105: #{tpu_custom_call.1} parent=0 // pred_fallthru
    _
  // Predicated region
  $region106: #{tpu_custom_call.1} parent=0 // pred_check
    _
  $region107: #{tpu_custom_call.1} parent=0 // pred_check_branch
    %160 = sbr.rel (0) target = $region109
  $region108: #{tpu_custom_call.1} parent=0 // pred_region
    _
  $region109: #{tpu_custom_call.1} parent=0 // pred_fallthru
    _
  // Predicated region
  $region110: #{tpu_custom_call.1} parent=0 // pred_check
    _
  $region111: #{tpu_custom_call.1} parent=0 // pred_check_branch
    %162 = sbr.rel (0) target = $region113
  $region112: #{tpu_custom_call.1} parent=0 // pred_region
    _
  $region113: #{tpu_custom_call.1} parent=0 // pred_fallthru
    _
  // Predicated region
  $region114: #{tpu_custom_call.1} parent=0 // pred_check
    _
  $region115: #{tpu_custom_call.1} parent=0 // pred_check_branch
    %164 = sbr.rel (0) target = $region117
  $region116: #{tpu_custom_call.1} parent=0 // pred_region
    _
  $region117: #{tpu_custom_call.1} parent=0 // pred_fallthru
    _
  // Predicated region
  $region118: #{tpu_custom_call.1} parent=0 // pred_check
    _
  $region119: #{tpu_custom_call.1} parent=0 // pred_check_branch
    %166 = sbr.rel (0) target = $region121
  $region120: #{tpu_custom_call.1} parent=0 // pred_region
    _
  $region121: #{tpu_custom_call.1} parent=0 // pred_fallthru
    _
  // Predicated region
  $region122: #{tpu_custom_call.1} parent=0 // pred_check
    _
  $region123: #{tpu_custom_call.1} parent=0 // pred_check_branch
    %168 = sbr.rel (0) target = $region125
  $region124: #{tpu_custom_call.1} parent=0 // pred_region
    _
  $region125: #{tpu_custom_call.1} parent=0 // pred_fallthru
    _
  // Predicated region
  $region126: #{tpu_custom_call.1} parent=0 // pred_check
    _
  $region127: #{tpu_custom_call.1} parent=0 // pred_check_branch
    %170 = sbr.rel (0) target = $region129
  $region128: #{tpu_custom_call.1} parent=0 // pred_region
    _
  $region129: #{tpu_custom_call.1} parent=0 // pred_fallthru
    _
  // Predicated region
  $region130: #{tpu_custom_call.1} parent=0 // pred_check
    _
  $region131: #{tpu_custom_call.1} parent=0 // pred_check_branch
    %172 = sbr.rel (0) target = $region133
  $region132: #{tpu_custom_call.1} parent=0 // pred_region
    _
  $region133: #{tpu_custom_call.1} parent=0 // pred_fallthru
    _
  // Predicated region
  $region134: #{tpu_custom_call.1} parent=0 // pred_check
    _
  $region135: #{tpu_custom_call.1} parent=0 // pred_check_branch
    %174 = sbr.rel (0) target = $region137
  $region136: #{tpu_custom_call.1} parent=0 // pred_region
    _
  $region137: #{tpu_custom_call.1} parent=0 // pred_fallthru
    _
  // Predicated region
  $region138: #{tpu_custom_call.1} parent=0 // pred_check
    _
  $region139: #{tpu_custom_call.1} parent=0 // pred_check_branch
    %176 = sbr.rel (0) target = $region141
  $region140: #{tpu_custom_call.1} parent=0 // pred_region
    _
  $region141: #{tpu_custom_call.1} parent=0 // pred_fallthru
    _
  // Predicated region
  $region142: #{tpu_custom_call.1} parent=0 // pred_check
    _
  $region143: #{tpu_custom_call.1} parent=0 // pred_check_branch
    %178 = sbr.rel (0) target = $region145
  $region144: #{tpu_custom_call.1} parent=0 // pred_region
    _
  $region145: #{tpu_custom_call.1} parent=0 // pred_fallthru
    _
  // Predicated region
  $region146: #{tpu_custom_call.1} parent=0 // pred_check
    _
  $region147: #{tpu_custom_call.1} parent=0 // pred_check_branch
    %180 = sbr.rel (0) target = $region149
  $region148: #{tpu_custom_call.1} parent=0 // pred_region
    _
  $region149: #{tpu_custom_call.1} parent=0 // pred_fallthru
    _
  // Predicated region
  $region150: #{tpu_custom_call.1} parent=0 // pred_check
    _
  $region151: #{tpu_custom_call.1} parent=0 // pred_check_branch
    %182 = sbr.rel (0) target = $region153
  $region152: #{tpu_custom_call.1} parent=0 // pred_region
    _
  $region153: #{tpu_custom_call.1} parent=0 // pred_fallthru
    _
  // Predicated region
  $region154: #{tpu_custom_call.1} parent=0 // pred_check
    _
  $region155: #{tpu_custom_call.1} parent=0 // pred_check_branch
    %184 = sbr.rel (0) target = $region157
  $region156: #{tpu_custom_call.1} parent=0 // pred_region
    _
  $region157: #{tpu_custom_call.1} parent=0 // pred_fallthru
    _
  // Predicated region
  $region158: #{tpu_custom_call.1} parent=0 // pred_check
    _
  $region159: #{tpu_custom_call.1} parent=0 // pred_check_branch
    %186 = sbr.rel (0) target = $region161
  $region160: #{tpu_custom_call.1} parent=0 // pred_region
    _
  $region161: #{tpu_custom_call.1} parent=0 // pred_fallthru
    _
  // Predicated region
  $region162: #{tpu_custom_call.1} parent=0 // pred_check
    _
  $region163: #{tpu_custom_call.1} parent=0 // pred_check_branch
    %188 = sbr.rel (0) target = $region165
  $region164: #{tpu_custom_call.1} parent=0 // pred_region
    _
  $region165: #{tpu_custom_call.1} parent=0 // pred_fallthru
    _
  // Predicated region
  $region166: #{tpu_custom_call.1} parent=0 // pred_check
    _
  $region167: #{tpu_custom_call.1} parent=0 // pred_check_branch
    %190 = sbr.rel (0) target = $region169
  $region168: #{tpu_custom_call.1} parent=0 // pred_region
    _
  $region169: #{tpu_custom_call.1} parent=0 // pred_fallthru
    _
  // Predicated region
  $region170: #{tpu_custom_call.1} parent=0 // pred_check
    _
  $region171: #{tpu_custom_call.1} parent=0 // pred_check_branch
    %192 = sbr.rel (0) target = $region173
  $region172: #{tpu_custom_call.1} parent=0 // pred_region
    _
  $region173: #{tpu_custom_call.1} parent=0 // pred_fallthru
    _
  // Predicated region
  $region174: #{tpu_custom_call.1} parent=0 // pred_check
    _
  $region175: #{tpu_custom_call.1} parent=0 // pred_check_branch
    %194 = sbr.rel (0) target = $region177
  $region176: #{tpu_custom_call.1} parent=0 // pred_region
    _
  $region177: #{tpu_custom_call.1} parent=0 // pred_fallthru
    _
  // Predicated region
  $region178: #{tpu_custom_call.1} parent=0 // pred_check
    _
  $region179: #{tpu_custom_call.1} parent=0 // pred_check_branch
    %196 = sbr.rel (0) target = $region181
  $region180: #{tpu_custom_call.1} parent=0 // pred_region
    _
  $region181: #{tpu_custom_call.1} parent=0 // pred_fallthru
    _
  // Predicated region
  $region182: #{tpu_custom_call.1} parent=0 // pred_check
    _
  $region183: #{tpu_custom_call.1} parent=0 // pred_check_branch
    %198 = sbr.rel (0) target = $region185
  $region184: #{tpu_custom_call.1} parent=0 // pred_region
    _
  $region185: #{tpu_custom_call.1} parent=0 // pred_fallthru
    _
  // Predicated region
  $region186: #{tpu_custom_call.1} parent=0 // pred_check
    _
  $region187: #{tpu_custom_call.1} parent=0 // pred_check_branch
    %200 = sbr.rel (0) target = $region189
  $region188: #{tpu_custom_call.1} parent=0 // pred_region
    _
  $region189: #{tpu_custom_call.1} parent=0 // pred_fallthru
    _
  // Predicated region
  $region190: #{tpu_custom_call.1} parent=0 // pred_check
    _
  $region191: #{tpu_custom_call.1} parent=0 // pred_check_branch
    %202 = sbr.rel (0) target = $region193
  $region192: #{tpu_custom_call.1} parent=0 // pred_region
    _
  $region193: #{tpu_custom_call.1} parent=0 // pred_fallthru
    _
  %v203 = vld [vmem:[%s7] sm:$0xff]
  %v204 = vld [vmem:[%s7 + $0x8] sm:$0xff]
  %v205 = vld [vmem:[%s7 + $0x10] sm:$0xff]
  %v206 = vld [vmem:[%s7 + $0x18] sm:$0xff]
  %v207 = vld [vmem:[%s9] sm:$0xff]
  %v208 = vld [vmem:[%s9 + $0x8] sm:$0xff]
  %v209 = vld [vmem:[%s9 + $0x10] sm:$0xff]
  %v210 = vld [vmem:[%s9 + $0x18] sm:$0xff]
  %v211 = vld [vmem:[%s11] sm:$0xff]
  %v212 = vld [vmem:[%s11 + $0x8] sm:$0xff]
  %v213 = vld [vmem:[%s11 + $0x10] sm:$0xff]
  %v214 = vld [vmem:[%s11 + $0x18] sm:$0xff]
  %v215 = vld [vmem:[%s13] sm:$0xff]
  %v216 = vld [vmem:[%s13 + $0x8] sm:$0xff]
  %v217 = vld [vmem:[%s13 + $0x10] sm:$0xff]
  %v218 = vld [vmem:[%s15] sm:$0xff]
  %v219 = vld [vmem:[%s15 + $0x8] sm:$0xff]
  %v220 = vld [vmem:[%s15 + $0x10] sm:$0xff]
  %v221 = vld [vmem:[%s17] sm:$0xff]
  %v222 = vld [vmem:[%s17 + $0x8] sm:$0xff]
  %v223 = vld [vmem:[%s17 + $0x10] sm:$0xff]
  %v224 = vld [vmem:[%s19] sm:$0xff]
  %v225 = vld [vmem:[%s19 + $0x8] sm:$0xff]
  %v226 = vld [vmem:[%s21] sm:$0xff]
  %v227 = vld [vmem:[%s21 + $0x8] sm:$0xff]
  %v228 = vld [vmem:[%s23] sm:$0xff]
  %v229 = vld [vmem:[%s23 + $0x8] sm:$0xff]
  %v230 = vld [vmem:[%s31] sm:$0x1]
  %v231 = vld [vmem:[%s45] sm:$0xff]
  %v232 = vld [vmem:[%s45 + $0x8] sm:$0xff]
  %v233 = vld [vmem:[%s45 + $0x10] sm:$0xff]
  %v234 = vld [vmem:[%s45 + $0x18] sm:$0xff]
  %v235 = vld [vmem:[%s47] sm:$0x1]
  %v236 = vld [vmem:[%s1] sm:$0xff]
  %v237 = vld [vmem:[%s1 + $0x8] sm:$0xff]
  %v238 = vld [vmem:[%s1 + $0x10] sm:$0xff]
  %v239 = vld [vmem:[%s1 + $0x18] sm:$0xff]
  %v240 = vld [vmem:[%s25] sm:$0xff]
  %v241 = vld [vmem:[%s25 + $0x8] sm:$0xff]
  %v242 = vld [vmem:[%s25 + $0x10] sm:$0xff]
  %v243 = vld [vmem:[%s25 + $0x18] sm:$0xff]
  %v244 = vld [vmem:[%s25 + $0x20] sm:$0xff]
  %vm245 = vcmask 326656
  %v247 = vsel %vm245, %v236, 0
  %v250 = vsel %vm245, %v237, 0
  %v253 = vsel %vm245, %v238, 0
  %v256 = vsel %vm245, %v239, 0
  %258 = vmatpush.msra.mxu0 0.0
  %259 = vmatpush.msra.mxu0 0.0
  %260 = vmatpush.msra.mxu0 0.0
  %261 = vmatpush.msra.mxu0 0.0
  %262 = vmatpush.msra.mxu0 0.0
  %263 = vmatpush.msra.mxu0 0.0
  %264 = vmatpush.msra.mxu0 0.0
  %265 = vmatpush.msra.mxu0 0.0
  %266 = vmatpush.msra.mxu0 0.0
  %267 = vmatpush.msra.mxu0 0.0
  %268 = vmatpush.msra.mxu0 0.0
  %269 = vmatpush.msra.mxu0 %v244
  %270 = vmatpush.msra.mxu0 %v243
  %271 = vmatpush.msra.mxu0 %v242
  %272 = vmatpush.msra.mxu0 %v241
  %273 = vmatpush.msra.mxu0 %v240
  %274 = vmatmul.f32.gmra.mxu0 %v247
  %v275 = vpop.f32.mrf.mxu0
  %v276 = vadd.f32 0.0, %v275
  %277 = vmatmul.f32.gmra.mxu0 %v250
  %v278 = vpop.f32.mrf.mxu0
  %v279 = vadd.f32 0.0, %v278
  %280 = vmatmul.f32.gmra.mxu0 %v253
  %v281 = vpop.f32.mrf.mxu0
  %v282 = vadd.f32 0.0, %v281
  %283 = vmatmul.f32.gmra.mxu0 %v256
  %v284 = vpop.f32.mrf.mxu0
  %v285 = vadd.f32 0.0, %v284
  %286 = vdwg.mxu0
  %v287 = vld [vmem:[%s3] sm:$0xff]
  %v288 = vld [vmem:[%s3 + $0x8] sm:$0xff]
  %v289 = vld [vmem:[%s3 + $0x10] sm:$0xff]
  %v290 = vld [vmem:[%s27] sm:$0xff]
  %v291 = vld [vmem:[%s27 + $0x8] sm:$0xff]
  %v292 = vld [vmem:[%s27 + $0x10] sm:$0xff]
  %vm293 = vcmask 195584
  %v295 = vsel %vm293, %v287, 0
  %v298 = vsel %vm293, %v288, 0
  %v301 = vsel %vm293, %v289, 0
  %303 = vmatpush.msra.mxu0 0.0
  %304 = vmatpush.msra.mxu0 0.0
  %305 = vmatpush.msra.mxu0 0.0
  %306 = vmatpush.msra.mxu0 0.0
  %307 = vmatpush.msra.mxu0 0.0
  %308 = vmatpush.msra.mxu0 0.0
  %309 = vmatpush.msra.mxu0 0.0
  %310 = vmatpush.msra.mxu0 0.0
  %311 = vmatpush.msra.mxu0 0.0
  %312 = vmatpush.msra.mxu0 0.0
  %313 = vmatpush.msra.mxu0 0.0
  %314 = vmatpush.msra.mxu0 0.0
  %315 = vmatpush.msra.mxu0 0.0
  %316 = vmatpush.msra.mxu0 %v292
  %317 = vmatpush.msra.mxu0 %v291
  %318 = vmatpush.msra.mxu0 %v290
  %319 = vmatmul.f32.gmra.mxu0 %v295
  %v320 = vpop.f32.mrf.mxu0
  %v321 = vadd.f32 0.0, %v320
  %322 = vmatmul.f32.gmra.mxu0 %v298
  %v323 = vpop.f32.mrf.mxu0
  %v324 = vadd.f32 0.0, %v323
  %325 = vmatmul.f32.gmra.mxu0 %v301
  %v326 = vpop.f32.mrf.mxu0
  %v327 = vadd.f32 0.0, %v326
  %328 = vdwg.mxu0
  %v329 = vld [vmem:[%s5] sm:$0xff]
  %v330 = vld [vmem:[%s5 + $0x8] sm:$0xff]
  %v331 = vld [vmem:[%s29] sm:$0xff]
  %v332 = vld [vmem:[%s29 + $0x8] sm:$0xff]
  %vm333 = vcmask 130048
  %v335 = vsel %vm333, %v329, 0
  %v338 = vsel %vm333, %v330, 0
  %340 = vmatpush.msra.mxu0 0.0
  %341 = vmatpush.msra.mxu0 0.0
  %342 = vmatpush.msra.mxu0 0.0
  %343 = vmatpush.msra.mxu0 0.0
  %344 = vmatpush.msra.mxu0 0.0
  %345 = vmatpush.msra.mxu0 0.0
  %346 = vmatpush.msra.mxu0 0.0
  %347 = vmatpush.msra.mxu0 0.0
  %348 = vmatpush.msra.mxu0 0.0
  %349 = vmatpush.msra.mxu0 0.0
  %350 = vmatpush.msra.mxu0 0.0
  %351 = vmatpush.msra.mxu0 0.0
  %352 = vmatpush.msra.mxu0 0.0
  %353 = vmatpush.msra.mxu0 0.0
  %354 = vmatpush.msra.mxu0 %v332
  %355 = vmatpush.msra.mxu0 %v331
  %356 = vmatmul.f32.gmra.mxu0 %v335
  %v357 = vpop.f32.mrf.mxu0
  %v358 = vadd.f32 0.0, %v357
  %359 = vmatmul.f32.gmra.mxu0 %v338
  %v360 = vpop.f32.mrf.mxu0
  %v361 = vadd.f32 0.0, %v360
  %362 = vdwg.mxu0
  %v363 = vld [vmem:[%s33] sm:$0xff]
  %v364 = vld [vmem:[%s33 + $0x8] sm:$0xff]
  %v365 = vld [vmem:[%s33 + $0x10] sm:$0xff]
  %v366 = vld [vmem:[%s33 + $0x18] sm:$0xff]
  %v367 = vld [vmem:[%s39] sm:$0x1]
  %vm368 = vcmask 261120
  %v370 = vsel %vm368, %v276, 0
  %v373 = vsel %vm368, %v279, 0
  %v376 = vsel %vm368, %v282, 0
  %v379 = vsel %vm368, %v285, 0
  %381 = vmatpush.msra.mxu0 0.0
  %382 = vmatpush.msra.mxu0 0.0
  %383 = vmatpush.msra.mxu0 0.0
  %384 = vmatpush.msra.mxu0 0.0
  %385 = vmatpush.msra.mxu0 0.0
  %386 = vmatpush.msra.mxu0 0.0
  %387 = vmatpush.msra.mxu0 0.0
  %388 = vmatpush.msra.mxu0 0.0
  %389 = vmatpush.msra.mxu0 0.0
  %390 = vmatpush.msra.mxu0 0.0
  %391 = vmatpush.msra.mxu0 0.0
  %392 = vmatpush.msra.mxu0 0.0
  %393 = vmatpush.msra.mxu0 %v366
  %394 = vmatpush.msra.mxu0 %v365
  %395 = vmatpush.msra.mxu0 %v364
  %396 = vmatpush.msra.mxu0 %v363
  %397 = vmatmul.f32.gmra.mxu0 %v370
  %v398 = vpop.f32.mrf.mxu0
  %v399 = vadd.f32 0.0, %v398
  %400 = vmatmul.f32.gmra.mxu0 %v373
  %v401 = vpop.f32.mrf.mxu0
  %v402 = vadd.f32 0.0, %v401
  %403 = vmatmul.f32.gmra.mxu0 %v376
  %v404 = vpop.f32.mrf.mxu0
  %v405 = vadd.f32 0.0, %v404
  %406 = vmatmul.f32.gmra.mxu0 %v379
  %v407 = vpop.f32.mrf.mxu0
  %v408 = vadd.f32 0.0, %v407
  %409 = vdwg.mxu0
  %v411 = vsel %vm368, %v367, 0
  %413 = vmatpush.xpose.msra.mxu0 0.0
  %414 = vmatpush.xpose.msra.mxu0 0.0
  %415 = vmatpush.xpose.msra.mxu0 0.0
  %416 = vmatpush.xpose.msra.mxu0 0.0
  %417 = vmatpush.xpose.msra.mxu0 0.0
  %418 = vmatpush.xpose.msra.mxu0 0.0
  %419 = vmatpush.xpose.msra.mxu0 0.0
  %420 = vmatpush.xpose.msra.mxu0 0.0
  %421 = vmatpush.xpose.msra.mxu0 0.0
  %422 = vmatpush.xpose.msra.mxu0 0.0
  %423 = vmatpush.xpose.msra.mxu0 0.0
  %424 = vmatpush.xpose.msra.mxu0 0.0
  %425 = vmatpush.xpose.msra.mxu0 %v379
  %426 = vmatpush.xpose.msra.mxu0 %v376
  %427 = vmatpush.xpose.msra.mxu0 %v373
  %428 = vmatpush.xpose.msra.mxu0 %v370
  %429 = vmatmul.f32.gmra.mxu0 %v411
  %v430 = vpop.f32.mrf.mxu0
  %v431 = vadd.f32 0.0, %v430
  %432 = vdwg.mxu0
  %434 = vset.pattern.permute.xlu0 0
  %435 = vperm.xlu0 %434, %v399
  %v436 = vpop.permute.xlu0 %435
  %439 = vset.pattern.permute.xlu0 0
  %440 = vperm.xlu0 %439, %v402
  %v441 = vpop.permute.xlu0 %440
  %444 = vset.pattern.permute.xlu0 0
  %445 = vperm.xlu0 %444, %v405
  %v446 = vpop.permute.xlu0 %445
  %449 = vset.pattern.permute.xlu0 0
  %450 = vperm.xlu0 %449, %v408
  %v451 = vpop.permute.xlu0 %450
  %v453 = vperm.slane %v431, 0
  %v454 = vadd.f32 %v436, %v453
  %v455 = vadd.f32 %v441, %v453
  %v456 = vadd.f32 %v446, %v453
  %v457 = vadd.f32 %v451, %v453
  %vm458 = vcmp.gt.f32.partialorder %v454, 0.0
  %vm459 = vcmp.gt.f32.partialorder %v455, 0.0
  %vm460 = vcmp.gt.f32.partialorder %v456, 0.0
  %vm461 = vcmp.gt.f32.partialorder %v457, 0.0
  %v462 = vmul.f32 %v454, 0.2
  %v463 = vmul.f32 %v455, 0.2
  %v464 = vmul.f32 %v456, 0.2
  %v465 = vmul.f32 %v457, 0.2
  %v466 = vsel %vm458, %v454, %v462
  %v467 = vsel %vm459, %v455, %v463
  %v468 = vsel %vm460, %v456, %v464
  %v469 = vsel %vm461, %v457, %v465
  %vm470 = vcmp.gt.f32.partialorder %v203, 0.0
  %vm471 = vcmp.gt.f32.partialorder %v204, 0.0
  %vm472 = vcmp.gt.f32.partialorder %v205, 0.0
  %vm473 = vcmp.gt.f32.partialorder %v206, 0.0
  %v474 = vsel %vm470, %v466, -9e+15
  %v475 = vsel %vm471, %v467, -9e+15
  %v476 = vsel %vm472, %v468, -9e+15
  %v477 = vsel %vm473, %v469, -9e+15
  %v478 = vsel %vm368, %v474, -inf
  %479 = vmax.xlane.f32.xlu0 %v478
  %v480 = vpop.xlane.xlu0 %479
  %v481 = vsel %vm368, %v475, -inf
  %482 = vmax.xlane.f32.xlu0 %v481
  %v483 = vpop.xlane.xlu0 %482
  %v484 = vsel %vm368, %v476, -inf
  %485 = vmax.xlane.f32.xlu0 %v484
  %v486 = vpop.xlane.xlu0 %485
  %v487 = vsel %vm368, %v477, -inf
  %488 = vmax.xlane.f32.xlu0 %v487
  %v489 = vpop.xlane.xlu0 %488
  %v490 = vsub.f32 %v474, %v480
  %v491 = vsub.f32 %v475, %v483
  %v492 = vsub.f32 %v476, %v486
  %v493 = vsub.f32 %v477, %v489
  %v494 = vmul.f32 %v490, 1.442695
  %v495 = vpow.pop %v494
  %v496 = vmul.f32 %v491, 1.442695
  %v497 = vpow.pop %v496
  %v498 = vmul.f32 %v492, 1.442695
  %v499 = vpow.pop %v498
  %v500 = vmul.f32 %v493, 1.442695
  %v501 = vpow.pop %v500
  %v502 = vsel %vm368, %v495, 0.0
  %503 = vadd.xlane.f32.xlu0 %v502
  %v504 = vpop.xlane.xlu0 %503
  %v505 = vsel %vm368, %v497, 0.0
  %506 = vadd.xlane.f32.xlu0 %v505
  %v507 = vpop.xlane.xlu0 %506
  %v508 = vsel %vm368, %v499, 0.0
  %509 = vadd.xlane.f32.xlu0 %v508
  %v510 = vpop.xlane.xlu0 %509
  %v511 = vsel %vm368, %v501, 0.0
  %512 = vadd.xlane.f32.xlu0 %v511
  %v513 = vpop.xlane.xlu0 %512
  %v514 = vrcp.pop %v504
  %v515 = vmul.f32 %v504, %v514
  %v516 = vsub.f32 1.0, %v515
  %v517 = vmul.f32 %v514, %v516
  %v518 = vadd.f32 %v514, %v517
  %vm519 = vweird.f32 %v504
  %vm520 = vweird.f32 %v514
  %vm521 = vmor %vm519, %vm520
  %v522 = vsel %vm521, %v514, %v518
  %v523 = vand.u32 2147483647, %v504
  %vm524 = vcmp.eq.f32.partialorder %v523, 8.507059e+37
  %v525 = vand.u32 %v504, 2147483648
  %v526 = vor.u32 1.1754944e-38, %v525
  %v527 = vsel %vm524, %v526, %v522
  %v528 = vmul.f32 %v495, %v527
  %v529 = vrcp.pop %v507
  %v530 = vmul.f32 %v507, %v529
  %v531 = vsub.f32 1.0, %v530
  %v532 = vmul.f32 %v529, %v531
  %v533 = vadd.f32 %v529, %v532
  %vm534 = vweird.f32 %v507
  %vm535 = vweird.f32 %v529
  %vm536 = vmor %vm534, %vm535
  %v537 = vsel %vm536, %v529, %v533
  %v538 = vand.u32 2147483647, %v507
  %vm539 = vcmp.eq.f32.partialorder %v538, 8.507059e+37
  %v540 = vand.u32 %v507, 2147483648
  %v541 = vor.u32 1.1754944e-38, %v540
  %v542 = vsel %vm539, %v541, %v537
  %v543 = vmul.f32 %v497, %v542
  %v544 = vrcp.pop %v510
  %v545 = vmul.f32 %v510, %v544
  %v546 = vsub.f32 1.0, %v545
  %v547 = vmul.f32 %v544, %v546
  %v548 = vadd.f32 %v544, %v547
  %vm549 = vweird.f32 %v510
  %vm550 = vweird.f32 %v544
  %vm551 = vmor %vm549, %vm550
  %v552 = vsel %vm551, %v544, %v548
  %v553 = vand.u32 2147483647, %v510
  %vm554 = vcmp.eq.f32.partialorder %v553, 8.507059e+37
  %v555 = vand.u32 %v510, 2147483648
  %v556 = vor.u32 1.1754944e-38, %v555
  %v557 = vsel %vm554, %v556, %v552
  %v558 = vmul.f32 %v499, %v557
  %v559 = vrcp.pop %v513
  %v560 = vmul.f32 %v513, %v559
  %v561 = vsub.f32 1.0, %v560
  %v562 = vmul.f32 %v559, %v561
  %v563 = vadd.f32 %v559, %v562
  %vm564 = vweird.f32 %v513
  %vm565 = vweird.f32 %v559
  %vm566 = vmor %vm564, %vm565
  %v567 = vsel %vm566, %v559, %v563
  %v568 = vand.u32 2147483647, %v513
  %vm569 = vcmp.eq.f32.partialorder %v568, 8.507059e+37
  %v570 = vand.u32 %v513, 2147483648
  %v571 = vor.u32 1.1754944e-38, %v570
  %v572 = vsel %vm569, %v571, %v567
  %v573 = vmul.f32 %v501, %v572
  %v574 = vmul.f32 %v528, 0.1
  %v575 = vmul.f32 %v543, 0.1
  %v576 = vmul.f32 %v558, 0.1
  %v577 = vmul.f32 %v573, 0.1
  %v578 = vmul.f32 %v203, 0.9
  %v579 = vmul.f32 %v204, 0.9
  %v580 = vmul.f32 %v205, 0.9
  %v581 = vmul.f32 %v206, 0.9
  %v582 = vadd.f32 %v574, %v578
  %v583 = vadd.f32 %v575, %v579
  %v584 = vadd.f32 %v576, %v580
  %v585 = vadd.f32 %v577, %v581
  %v587 = vperm.slane %v230, 0
  %v590 = vsel %vm368, %v582, 0
  %v593 = vsel %vm368, %v583, 0
  %v596 = vsel %vm368, %v584, 0
  %v599 = vsel %vm368, %v585, 0
  %601 = vmatpush.msra.mxu0 0.0
  %602 = vmatpush.msra.mxu0 0.0
  %603 = vmatpush.msra.mxu0 0.0
  %604 = vmatpush.msra.mxu0 0.0
  %605 = vmatpush.msra.mxu0 0.0
  %606 = vmatpush.msra.mxu0 0.0
  %607 = vmatpush.msra.mxu0 0.0
  %608 = vmatpush.msra.mxu0 0.0
  %609 = vmatpush.msra.mxu0 0.0
  %610 = vmatpush.msra.mxu0 0.0
  %611 = vmatpush.msra.mxu0 0.0
  %612 = vmatpush.msra.mxu0 0.0
  %613 = vmatpush.msra.mxu0 %v285
  %614 = vmatpush.msra.mxu0 %v282
  %615 = vmatpush.msra.mxu0 %v279
  %616 = vmatpush.msra.mxu0 %v276
  %617 = vmatmul.f32.gmra.mxu0 %v590
  %v618 = vpop.f32.mrf.mxu0
  %v619 = vadd.f32 %v587, %v618
  %620 = vmatmul.f32.gmra.mxu0 %v593
  %v621 = vpop.f32.mrf.mxu0
  %v622 = vadd.f32 %v587, %v621
  %623 = vmatmul.f32.gmra.mxu0 %v596
  %v624 = vpop.f32.mrf.mxu0
  %v625 = vadd.f32 %v587, %v624
  %626 = vmatmul.f32.gmra.mxu0 %v599
  %v627 = vpop.f32.mrf.mxu0
  %v628 = vadd.f32 %v587, %v627
  %629 = vdwg.mxu0
  %v631 = vsel %vm368, %v321, 0
  %v634 = vsel %vm368, %v324, 0
  %v637 = vsel %vm368, %v327, 0
  %639 = vmatpush.xpose.msra.mxu0 0.0
  %640 = vmatpush.xpose.msra.mxu0 0.0
  %641 = vmatpush.xpose.msra.mxu0 0.0
  %642 = vmatpush.xpose.msra.mxu0 0.0
  %643 = vmatpush.xpose.msra.mxu0 0.0
  %644 = vmatpush.xpose.msra.mxu0 0.0
  %645 = vmatpush.xpose.msra.mxu0 0.0
  %646 = vmatpush.xpose.msra.mxu0 0.0
  %647 = vmatpush.xpose.msra.mxu0 0.0
  %648 = vmatpush.xpose.msra.mxu0 0.0
  %649 = vmatpush.xpose.msra.mxu0 0.0
  %650 = vmatpush.xpose.msra.mxu0 0.0
  %651 = vmatpush.xpose.msra.mxu0 0.0
  %652 = vmatpush.xpose.msra.mxu0 %v637
  %653 = vmatpush.xpose.msra.mxu0 %v634
  %654 = vmatpush.xpose.msra.mxu0 %v631
  %655 = vmatmul.f32.gmra.mxu0 %v411
  %v656 = vpop.f32.mrf.mxu0
  %v657 = vadd.f32 0.0, %v656
  %658 = vdwg.mxu0
  %v659 = vperm.slane %v657, 0
  %v660 = vadd.f32 %v436, %v659
  %v661 = vadd.f32 %v441, %v659
  %v662 = vadd.f32 %v446, %v659
  %v663 = vadd.f32 %v451, %v659
  %vm664 = vcmp.gt.f32.partialorder %v660, 0.0
  %vm665 = vcmp.gt.f32.partialorder %v661, 0.0
  %vm666 = vcmp.gt.f32.partialorder %v662, 0.0
  %vm667 = vcmp.gt.f32.partialorder %v663, 0.0
  %v668 = vmul.f32 %v660, 0.2
  %v669 = vmul.f32 %v661, 0.2
  %v670 = vmul.f32 %v662, 0.2
  %v671 = vmul.f32 %v663, 0.2
  %v672 = vsel %vm664, %v660, %v668
  %v673 = vsel %vm665, %v661, %v669
  %v674 = vsel %vm666, %v662, %v670
  %v675 = vsel %vm667, %v663, %v671
  %vm676 = vcmp.gt.f32.partialorder %v207, 0.0
  %vm677 = vcmp.gt.f32.partialorder %v208, 0.0
  %vm678 = vcmp.gt.f32.partialorder %v209, 0.0
  %vm679 = vcmp.gt.f32.partialorder %v210, 0.0
  %v680 = vsel %vm676, %v672, -9e+15
  %v681 = vsel %vm677, %v673, -9e+15
  %v682 = vsel %vm678, %v674, -9e+15
  %v683 = vsel %vm679, %v675, -9e+15
  %v684 = vsel %vm293, %v680, -inf
  %685 = vmax.xlane.f32.xlu0 %v684
  %v686 = vpop.xlane.xlu0 %685
  %v687 = vsel %vm293, %v681, -inf
  %688 = vmax.xlane.f32.xlu0 %v687
  %v689 = vpop.xlane.xlu0 %688
  %v690 = vsel %vm293, %v682, -inf
  %691 = vmax.xlane.f32.xlu0 %v690
  %v692 = vpop.xlane.xlu0 %691
  %v693 = vsel %vm293, %v683, -inf
  %694 = vmax.xlane.f32.xlu0 %v693
  %v695 = vpop.xlane.xlu0 %694
  %v696 = vsub.f32 %v680, %v686
  %v697 = vsub.f32 %v681, %v689
  %v698 = vsub.f32 %v682, %v692
  %v699 = vsub.f32 %v683, %v695
  %v700 = vmul.f32 %v696, 1.442695
  %v701 = vpow.pop %v700
  %v702 = vmul.f32 %v697, 1.442695
  %v703 = vpow.pop %v702
  %v704 = vmul.f32 %v698, 1.442695
  %v705 = vpow.pop %v704
  %v706 = vmul.f32 %v699, 1.442695
  %v707 = vpow.pop %v706
  %v708 = vsel %vm293, %v701, 0.0
  %709 = vadd.xlane.f32.xlu0 %v708
  %v710 = vpop.xlane.xlu0 %709
  %v711 = vsel %vm293, %v703, 0.0
  %712 = vadd.xlane.f32.xlu0 %v711
  %v713 = vpop.xlane.xlu0 %712
  %v714 = vsel %vm293, %v705, 0.0
  %715 = vadd.xlane.f32.xlu0 %v714
  %v716 = vpop.xlane.xlu0 %715
  %v717 = vsel %vm293, %v707, 0.0
  %718 = vadd.xlane.f32.xlu0 %v717
  %v719 = vpop.xlane.xlu0 %718
  %v720 = vrcp.pop %v710
  %v721 = vmul.f32 %v710, %v720
  %v722 = vsub.f32 1.0, %v721
  %v723 = vmul.f32 %v720, %v722
  %v724 = vadd.f32 %v720, %v723
  %vm725 = vweird.f32 %v710
  %vm726 = vweird.f32 %v720
  %vm727 = vmor %vm725, %vm726
  %v728 = vsel %vm727, %v720, %v724
  %v729 = vand.u32 2147483647, %v710
  %vm730 = vcmp.eq.f32.partialorder %v729, 8.507059e+37
  %v731 = vand.u32 %v710, 2147483648
  %v732 = vor.u32 1.1754944e-38, %v731
  %v733 = vsel %vm730, %v732, %v728
  %v734 = vmul.f32 %v701, %v733
  %v735 = vrcp.pop %v713
  %v736 = vmul.f32 %v713, %v735
  %v737 = vsub.f32 1.0, %v736
  %v738 = vmul.f32 %v735, %v737
  %v739 = vadd.f32 %v735, %v738
  %vm740 = vweird.f32 %v713
  %vm741 = vweird.f32 %v735
  %vm742 = vmor %vm740, %vm741
  %v743 = vsel %vm742, %v735, %v739
  %v744 = vand.u32 2147483647, %v713
  %vm745 = vcmp.eq.f32.partialorder %v744, 8.507059e+37
  %v746 = vand.u32 %v713, 2147483648
  %v747 = vor.u32 1.1754944e-38, %v746
  %v748 = vsel %vm745, %v747, %v743
  %v749 = vmul.f32 %v703, %v748
  %v750 = vrcp.pop %v716
  %v751 = vmul.f32 %v716, %v750
  %v752 = vsub.f32 1.0, %v751
  %v753 = vmul.f32 %v750, %v752
  %v754 = vadd.f32 %v750, %v753
  %vm755 = vweird.f32 %v716
  %vm756 = vweird.f32 %v750
  %vm757 = vmor %vm755, %vm756
  %v758 = vsel %vm757, %v750, %v754
  %v759 = vand.u32 2147483647, %v716
  %vm760 = vcmp.eq.f32.partialorder %v759, 8.507059e+37
  %v761 = vand.u32 %v716, 2147483648
  %v762 = vor.u32 1.1754944e-38, %v761
  %v763 = vsel %vm760, %v762, %v758
  %v764 = vmul.f32 %v705, %v763
  %v765 = vrcp.pop %v719
  %v766 = vmul.f32 %v719, %v765
  %v767 = vsub.f32 1.0, %v766
  %v768 = vmul.f32 %v765, %v767
  %v769 = vadd.f32 %v765, %v768
  %vm770 = vweird.f32 %v719
  %vm771 = vweird.f32 %v765
  %vm772 = vmor %vm770, %vm771
  %v773 = vsel %vm772, %v765, %v769
  %v774 = vand.u32 2147483647, %v719
  %vm775 = vcmp.eq.f32.partialorder %v774, 8.507059e+37
  %v776 = vand.u32 %v719, 2147483648
  %v777 = vor.u32 1.1754944e-38, %v776
  %v778 = vsel %vm775, %v777, %v773
  %v779 = vmul.f32 %v707, %v778
  %v780 = vmul.f32 %v734, 0.1
  %v781 = vmul.f32 %v749, 0.1
  %v782 = vmul.f32 %v764, 0.1
  %v783 = vmul.f32 %v779, 0.1
  %v784 = vmul.f32 %v207, 0.9
  %v785 = vmul.f32 %v208, 0.9
  %v786 = vmul.f32 %v209, 0.9
  %v787 = vmul.f32 %v210, 0.9
  %v788 = vadd.f32 %v780, %v784
  %v789 = vadd.f32 %v781, %v785
  %v790 = vadd.f32 %v782, %v786
  %v791 = vadd.f32 %v783, %v787
  %v793 = vsel %vm293, %v788, 0
  %v796 = vsel %vm293, %v789, 0
  %v799 = vsel %vm293, %v790, 0
  %v802 = vsel %vm293, %v791, 0
  %804 = vmatpush.msra.mxu0 0.0
  %805 = vmatpush.msra.mxu0 0.0
  %806 = vmatpush.msra.mxu0 0.0
  %807 = vmatpush.msra.mxu0 0.0
  %808 = vmatpush.msra.mxu0 0.0
  %809 = vmatpush.msra.mxu0 0.0
  %810 = vmatpush.msra.mxu0 0.0
  %811 = vmatpush.msra.mxu0 0.0
  %812 = vmatpush.msra.mxu0 0.0
  %813 = vmatpush.msra.mxu0 0.0
  %814 = vmatpush.msra.mxu0 0.0
  %815 = vmatpush.msra.mxu0 0.0
  %816 = vmatpush.msra.mxu0 0.0
  %817 = vmatpush.msra.mxu0 %v327
  %818 = vmatpush.msra.mxu0 %v324
  %819 = vmatpush.msra.mxu0 %v321
  %820 = vmatmul.f32.gmra.mxu0 %v793
  %v821 = vpop.f32.mrf.mxu0
  %v822 = vadd.f32 %v587, %v821
  %823 = vmatmul.f32.gmra.mxu0 %v796
  %v824 = vpop.f32.mrf.mxu0
  %v825 = vadd.f32 %v587, %v824
  %826 = vmatmul.f32.gmra.mxu0 %v799
  %v827 = vpop.f32.mrf.mxu0
  %v828 = vadd.f32 %v587, %v827
  %829 = vmatmul.f32.gmra.mxu0 %v802
  %v830 = vpop.f32.mrf.mxu0
  %v831 = vadd.f32 %v587, %v830
  %832 = vdwg.mxu0
  %v834 = vsel %vm368, %v358, 0
  %v837 = vsel %vm368, %v361, 0
  %839 = vmatpush.xpose.msra.mxu0 0.0
  %840 = vmatpush.xpose.msra.mxu0 0.0
  %841 = vmatpush.xpose.msra.mxu0 0.0
  %842 = vmatpush.xpose.msra.mxu0 0.0
  %843 = vmatpush.xpose.msra.mxu0 0.0
  %844 = vmatpush.xpose.msra.mxu0 0.0
  %845 = vmatpush.xpose.msra.mxu0 0.0
  %846 = vmatpush.xpose.msra.mxu0 0.0
  %847 = vmatpush.xpose.msra.mxu0 0.0
  %848 = vmatpush.xpose.msra.mxu0 0.0
  %849 = vmatpush.xpose.msra.mxu0 0.0
  %850 = vmatpush.xpose.msra.mxu0 0.0
  %851 = vmatpush.xpose.msra.mxu0 0.0
  %852 = vmatpush.xpose.msra.mxu0 0.0
  %853 = vmatpush.xpose.msra.mxu0 %v837
  %854 = vmatpush.xpose.msra.mxu0 %v834
  %855 = vmatmul.f32.gmra.mxu0 %v411
  %v856 = vpop.f32.mrf.mxu0
  %v857 = vadd.f32 0.0, %v856
  %858 = vdwg.mxu0
  %v859 = vperm.slane %v857, 0
  %v860 = vadd.f32 %v436, %v859
  %v861 = vadd.f32 %v441, %v859
  %v862 = vadd.f32 %v446, %v859
  %v863 = vadd.f32 %v451, %v859
  %vm864 = vcmp.gt.f32.partialorder %v860, 0.0
  %vm865 = vcmp.gt.f32.partialorder %v861, 0.0
  %vm866 = vcmp.gt.f32.partialorder %v862, 0.0
  %vm867 = vcmp.gt.f32.partialorder %v863, 0.0
  %v868 = vmul.f32 %v860, 0.2
  %v869 = vmul.f32 %v861, 0.2
  %v870 = vmul.f32 %v862, 0.2
  %v871 = vmul.f32 %v863, 0.2
  %v872 = vsel %vm864, %v860, %v868
  %v873 = vsel %vm865, %v861, %v869
  %v874 = vsel %vm866, %v862, %v870
  %v875 = vsel %vm867, %v863, %v871
  %vm876 = vcmp.gt.f32.partialorder %v211, 0.0
  %vm877 = vcmp.gt.f32.partialorder %v212, 0.0
  %vm878 = vcmp.gt.f32.partialorder %v213, 0.0
  %vm879 = vcmp.gt.f32.partialorder %v214, 0.0
  %v880 = vsel %vm876, %v872, -9e+15
  %v881 = vsel %vm877, %v873, -9e+15
  %v882 = vsel %vm878, %v874, -9e+15
  %v883 = vsel %vm879, %v875, -9e+15
  %v884 = vsel %vm333, %v880, -inf
  %885 = vmax.xlane.f32.xlu0 %v884
  %v886 = vpop.xlane.xlu0 %885
  %v887 = vsel %vm333, %v881, -inf
  %888 = vmax.xlane.f32.xlu0 %v887
  %v889 = vpop.xlane.xlu0 %888
  %v890 = vsel %vm333, %v882, -inf
  %891 = vmax.xlane.f32.xlu0 %v890
  %v892 = vpop.xlane.xlu0 %891
  %v893 = vsel %vm333, %v883, -inf
  %894 = vmax.xlane.f32.xlu0 %v893
  %v895 = vpop.xlane.xlu0 %894
  %v896 = vsub.f32 %v880, %v886
  %v897 = vsub.f32 %v881, %v889
  %v898 = vsub.f32 %v882, %v892
  %v899 = vsub.f32 %v883, %v895
  %v900 = vmul.f32 %v896, 1.442695
  %v901 = vpow.pop %v900
  %v902 = vmul.f32 %v897, 1.442695
  %v903 = vpow.pop %v902
  %v904 = vmul.f32 %v898, 1.442695
  %v905 = vpow.pop %v904
  %v906 = vmul.f32 %v899, 1.442695
  %v907 = vpow.pop %v906
  %v908 = vsel %vm333, %v901, 0.0
  %909 = vadd.xlane.f32.xlu0 %v908
  %v910 = vpop.xlane.xlu0 %909
  %v911 = vsel %vm333, %v903, 0.0
  %912 = vadd.xlane.f32.xlu0 %v911
  %v913 = vpop.xlane.xlu0 %912
  %v914 = vsel %vm333, %v905, 0.0
  %915 = vadd.xlane.f32.xlu0 %v914
  %v916 = vpop.xlane.xlu0 %915
  %v917 = vsel %vm333, %v907, 0.0
  %918 = vadd.xlane.f32.xlu0 %v917
  %v919 = vpop.xlane.xlu0 %918
  %v920 = vrcp.pop %v910
  %v921 = vmul.f32 %v910, %v920
  %v922 = vsub.f32 1.0, %v921
  %v923 = vmul.f32 %v920, %v922
  %v924 = vadd.f32 %v920, %v923
  %vm925 = vweird.f32 %v910
  %vm926 = vweird.f32 %v920
  %vm927 = vmor %vm925, %vm926
  %v928 = vsel %vm927, %v920, %v924
  %v929 = vand.u32 2147483647, %v910
  %vm930 = vcmp.eq.f32.partialorder %v929, 8.507059e+37
  %v931 = vand.u32 %v910, 2147483648
  %v932 = vor.u32 1.1754944e-38, %v931
  %v933 = vsel %vm930, %v932, %v928
  %v934 = vmul.f32 %v901, %v933
  %v935 = vrcp.pop %v913
  %v936 = vmul.f32 %v913, %v935
  %v937 = vsub.f32 1.0, %v936
  %v938 = vmul.f32 %v935, %v937
  %v939 = vadd.f32 %v935, %v938
  %vm940 = vweird.f32 %v913
  %vm941 = vweird.f32 %v935
  %vm942 = vmor %vm940, %vm941
  %v943 = vsel %vm942, %v935, %v939
  %v944 = vand.u32 2147483647, %v913
  %vm945 = vcmp.eq.f32.partialorder %v944, 8.507059e+37
  %v946 = vand.u32 %v913, 2147483648
  %v947 = vor.u32 1.1754944e-38, %v946
  %v948 = vsel %vm945, %v947, %v943
  %v949 = vmul.f32 %v903, %v948
  %v950 = vrcp.pop %v916
  %v951 = vmul.f32 %v916, %v950
  %v952 = vsub.f32 1.0, %v951
  %v953 = vmul.f32 %v950, %v952
  %v954 = vadd.f32 %v950, %v953
  %vm955 = vweird.f32 %v916
  %vm956 = vweird.f32 %v950
  %vm957 = vmor %vm955, %vm956
  %v958 = vsel %vm957, %v950, %v954
  %v959 = vand.u32 2147483647, %v916
  %vm960 = vcmp.eq.f32.partialorder %v959, 8.507059e+37
  %v961 = vand.u32 %v916, 2147483648
  %v962 = vor.u32 1.1754944e-38, %v961
  %v963 = vsel %vm960, %v962, %v958
  %v964 = vmul.f32 %v905, %v963
  %v965 = vrcp.pop %v919
  %v966 = vmul.f32 %v919, %v965
  %v967 = vsub.f32 1.0, %v966
  %v968 = vmul.f32 %v965, %v967
  %v969 = vadd.f32 %v965, %v968
  %vm970 = vweird.f32 %v919
  %vm971 = vweird.f32 %v965
  %vm972 = vmor %vm970, %vm971
  %v973 = vsel %vm972, %v965, %v969
  %v974 = vand.u32 2147483647, %v919
  %vm975 = vcmp.eq.f32.partialorder %v974, 8.507059e+37
  %v976 = vand.u32 %v919, 2147483648
  %v977 = vor.u32 1.1754944e-38, %v976
  %v978 = vsel %vm975, %v977, %v973
  %v979 = vmul.f32 %v907, %v978
  %v980 = vmul.f32 %v934, 0.1
  %v981 = vmul.f32 %v949, 0.1
  %v982 = vmul.f32 %v964, 0.1
  %v983 = vmul.f32 %v979, 0.1
  %v984 = vmul.f32 %v211, 0.9
  %v985 = vmul.f32 %v212, 0.9
  %v986 = vmul.f32 %v213, 0.9
  %v987 = vmul.f32 %v214, 0.9
  %v988 = vadd.f32 %v980, %v984
  %v989 = vadd.f32 %v981, %v985
  %v990 = vadd.f32 %v982, %v986
  %v991 = vadd.f32 %v983, %v987
  %v993 = vsel %vm333, %v988, 0
  %v996 = vsel %vm333, %v989, 0
  %v999 = vsel %vm333, %v990, 0
  %v1002 = vsel %vm333, %v991, 0
  %1004 = vmatpush.msra.mxu0 0.0
  %1005 = vmatpush.msra.mxu0 0.0
  %1006 = vmatpush.msra.mxu0 0.0
  %1007 = vmatpush.msra.mxu0 0.0
  %1008 = vmatpush.msra.mxu0 0.0
  %1009 = vmatpush.msra.mxu0 0.0
  %1010 = vmatpush.msra.mxu0 0.0
  %1011 = vmatpush.msra.mxu0 0.0
  %1012 = vmatpush.msra.mxu0 0.0
  %1013 = vmatpush.msra.mxu0 0.0
  %1014 = vmatpush.msra.mxu0 0.0
  %1015 = vmatpush.msra.mxu0 0.0
  %1016 = vmatpush.msra.mxu0 0.0
  %1017 = vmatpush.msra.mxu0 0.0
  %1018 = vmatpush.msra.mxu0 %v361
  %1019 = vmatpush.msra.mxu0 %v358
  %1020 = vmatmul.f32.gmra.mxu0 %v993
  %v1021 = vpop.f32.mrf.mxu0
  %v1022 = vadd.f32 %v587, %v1021
  %1023 = vmatmul.f32.gmra.mxu0 %v996
  %v1024 = vpop.f32.mrf.mxu0
  %v1025 = vadd.f32 %v587, %v1024
  %1026 = vmatmul.f32.gmra.mxu0 %v999
  %v1027 = vpop.f32.mrf.mxu0
  %v1028 = vadd.f32 %v587, %v1027
  %1029 = vmatmul.f32.gmra.mxu0 %v1002
  %v1030 = vpop.f32.mrf.mxu0
  %v1031 = vadd.f32 %v587, %v1030
  %1032 = vdwg.mxu0
  %v1033 = vld [vmem:[%s49] sm:$0xff]
  %v1034 = vld [vmem:[%s49 + $0x8] sm:$0xff]
  %v1035 = vld [vmem:[%s49 + $0x10] sm:$0xff]
  %v1036 = vld [vmem:[%s49 + $0x18] sm:$0xff]
  %v1037 = vld [vmem:[%s55] sm:$0x1]
  %v1038 = vld [vmem:[%s61] sm:$0xff]
  %v1039 = vld [vmem:[%s61 + $0x8] sm:$0xff]
  %v1040 = vld [vmem:[%s61 + $0x10] sm:$0xff]
  %v1041 = vld [vmem:[%s61 + $0x18] sm:$0xff]
  %v1042 = vld [vmem:[%s61 + $0x20] sm:$0xff]
  %v1043 = vld [vmem:[%s61 + $0x28] sm:$0xff]
  %v1044 = vld [vmem:[%s61 + $0x30] sm:$0x3]
  %v1045 = vld [vmem:[%s67] sm:$0xff]
  %v1046 = vld [vmem:[%s67 + $0x8] sm:$0xff]
  %v1047 = vld [vmem:[%s67 + $0x10] sm:$0xff]
  %v1048 = vld [vmem:[%s67 + $0x18] sm:$0xff]
  %v1049 = vld [vmem:[%s67 + $0x20] sm:$0xff]
  %v1050 = vld [vmem:[%s67 + $0x28] sm:$0xff]
  %v1051 = vld [vmem:[%s67 + $0x30] sm:$0x3]
  %v1053 = vperm.slane %v1037, 0
  %v1056 = vsel %vm368, %v619, 0
  %v1059 = vsel %vm368, %v622, 0
  %v1062 = vsel %vm368, %v625, 0
  %v1065 = vsel %vm368, %v628, 0
  %v1068 = vsel %vm368, %v822, 0
  %v1071 = vsel %vm368, %v825, 0
  %v1074 = vsel %vm368, %v828, 0
  %v1077 = vsel %vm368, %v831, 0
  %v1080 = vsel %vm368, %v1022, 0
  %v1083 = vsel %vm368, %v1025, 0
  %v1086 = vsel %vm368, %v1028, 0
  %v1089 = vsel %vm368, %v1031, 0
  %1091 = vmatpush.msra.mxu0 0.0
  %1092 = vmatpush.msra.mxu0 0.0
  %1093 = vmatpush.msra.mxu0 0.0
  %1094 = vmatpush.msra.mxu0 0.0
  %1095 = vmatpush.msra.mxu0 0.0
  %1096 = vmatpush.msra.mxu0 0.0
  %1097 = vmatpush.msra.mxu0 0.0
  %1098 = vmatpush.msra.mxu0 0.0
  %1099 = vmatpush.msra.mxu0 0.0
  %1100 = vmatpush.msra.mxu0 0.0
  %1101 = vmatpush.msra.mxu0 0.0
  %1102 = vmatpush.msra.mxu0 0.0
  %1103 = vmatpush.msra.mxu0 %v1036
  %1104 = vmatpush.msra.mxu0 %v1035
  %1105 = vmatpush.msra.mxu0 %v1034
  %1106 = vmatpush.msra.mxu0 %v1033
  %1107 = vmatmul.f32.gmra.mxu0 %v1056
  %v1108 = vpop.f32.mrf.mxu0
  %v1109 = vadd.f32 %v1053, %v1108
  %1110 = vmatmul.f32.gmra.mxu0 %v1059
  %v1111 = vpop.f32.mrf.mxu0
  %v1112 = vadd.f32 %v1053, %v1111
  %1113 = vmatmul.f32.gmra.mxu0 %v1062
  %v1114 = vpop.f32.mrf.mxu0
  %v1115 = vadd.f32 %v1053, %v1114
  %1116 = vmatmul.f32.gmra.mxu0 %v1065
  %v1117 = vpop.f32.mrf.mxu0
  %v1118 = vadd.f32 %v1053, %v1117
  %1119 = vmatmul.f32.gmra.mxu0 %v1068
  %v1120 = vpop.f32.mrf.mxu0
  %v1121 = vadd.f32 %v1053, %v1120
  %1122 = vmatmul.f32.gmra.mxu0 %v1071
  %v1123 = vpop.f32.mrf.mxu0
  %v1124 = vadd.f32 %v1053, %v1123
  %1125 = vmatmul.f32.gmra.mxu0 %v1074
  %v1126 = vpop.f32.mrf.mxu0
  %v1127 = vadd.f32 %v1053, %v1126
  %1128 = vmatmul.f32.gmra.mxu0 %v1077
  %v1129 = vpop.f32.mrf.mxu0
  %v1130 = vadd.f32 %v1053, %v1129
  %1131 = vmatmul.f32.gmra.mxu0 %v1080
  %v1132 = vpop.f32.mrf.mxu0
  %v1133 = vadd.f32 %v1053, %v1132
  %1134 = vmatmul.f32.gmra.mxu0 %v1083
  %v1135 = vpop.f32.mrf.mxu0
  %v1136 = vadd.f32 %v1053, %v1135
  %1137 = vmatmul.f32.gmra.mxu0 %v1086
  %v1138 = vpop.f32.mrf.mxu0
  %v1139 = vadd.f32 %v1053, %v1138
  %1140 = vmatmul.f32.gmra.mxu0 %v1089
  %v1141 = vpop.f32.mrf.mxu0
  %v1142 = vadd.f32 %v1053, %v1141
  %1143 = vdwg.mxu0
  %vm1144 = vcmask 408576
  %v1146 = vsel %vm1144, %v1109, 0
  %v1149 = vsel %vm1144, %v1112, 0
  %v1152 = vsel %vm1144, %v1115, 0
  %v1155 = vsel %vm1144, %v1118, 0
  %v1158 = vsel %vm1144, %v1121, 0
  %v1161 = vsel %vm1144, %v1124, 0
  %v1164 = vsel %vm1144, %v1127, 0
  %v1167 = vsel %vm1144, %v1130, 0
  %v1170 = vsel %vm1144, %v1133, 0
  %v1173 = vsel %vm1144, %v1136, 0
  %v1176 = vsel %vm1144, %v1139, 0
  %v1179 = vsel %vm1144, %v1142, 0
  %vm1181 = vcmask 1041408
  %v1183 = vsel %vm1181, %v1051, 0
  %1185 = vmatpush.msra.mxu0 0.0
  %1186 = vmatpush.msra.mxu0 0.0
  %1187 = vmatpush.msra.mxu0 0.0
  %1188 = vmatpush.msra.mxu0 0.0
  %1189 = vmatpush.msra.mxu0 0.0
  %1190 = vmatpush.msra.mxu0 0.0
  %1191 = vmatpush.msra.mxu0 0.0
  %1192 = vmatpush.msra.mxu0 0.0
  %1193 = vmatpush.msra.mxu0 0.0
  %1194 = vmatpush.msra.mxu0 %v1183
  %1195 = vmatpush.msra.mxu0 %v1050
  %1196 = vmatpush.msra.mxu0 %v1049
  %1197 = vmatpush.msra.mxu0 %v1048
  %1198 = vmatpush.msra.mxu0 %v1047
  %1199 = vmatpush.msra.mxu0 %v1046
  %1200 = vmatpush.msra.mxu0 %v1045
  %1201 = vmatmul.f32.gmra.mxu0 %v1146
  %v1202 = vpop.f32.mrf.mxu0
  %v1203 = vadd.f32 0.0, %v1202
  %1204 = vmatmul.f32.gmra.mxu0 %v1149
  %v1205 = vpop.f32.mrf.mxu0
  %v1206 = vadd.f32 0.0, %v1205
  %1207 = vmatmul.f32.gmra.mxu0 %v1152
  %v1208 = vpop.f32.mrf.mxu0
  %v1209 = vadd.f32 0.0, %v1208
  %1210 = vmatmul.f32.gmra.mxu0 %v1155
  %v1211 = vpop.f32.mrf.mxu0
  %v1212 = vadd.f32 0.0, %v1211
  %1213 = vmatmul.f32.gmra.mxu0 %v1158
  %v1214 = vpop.f32.mrf.mxu0
  %v1215 = vadd.f32 0.0, %v1214
  %1216 = vmatmul.f32.gmra.mxu0 %v1161
  %v1217 = vpop.f32.mrf.mxu0
  %v1218 = vadd.f32 0.0, %v1217
  %1219 = vmatmul.f32.gmra.mxu0 %v1164
  %v1220 = vpop.f32.mrf.mxu0
  %v1221 = vadd.f32 0.0, %v1220
  %1222 = vmatmul.f32.gmra.mxu0 %v1167
  %v1223 = vpop.f32.mrf.mxu0
  %v1224 = vadd.f32 0.0, %v1223
  %1225 = vmatmul.f32.gmra.mxu0 %v1170
  %v1226 = vpop.f32.mrf.mxu0
  %v1227 = vadd.f32 0.0, %v1226
  %1228 = vmatmul.f32.gmra.mxu0 %v1173
  %v1229 = vpop.f32.mrf.mxu0
  %v1230 = vadd.f32 0.0, %v1229
  %1231 = vmatmul.f32.gmra.mxu0 %v1176
  %v1232 = vpop.f32.mrf.mxu0
  %v1233 = vadd.f32 0.0, %v1232
  %1234 = vmatmul.f32.gmra.mxu0 %v1179
  %v1235 = vpop.f32.mrf.mxu0
  %v1236 = vadd.f32 0.0, %v1235
  %1237 = vdwg.mxu0
  %v1239 = vsel %vm1181, %v1044, 0
  %1241 = vmatpush.msra.mxu0 0.0
  %1242 = vmatpush.msra.mxu0 0.0
  %1243 = vmatpush.msra.mxu0 0.0
  %1244 = vmatpush.msra.mxu0 0.0
  %1245 = vmatpush.msra.mxu0 0.0
  %1246 = vmatpush.msra.mxu0 0.0
  %1247 = vmatpush.msra.mxu0 0.0
  %1248 = vmatpush.msra.mxu0 0.0
  %1249 = vmatpush.msra.mxu0 0.0
  %1250 = vmatpush.msra.mxu0 %v1239
  %1251 = vmatpush.msra.mxu0 %v1043
  %1252 = vmatpush.msra.mxu0 %v1042
  %1253 = vmatpush.msra.mxu0 %v1041
  %1254 = vmatpush.msra.mxu0 %v1040
  %1255 = vmatpush.msra.mxu0 %v1039
  %1256 = vmatpush.msra.mxu0 %v1038
  %1257 = vmatmul.f32.gmra.mxu0 %v1146
  %v1258 = vpop.f32.mrf.mxu0
  %v1259 = vadd.f32 0.0, %v1258
  %1260 = vmatmul.f32.gmra.mxu0 %v1149
  %v1261 = vpop.f32.mrf.mxu0
  %v1262 = vadd.f32 0.0, %v1261
  %1263 = vmatmul.f32.gmra.mxu0 %v1152
  %v1264 = vpop.f32.mrf.mxu0
  %v1265 = vadd.f32 0.0, %v1264
  %1266 = vmatmul.f32.gmra.mxu0 %v1155
  %v1267 = vpop.f32.mrf.mxu0
  %v1268 = vadd.f32 0.0, %v1267
  %1269 = vdwg.mxu0
  %v1270 = vadd.f32 %v1259, %v1203
  %v1271 = vadd.f32 %v1262, %v1206
  %v1272 = vadd.f32 %v1265, %v1209
  %v1273 = vadd.f32 %v1268, %v1212
  %vm1274 = vcmp.gt.f32.partialorder %v1270, 0.0
  %vm1275 = vcmp.gt.f32.partialorder %v1271, 0.0
  %vm1276 = vcmp.gt.f32.partialorder %v1272, 0.0
  %vm1277 = vcmp.gt.f32.partialorder %v1273, 0.0
  %v1278 = vmul.f32 %v1270, 0.2
  %v1279 = vmul.f32 %v1271, 0.2
  %v1280 = vmul.f32 %v1272, 0.2
  %v1281 = vmul.f32 %v1273, 0.2
  %v1282 = vsel %vm1274, %v1270, %v1278
  %v1283 = vsel %vm1275, %v1271, %v1279
  %v1284 = vsel %vm1276, %v1272, %v1280
  %v1285 = vsel %vm1277, %v1273, %v1281
  %v1286 = vadd.f32 %v1259, %v1215
  %v1287 = vadd.f32 %v1262, %v1218
  %v1288 = vadd.f32 %v1265, %v1221
  %v1289 = vadd.f32 %v1268, %v1224
  %vm1290 = vcmp.gt.f32.partialorder %v1286, 0.0
  %vm1291 = vcmp.gt.f32.partialorder %v1287, 0.0
  %vm1292 = vcmp.gt.f32.partialorder %v1288, 0.0
  %vm1293 = vcmp.gt.f32.partialorder %v1289, 0.0
  %v1294 = vmul.f32 %v1286, 0.2
  %v1295 = vmul.f32 %v1287, 0.2
  %v1296 = vmul.f32 %v1288, 0.2
  %v1297 = vmul.f32 %v1289, 0.2
  %v1298 = vsel %vm1290, %v1286, %v1294
  %v1299 = vsel %vm1291, %v1287, %v1295
  %v1300 = vsel %vm1292, %v1288, %v1296
  %v1301 = vsel %vm1293, %v1289, %v1297
  %v1302 = vadd.f32 %v1259, %v1227
  %v1303 = vadd.f32 %v1262, %v1230
  %v1304 = vadd.f32 %v1265, %v1233
  %v1305 = vadd.f32 %v1268, %v1236
  %vm1306 = vcmp.gt.f32.partialorder %v1302, 0.0
  %vm1307 = vcmp.gt.f32.partialorder %v1303, 0.0
  %vm1308 = vcmp.gt.f32.partialorder %v1304, 0.0
  %vm1309 = vcmp.gt.f32.partialorder %v1305, 0.0
  %v1310 = vmul.f32 %v1302, 0.2
  %v1311 = vmul.f32 %v1303, 0.2
  %v1312 = vmul.f32 %v1304, 0.2
  %v1313 = vmul.f32 %v1305, 0.2
  %v1314 = vsel %vm1306, %v1302, %v1310
  %v1315 = vsel %vm1307, %v1303, %v1311
  %v1316 = vsel %vm1308, %v1304, %v1312
  %v1317 = vsel %vm1309, %v1305, %v1313
  %v1318 = vmax.f32 %v1282, %v1298
  %v1319 = vmax.f32 %v1283, %v1299
  %v1320 = vmax.f32 %v1284, %v1300
  %v1321 = vmax.f32 %v1285, %v1301
  %v1322 = vmax.f32 %v1318, %v1314
  %v1323 = vmax.f32 %v1319, %v1315
  %v1324 = vmax.f32 %v1320, %v1316
  %v1325 = vmax.f32 %v1321, %v1317
  %v1326 = vsub.f32 %v1282, %v1322
  %v1327 = vsub.f32 %v1283, %v1323
  %v1328 = vsub.f32 %v1284, %v1324
  %v1329 = vsub.f32 %v1285, %v1325
  %v1330 = vmul.f32 %v1326, 1.442695
  %v1331 = vpow.pop %v1330
  %v1332 = vmul.f32 %v1327, 1.442695
  %v1333 = vpow.pop %v1332
  %v1334 = vmul.f32 %v1328, 1.442695
  %v1335 = vpow.pop %v1334
  %v1336 = vmul.f32 %v1329, 1.442695
  %v1337 = vpow.pop %v1336
  %v1338 = vsub.f32 %v1298, %v1322
  %v1339 = vsub.f32 %v1299, %v1323
  %v1340 = vsub.f32 %v1300, %v1324
  %v1341 = vsub.f32 %v1301, %v1325
  %v1342 = vmul.f32 %v1338, 1.442695
  %v1343 = vpow.pop %v1342
  %v1344 = vmul.f32 %v1339, 1.442695
  %v1345 = vpow.pop %v1344
  %v1346 = vmul.f32 %v1340, 1.442695
  %v1347 = vpow.pop %v1346
  %v1348 = vmul.f32 %v1341, 1.442695
  %v1349 = vpow.pop %v1348
  %v1350 = vsub.f32 %v1314, %v1322
  %v1351 = vsub.f32 %v1315, %v1323
  %v1352 = vsub.f32 %v1316, %v1324
  %v1353 = vsub.f32 %v1317, %v1325
  %v1354 = vmul.f32 %v1350, 1.442695
  %v1355 = vpow.pop %v1354
  %v1356 = vmul.f32 %v1351, 1.442695
  %v1357 = vpow.pop %v1356
  %v1358 = vmul.f32 %v1352, 1.442695
  %v1359 = vpow.pop %v1358
  %v1360 = vmul.f32 %v1353, 1.442695
  %v1361 = vpow.pop %v1360
  %v1362 = vadd.f32 %v1331, %v1343
  %v1363 = vadd.f32 %v1333, %v1345
  %v1364 = vadd.f32 %v1335, %v1347
  %v1365 = vadd.f32 %v1337, %v1349
  %v1366 = vadd.f32 %v1362, %v1355
  %v1367 = vadd.f32 %v1363, %v1357
  %v1368 = vadd.f32 %v1364, %v1359
  %v1369 = vadd.f32 %v1365, %v1361
  %v1370 = vrcp.pop %v1366
  %v1371 = vmul.f32 %v1366, %v1370
  %v1372 = vsub.f32 1.0, %v1371
  %v1373 = vmul.f32 %v1370, %v1372
  %v1374 = vadd.f32 %v1370, %v1373
  %vm1375 = vweird.f32 %v1366
  %vm1376 = vweird.f32 %v1370
  %vm1377 = vmor %vm1375, %vm1376
  %v1378 = vsel %vm1377, %v1370, %v1374
  %v1379 = vand.u32 2147483647, %v1366
  %vm1380 = vcmp.eq.f32.partialorder %v1379, 8.507059e+37
  %v1381 = vand.u32 %v1366, 2147483648
  %v1382 = vor.u32 1.1754944e-38, %v1381
  %v1383 = vsel %vm1380, %v1382, %v1378
  %v1384 = vmul.f32 1.0, %v1383
  %v1385 = vrcp.pop %v1367
  %v1386 = vmul.f32 %v1367, %v1385
  %v1387 = vsub.f32 1.0, %v1386
  %v1388 = vmul.f32 %v1385, %v1387
  %v1389 = vadd.f32 %v1385, %v1388
  %vm1390 = vweird.f32 %v1367
  %vm1391 = vweird.f32 %v1385
  %vm1392 = vmor %vm1390, %vm1391
  %v1393 = vsel %vm1392, %v1385, %v1389
  %v1394 = vand.u32 2147483647, %v1367
  %vm1395 = vcmp.eq.f32.partialorder %v1394, 8.507059e+37
  %v1396 = vand.u32 %v1367, 2147483648
  %v1397 = vor.u32 1.1754944e-38, %v1396
  %v1398 = vsel %vm1395, %v1397, %v1393
  %v1399 = vmul.f32 1.0, %v1398
  %v1400 = vrcp.pop %v1368
  %v1401 = vmul.f32 %v1368, %v1400
  %v1402 = vsub.f32 1.0, %v1401
  %v1403 = vmul.f32 %v1400, %v1402
  %v1404 = vadd.f32 %v1400, %v1403
  %vm1405 = vweird.f32 %v1368
  %vm1406 = vweird.f32 %v1400
  %vm1407 = vmor %vm1405, %vm1406
  %v1408 = vsel %vm1407, %v1400, %v1404
  %v1409 = vand.u32 2147483647, %v1368
  %vm1410 = vcmp.eq.f32.partialorder %v1409, 8.507059e+37
  %v1411 = vand.u32 %v1368, 2147483648
  %v1412 = vor.u32 1.1754944e-38, %v1411
  %v1413 = vsel %vm1410, %v1412, %v1408
  %v1414 = vmul.f32 1.0, %v1413
  %v1415 = vrcp.pop %v1369
  %v1416 = vmul.f32 %v1369, %v1415
  %v1417 = vsub.f32 1.0, %v1416
  %v1418 = vmul.f32 %v1415, %v1417
  %v1419 = vadd.f32 %v1415, %v1418
  %vm1420 = vweird.f32 %v1369
  %vm1421 = vweird.f32 %v1415
  %vm1422 = vmor %vm1420, %vm1421
  %v1423 = vsel %vm1422, %v1415, %v1419
  %v1424 = vand.u32 2147483647, %v1369
  %vm1425 = vcmp.eq.f32.partialorder %v1424, 8.507059e+37
  %v1426 = vand.u32 %v1369, 2147483648
  %v1427 = vor.u32 1.1754944e-38, %v1426
  %v1428 = vsel %vm1425, %v1427, %v1423
  %v1429 = vmul.f32 1.0, %v1428
  %v1430 = vmul.f32 %v1331, %v1384
  %v1431 = vmul.f32 %v1333, %v1399
  %v1432 = vmul.f32 %v1335, %v1414
  %v1433 = vmul.f32 %v1337, %v1429
  %1435 = vset.pattern.permute.xlu0 0
  %1436 = vperm.xlu0 %1435, %v1430
  %v1437 = vpop.permute.xlu0 %1436
  %1440 = vset.pattern.permute.xlu0 0
  %1441 = vperm.xlu0 %1440, %v1431
  %v1442 = vpop.permute.xlu0 %1441
  %1445 = vset.pattern.permute.xlu0 0
  %1446 = vperm.xlu0 %1445, %v1432
  %v1447 = vpop.permute.xlu0 %1446
  %1450 = vset.pattern.permute.xlu0 0
  %1451 = vperm.xlu0 %1450, %v1433
  %v1452 = vpop.permute.xlu0 %1451
  %v1454 = vmul.f32 %v1437, %v619
  %v1455 = vmul.f32 %v1442, %v622
  %v1456 = vmul.f32 %v1447, %v625
  %v1457 = vmul.f32 %v1452, %v628
  %v1458 = vmul.f32 %v1343, %v1384
  %v1459 = vmul.f32 %v1345, %v1399
  %v1460 = vmul.f32 %v1347, %v1414
  %v1461 = vmul.f32 %v1349, %v1429
  %1463 = vset.pattern.permute.xlu0 0
  %1464 = vperm.xlu0 %1463, %v1458
  %v1465 = vpop.permute.xlu0 %1464
  %1468 = vset.pattern.permute.xlu0 0
  %1469 = vperm.xlu0 %1468, %v1459
  %v1470 = vpop.permute.xlu0 %1469
  %1473 = vset.pattern.permute.xlu0 0
  %1474 = vperm.xlu0 %1473, %v1460
  %v1475 = vpop.permute.xlu0 %1474
  %1478 = vset.pattern.permute.xlu0 0
  %1479 = vperm.xlu0 %1478, %v1461
  %v1480 = vpop.permute.xlu0 %1479
  %v1482 = vmul.f32 %v1465, %v822
  %v1483 = vmul.f32 %v1470, %v825
  %v1484 = vmul.f32 %v1475, %v828
  %v1485 = vmul.f32 %v1480, %v831
  %v1486 = vadd.f32 %v1454, %v1482
  %v1487 = vadd.f32 %v1455, %v1483
  %v1488 = vadd.f32 %v1456, %v1484
  %v1489 = vadd.f32 %v1457, %v1485
  %v1490 = vmul.f32 %v1355, %v1384
  %v1491 = vmul.f32 %v1357, %v1399
  %v1492 = vmul.f32 %v1359, %v1414
  %v1493 = vmul.f32 %v1361, %v1429
  %1495 = vset.pattern.permute.xlu0 0
  %1496 = vperm.xlu0 %1495, %v1490
  %v1497 = vpop.permute.xlu0 %1496
  %1500 = vset.pattern.permute.xlu0 0
  %1501 = vperm.xlu0 %1500, %v1491
  %v1502 = vpop.permute.xlu0 %1501
  %1505 = vset.pattern.permute.xlu0 0
  %1506 = vperm.xlu0 %1505, %v1492
  %v1507 = vpop.permute.xlu0 %1506
  %1510 = vset.pattern.permute.xlu0 0
  %1511 = vperm.xlu0 %1510, %v1493
  %v1512 = vpop.permute.xlu0 %1511
  %v1514 = vmul.f32 %v1497, %v1022
  %v1515 = vmul.f32 %v1502, %v1025
  %v1516 = vmul.f32 %v1507, %v1028
  %v1517 = vmul.f32 %v1512, %v1031
  %v1518 = vadd.f32 %v1486, %v1514
  %v1519 = vadd.f32 %v1487, %v1515
  %v1520 = vadd.f32 %v1488, %v1516
  %v1521 = vadd.f32 %v1489, %v1517
  %v1522 = vmax.f32 %v1518, 0.0
  %v1523 = vmax.f32 %v1519, 0.0
  %v1524 = vmax.f32 %v1520, 0.0
  %v1525 = vmax.f32 %v1521, 0.0
  %v1526 = vld [vmem:[%s35] sm:$0xff]
  %v1527 = vld [vmem:[%s35 + $0x8] sm:$0xff]
  %v1528 = vld [vmem:[%s35 + $0x10] sm:$0xff]
  %v1529 = vld [vmem:[%s35 + $0x18] sm:$0xff]
  %v1530 = vld [vmem:[%s41] sm:$0x1]
  %1531 = vmatpush.msra.mxu0 0.0
  %1532 = vmatpush.msra.mxu0 0.0
  %1533 = vmatpush.msra.mxu0 0.0
  %1534 = vmatpush.msra.mxu0 0.0
  %1535 = vmatpush.msra.mxu0 0.0
  %1536 = vmatpush.msra.mxu0 0.0
  %1537 = vmatpush.msra.mxu0 0.0
  %1538 = vmatpush.msra.mxu0 0.0
  %1539 = vmatpush.msra.mxu0 0.0
  %1540 = vmatpush.msra.mxu0 0.0
  %1541 = vmatpush.msra.mxu0 0.0
  %1542 = vmatpush.msra.mxu0 0.0
  %1543 = vmatpush.msra.mxu0 %v1529
  %1544 = vmatpush.msra.mxu0 %v1528
  %1545 = vmatpush.msra.mxu0 %v1527
  %1546 = vmatpush.msra.mxu0 %v1526
  %1547 = vmatmul.f32.gmra.mxu0 %v631
  %v1548 = vpop.f32.mrf.mxu0
  %v1549 = vadd.f32 0.0, %v1548
  %1550 = vmatmul.f32.gmra.mxu0 %v634
  %v1551 = vpop.f32.mrf.mxu0
  %v1552 = vadd.f32 0.0, %v1551
  %1553 = vmatmul.f32.gmra.mxu0 %v637
  %v1554 = vpop.f32.mrf.mxu0
  %v1555 = vadd.f32 0.0, %v1554
  %1556 = vdwg.mxu0
  %v1558 = vsel %vm368, %v1530, 0
  %1560 = vmatpush.xpose.msra.mxu0 0.0
  %1561 = vmatpush.xpose.msra.mxu0 0.0
  %1562 = vmatpush.xpose.msra.mxu0 0.0
  %1563 = vmatpush.xpose.msra.mxu0 0.0
  %1564 = vmatpush.xpose.msra.mxu0 0.0
  %1565 = vmatpush.xpose.msra.mxu0 0.0
  %1566 = vmatpush.xpose.msra.mxu0 0.0
  %1567 = vmatpush.xpose.msra.mxu0 0.0
  %1568 = vmatpush.xpose.msra.mxu0 0.0
  %1569 = vmatpush.xpose.msra.mxu0 0.0
  %1570 = vmatpush.xpose.msra.mxu0 0.0
  %1571 = vmatpush.xpose.msra.mxu0 0.0
  %1572 = vmatpush.xpose.msra.mxu0 %v379
  %1573 = vmatpush.xpose.msra.mxu0 %v376
  %1574 = vmatpush.xpose.msra.mxu0 %v373
  %1575 = vmatpush.xpose.msra.mxu0 %v370
  %1576 = vmatmul.f32.gmra.mxu0 %v1558
  %v1577 = vpop.f32.mrf.mxu0
  %v1578 = vadd.f32 0.0, %v1577
  %1579 = vdwg.mxu0
  %1581 = vset.pattern.permute.xlu0 0
  %1582 = vperm.xlu0 %1581, %v1549
  %v1583 = vpop.permute.xlu0 %1582
  %1586 = vset.pattern.permute.xlu0 0
  %1587 = vperm.xlu0 %1586, %v1552
  %v1588 = vpop.permute.xlu0 %1587
  %1591 = vset.pattern.permute.xlu0 0
  %1592 = vperm.xlu0 %1591, %v1555
  %v1593 = vpop.permute.xlu0 %1592
  %v1595 = vperm.slane %v1578, 0
  %v1596 = vadd.f32 %v1583, %v1595
  %v1597 = vadd.f32 %v1588, %v1595
  %v1598 = vadd.f32 %v1593, %v1595
  %vm1599 = vcmp.gt.f32.partialorder %v1596, 0.0
  %vm1600 = vcmp.gt.f32.partialorder %v1597, 0.0
  %vm1601 = vcmp.gt.f32.partialorder %v1598, 0.0
  %v1602 = vmul.f32 %v1596, 0.2
  %v1603 = vmul.f32 %v1597, 0.2
  %v1604 = vmul.f32 %v1598, 0.2
  %v1605 = vsel %vm1599, %v1596, %v1602
  %v1606 = vsel %vm1600, %v1597, %v1603
  %v1607 = vsel %vm1601, %v1598, %v1604
  %vm1608 = vcmp.gt.f32.partialorder %v215, 0.0
  %vm1609 = vcmp.gt.f32.partialorder %v216, 0.0
  %vm1610 = vcmp.gt.f32.partialorder %v217, 0.0
  %v1611 = vsel %vm1608, %v1605, -9e+15
  %v1612 = vsel %vm1609, %v1606, -9e+15
  %v1613 = vsel %vm1610, %v1607, -9e+15
  %v1614 = vsel %vm368, %v1611, -inf
  %1615 = vmax.xlane.f32.xlu0 %v1614
  %v1616 = vpop.xlane.xlu0 %1615
  %v1617 = vsel %vm368, %v1612, -inf
  %1618 = vmax.xlane.f32.xlu0 %v1617
  %v1619 = vpop.xlane.xlu0 %1618
  %v1620 = vsel %vm368, %v1613, -inf
  %1621 = vmax.xlane.f32.xlu0 %v1620
  %v1622 = vpop.xlane.xlu0 %1621
  %v1623 = vsub.f32 %v1611, %v1616
  %v1624 = vsub.f32 %v1612, %v1619
  %v1625 = vsub.f32 %v1613, %v1622
  %v1626 = vmul.f32 %v1623, 1.442695
  %v1627 = vpow.pop %v1626
  %v1628 = vmul.f32 %v1624, 1.442695
  %v1629 = vpow.pop %v1628
  %v1630 = vmul.f32 %v1625, 1.442695
  %v1631 = vpow.pop %v1630
  %v1632 = vsel %vm368, %v1627, 0.0
  %1633 = vadd.xlane.f32.xlu0 %v1632
  %v1634 = vpop.xlane.xlu0 %1633
  %v1635 = vsel %vm368, %v1629, 0.0
  %1636 = vadd.xlane.f32.xlu0 %v1635
  %v1637 = vpop.xlane.xlu0 %1636
  %v1638 = vsel %vm368, %v1631, 0.0
  %1639 = vadd.xlane.f32.xlu0 %v1638
  %v1640 = vpop.xlane.xlu0 %1639
  %v1641 = vrcp.pop %v1634
  %v1642 = vmul.f32 %v1634, %v1641
  %v1643 = vsub.f32 1.0, %v1642
  %v1644 = vmul.f32 %v1641, %v1643
  %v1645 = vadd.f32 %v1641, %v1644
  %vm1646 = vweird.f32 %v1634
  %vm1647 = vweird.f32 %v1641
  %vm1648 = vmor %vm1646, %vm1647
  %v1649 = vsel %vm1648, %v1641, %v1645
  %v1650 = vand.u32 2147483647, %v1634
  %vm1651 = vcmp.eq.f32.partialorder %v1650, 8.507059e+37
  %v1652 = vand.u32 %v1634, 2147483648
  %v1653 = vor.u32 1.1754944e-38, %v1652
  %v1654 = vsel %vm1651, %v1653, %v1649
  %v1655 = vmul.f32 %v1627, %v1654
  %v1656 = vrcp.pop %v1637
  %v1657 = vmul.f32 %v1637, %v1656
  %v1658 = vsub.f32 1.0, %v1657
  %v1659 = vmul.f32 %v1656, %v1658
  %v1660 = vadd.f32 %v1656, %v1659
  %vm1661 = vweird.f32 %v1637
  %vm1662 = vweird.f32 %v1656
  %vm1663 = vmor %vm1661, %vm1662
  %v1664 = vsel %vm1663, %v1656, %v1660
  %v1665 = vand.u32 2147483647, %v1637
  %vm1666 = vcmp.eq.f32.partialorder %v1665, 8.507059e+37
  %v1667 = vand.u32 %v1637, 2147483648
  %v1668 = vor.u32 1.1754944e-38, %v1667
  %v1669 = vsel %vm1666, %v1668, %v1664
  %v1670 = vmul.f32 %v1629, %v1669
  %v1671 = vrcp.pop %v1640
  %v1672 = vmul.f32 %v1640, %v1671
  %v1673 = vsub.f32 1.0, %v1672
  %v1674 = vmul.f32 %v1671, %v1673
  %v1675 = vadd.f32 %v1671, %v1674
  %vm1676 = vweird.f32 %v1640
  %vm1677 = vweird.f32 %v1671
  %vm1678 = vmor %vm1676, %vm1677
  %v1679 = vsel %vm1678, %v1671, %v1675
  %v1680 = vand.u32 2147483647, %v1640
  %vm1681 = vcmp.eq.f32.partialorder %v1680, 8.507059e+37
  %v1682 = vand.u32 %v1640, 2147483648
  %v1683 = vor.u32 1.1754944e-38, %v1682
  %v1684 = vsel %vm1681, %v1683, %v1679
  %v1685 = vmul.f32 %v1631, %v1684
  %v1686 = vmul.f32 %v1655, 0.1
  %v1687 = vmul.f32 %v1670, 0.1
  %v1688 = vmul.f32 %v1685, 0.1
  %v1689 = vmul.f32 %v215, 0.9
  %v1690 = vmul.f32 %v216, 0.9
  %v1691 = vmul.f32 %v217, 0.9
  %v1692 = vadd.f32 %v1686, %v1689
  %v1693 = vadd.f32 %v1687, %v1690
  %v1694 = vadd.f32 %v1688, %v1691
  %v1696 = vsel %vm368, %v1692, 0
  %v1699 = vsel %vm368, %v1693, 0
  %v1702 = vsel %vm368, %v1694, 0
  %1704 = vmatpush.msra.mxu0 0.0
  %1705 = vmatpush.msra.mxu0 0.0
  %1706 = vmatpush.msra.mxu0 0.0
  %1707 = vmatpush.msra.mxu0 0.0
  %1708 = vmatpush.msra.mxu0 0.0
  %1709 = vmatpush.msra.mxu0 0.0
  %1710 = vmatpush.msra.mxu0 0.0
  %1711 = vmatpush.msra.mxu0 0.0
  %1712 = vmatpush.msra.mxu0 0.0
  %1713 = vmatpush.msra.mxu0 0.0
  %1714 = vmatpush.msra.mxu0 0.0
  %1715 = vmatpush.msra.mxu0 0.0
  %1716 = vmatpush.msra.mxu0 %v285
  %1717 = vmatpush.msra.mxu0 %v282
  %1718 = vmatpush.msra.mxu0 %v279
  %1719 = vmatpush.msra.mxu0 %v276
  %1720 = vmatmul.f32.gmra.mxu0 %v1696
  %v1721 = vpop.f32.mrf.mxu0
  %v1722 = vadd.f32 %v587, %v1721
  %1723 = vmatmul.f32.gmra.mxu0 %v1699
  %v1724 = vpop.f32.mrf.mxu0
  %v1725 = vadd.f32 %v587, %v1724
  %1726 = vmatmul.f32.gmra.mxu0 %v1702
  %v1727 = vpop.f32.mrf.mxu0
  %v1728 = vadd.f32 %v587, %v1727
  %1729 = vdwg.mxu0
  %1730 = vmatpush.xpose.msra.mxu0 0.0
  %1731 = vmatpush.xpose.msra.mxu0 0.0
  %1732 = vmatpush.xpose.msra.mxu0 0.0
  %1733 = vmatpush.xpose.msra.mxu0 0.0
  %1734 = vmatpush.xpose.msra.mxu0 0.0
  %1735 = vmatpush.xpose.msra.mxu0 0.0
  %1736 = vmatpush.xpose.msra.mxu0 0.0
  %1737 = vmatpush.xpose.msra.mxu0 0.0
  %1738 = vmatpush.xpose.msra.mxu0 0.0
  %1739 = vmatpush.xpose.msra.mxu0 0.0
  %1740 = vmatpush.xpose.msra.mxu0 0.0
  %1741 = vmatpush.xpose.msra.mxu0 0.0
  %1742 = vmatpush.xpose.msra.mxu0 0.0
  %1743 = vmatpush.xpose.msra.mxu0 %v637
  %1744 = vmatpush.xpose.msra.mxu0 %v634
  %1745 = vmatpush.xpose.msra.mxu0 %v631
  %1746 = vmatmul.f32.gmra.mxu0 %v1558
  %v1747 = vpop.f32.mrf.mxu0
  %v1748 = vadd.f32 0.0, %v1747
  %1749 = vdwg.mxu0
  %v1750 = vperm.slane %v1748, 0
  %v1751 = vadd.f32 %v1583, %v1750
  %v1752 = vadd.f32 %v1588, %v1750
  %v1753 = vadd.f32 %v1593, %v1750
  %vm1754 = vcmp.gt.f32.partialorder %v1751, 0.0
  %vm1755 = vcmp.gt.f32.partialorder %v1752, 0.0
  %vm1756 = vcmp.gt.f32.partialorder %v1753, 0.0
  %v1757 = vmul.f32 %v1751, 0.2
  %v1758 = vmul.f32 %v1752, 0.2
  %v1759 = vmul.f32 %v1753, 0.2
  %v1760 = vsel %vm1754, %v1751, %v1757
  %v1761 = vsel %vm1755, %v1752, %v1758
  %v1762 = vsel %vm1756, %v1753, %v1759
  %vm1763 = vcmp.gt.f32.partialorder %v218, 0.0
  %vm1764 = vcmp.gt.f32.partialorder %v219, 0.0
  %vm1765 = vcmp.gt.f32.partialorder %v220, 0.0
  %v1766 = vsel %vm1763, %v1760, -9e+15
  %v1767 = vsel %vm1764, %v1761, -9e+15
  %v1768 = vsel %vm1765, %v1762, -9e+15
  %v1769 = vsel %vm293, %v1766, -inf
  %1770 = vmax.xlane.f32.xlu0 %v1769
  %v1771 = vpop.xlane.xlu0 %1770
  %v1772 = vsel %vm293, %v1767, -inf
  %1773 = vmax.xlane.f32.xlu0 %v1772
  %v1774 = vpop.xlane.xlu0 %1773
  %v1775 = vsel %vm293, %v1768, -inf
  %1776 = vmax.xlane.f32.xlu0 %v1775
  %v1777 = vpop.xlane.xlu0 %1776
  %v1778 = vsub.f32 %v1766, %v1771
  %v1779 = vsub.f32 %v1767, %v1774
  %v1780 = vsub.f32 %v1768, %v1777
  %v1781 = vmul.f32 %v1778, 1.442695
  %v1782 = vpow.pop %v1781
  %v1783 = vmul.f32 %v1779, 1.442695
  %v1784 = vpow.pop %v1783
  %v1785 = vmul.f32 %v1780, 1.442695
  %v1786 = vpow.pop %v1785
  %v1787 = vsel %vm293, %v1782, 0.0
  %1788 = vadd.xlane.f32.xlu0 %v1787
  %v1789 = vpop.xlane.xlu0 %1788
  %v1790 = vsel %vm293, %v1784, 0.0
  %1791 = vadd.xlane.f32.xlu0 %v1790
  %v1792 = vpop.xlane.xlu0 %1791
  %v1793 = vsel %vm293, %v1786, 0.0
  %1794 = vadd.xlane.f32.xlu0 %v1793
  %v1795 = vpop.xlane.xlu0 %1794
  %v1796 = vrcp.pop %v1789
  %v1797 = vmul.f32 %v1789, %v1796
  %v1798 = vsub.f32 1.0, %v1797
  %v1799 = vmul.f32 %v1796, %v1798
  %v1800 = vadd.f32 %v1796, %v1799
  %vm1801 = vweird.f32 %v1789
  %vm1802 = vweird.f32 %v1796
  %vm1803 = vmor %vm1801, %vm1802
  %v1804 = vsel %vm1803, %v1796, %v1800
  %v1805 = vand.u32 2147483647, %v1789
  %vm1806 = vcmp.eq.f32.partialorder %v1805, 8.507059e+37
  %v1807 = vand.u32 %v1789, 2147483648
  %v1808 = vor.u32 1.1754944e-38, %v1807
  %v1809 = vsel %vm1806, %v1808, %v1804
  %v1810 = vmul.f32 %v1782, %v1809
  %v1811 = vrcp.pop %v1792
  %v1812 = vmul.f32 %v1792, %v1811
  %v1813 = vsub.f32 1.0, %v1812
  %v1814 = vmul.f32 %v1811, %v1813
  %v1815 = vadd.f32 %v1811, %v1814
  %vm1816 = vweird.f32 %v1792
  %vm1817 = vweird.f32 %v1811
  %vm1818 = vmor %vm1816, %vm1817
  %v1819 = vsel %vm1818, %v1811, %v1815
  %v1820 = vand.u32 2147483647, %v1792
  %vm1821 = vcmp.eq.f32.partialorder %v1820, 8.507059e+37
  %v1822 = vand.u32 %v1792, 2147483648
  %v1823 = vor.u32 1.1754944e-38, %v1822
  %v1824 = vsel %vm1821, %v1823, %v1819
  %v1825 = vmul.f32 %v1784, %v1824
  %v1826 = vrcp.pop %v1795
  %v1827 = vmul.f32 %v1795, %v1826
  %v1828 = vsub.f32 1.0, %v1827
  %v1829 = vmul.f32 %v1826, %v1828
  %v1830 = vadd.f32 %v1826, %v1829
  %vm1831 = vweird.f32 %v1795
  %vm1832 = vweird.f32 %v1826
  %vm1833 = vmor %vm1831, %vm1832
  %v1834 = vsel %vm1833, %v1826, %v1830
  %v1835 = vand.u32 2147483647, %v1795
  %vm1836 = vcmp.eq.f32.partialorder %v1835, 8.507059e+37
  %v1837 = vand.u32 %v1795, 2147483648
  %v1838 = vor.u32 1.1754944e-38, %v1837
  %v1839 = vsel %vm1836, %v1838, %v1834
  %v1840 = vmul.f32 %v1786, %v1839
  %v1841 = vmul.f32 %v1810, 0.1
  %v1842 = vmul.f32 %v1825, 0.1
  %v1843 = vmul.f32 %v1840, 0.1
  %v1844 = vmul.f32 %v218, 0.9
  %v1845 = vmul.f32 %v219, 0.9
  %v1846 = vmul.f32 %v220, 0.9
  %v1847 = vadd.f32 %v1841, %v1844
  %v1848 = vadd.f32 %v1842, %v1845
  %v1849 = vadd.f32 %v1843, %v1846
  %v1851 = vsel %vm293, %v1847, 0
  %v1854 = vsel %vm293, %v1848, 0
  %v1857 = vsel %vm293, %v1849, 0
  %1859 = vmatpush.msra.mxu0 0.0
  %1860 = vmatpush.msra.mxu0 0.0
  %1861 = vmatpush.msra.mxu0 0.0
  %1862 = vmatpush.msra.mxu0 0.0
  %1863 = vmatpush.msra.mxu0 0.0
  %1864 = vmatpush.msra.mxu0 0.0
  %1865 = vmatpush.msra.mxu0 0.0
  %1866 = vmatpush.msra.mxu0 0.0
  %1867 = vmatpush.msra.mxu0 0.0
  %1868 = vmatpush.msra.mxu0 0.0
  %1869 = vmatpush.msra.mxu0 0.0
  %1870 = vmatpush.msra.mxu0 0.0
  %1871 = vmatpush.msra.mxu0 0.0
  %1872 = vmatpush.msra.mxu0 %v327
  %1873 = vmatpush.msra.mxu0 %v324
  %1874 = vmatpush.msra.mxu0 %v321
  %1875 = vmatmul.f32.gmra.mxu0 %v1851
  %v1876 = vpop.f32.mrf.mxu0
  %v1877 = vadd.f32 %v587, %v1876
  %1878 = vmatmul.f32.gmra.mxu0 %v1854
  %v1879 = vpop.f32.mrf.mxu0
  %v1880 = vadd.f32 %v587, %v1879
  %1881 = vmatmul.f32.gmra.mxu0 %v1857
  %v1882 = vpop.f32.mrf.mxu0
  %v1883 = vadd.f32 %v587, %v1882
  %1884 = vdwg.mxu0
  %1885 = vmatpush.xpose.msra.mxu0 0.0
  %1886 = vmatpush.xpose.msra.mxu0 0.0
  %1887 = vmatpush.xpose.msra.mxu0 0.0
  %1888 = vmatpush.xpose.msra.mxu0 0.0
  %1889 = vmatpush.xpose.msra.mxu0 0.0
  %1890 = vmatpush.xpose.msra.mxu0 0.0
  %1891 = vmatpush.xpose.msra.mxu0 0.0
  %1892 = vmatpush.xpose.msra.mxu0 0.0
  %1893 = vmatpush.xpose.msra.mxu0 0.0
  %1894 = vmatpush.xpose.msra.mxu0 0.0
  %1895 = vmatpush.xpose.msra.mxu0 0.0
  %1896 = vmatpush.xpose.msra.mxu0 0.0
  %1897 = vmatpush.xpose.msra.mxu0 0.0
  %1898 = vmatpush.xpose.msra.mxu0 0.0
  %1899 = vmatpush.xpose.msra.mxu0 %v837
  %1900 = vmatpush.xpose.msra.mxu0 %v834
  %1901 = vmatmul.f32.gmra.mxu0 %v1558
  %v1902 = vpop.f32.mrf.mxu0
  %v1903 = vadd.f32 0.0, %v1902
  %1904 = vdwg.mxu0
  %v1905 = vperm.slane %v1903, 0
  %v1906 = vadd.f32 %v1583, %v1905
  %v1907 = vadd.f32 %v1588, %v1905
  %v1908 = vadd.f32 %v1593, %v1905
  %vm1909 = vcmp.gt.f32.partialorder %v1906, 0.0
  %vm1910 = vcmp.gt.f32.partialorder %v1907, 0.0
  %vm1911 = vcmp.gt.f32.partialorder %v1908, 0.0
  %v1912 = vmul.f32 %v1906, 0.2
  %v1913 = vmul.f32 %v1907, 0.2
  %v1914 = vmul.f32 %v1908, 0.2
  %v1915 = vsel %vm1909, %v1906, %v1912
  %v1916 = vsel %vm1910, %v1907, %v1913
  %v1917 = vsel %vm1911, %v1908, %v1914
  %vm1918 = vcmp.gt.f32.partialorder %v221, 0.0
  %vm1919 = vcmp.gt.f32.partialorder %v222, 0.0
  %vm1920 = vcmp.gt.f32.partialorder %v223, 0.0
  %v1921 = vsel %vm1918, %v1915, -9e+15
  %v1922 = vsel %vm1919, %v1916, -9e+15
  %v1923 = vsel %vm1920, %v1917, -9e+15
  %v1924 = vsel %vm333, %v1921, -inf
  %1925 = vmax.xlane.f32.xlu0 %v1924
  %v1926 = vpop.xlane.xlu0 %1925
  %v1927 = vsel %vm333, %v1922, -inf
  %1928 = vmax.xlane.f32.xlu0 %v1927
  %v1929 = vpop.xlane.xlu0 %1928
  %v1930 = vsel %vm333, %v1923, -inf
  %1931 = vmax.xlane.f32.xlu0 %v1930
  %v1932 = vpop.xlane.xlu0 %1931
  %v1933 = vsub.f32 %v1921, %v1926
  %v1934 = vsub.f32 %v1922, %v1929
  %v1935 = vsub.f32 %v1923, %v1932
  %v1936 = vmul.f32 %v1933, 1.442695
  %v1937 = vpow.pop %v1936
  %v1938 = vmul.f32 %v1934, 1.442695
  %v1939 = vpow.pop %v1938
  %v1940 = vmul.f32 %v1935, 1.442695
  %v1941 = vpow.pop %v1940
  %v1942 = vsel %vm333, %v1937, 0.0
  %1943 = vadd.xlane.f32.xlu0 %v1942
  %v1944 = vpop.xlane.xlu0 %1943
  %v1945 = vsel %vm333, %v1939, 0.0
  %1946 = vadd.xlane.f32.xlu0 %v1945
  %v1947 = vpop.xlane.xlu0 %1946
  %v1948 = vsel %vm333, %v1941, 0.0
  %1949 = vadd.xlane.f32.xlu0 %v1948
  %v1950 = vpop.xlane.xlu0 %1949
  %v1951 = vrcp.pop %v1944
  %v1952 = vmul.f32 %v1944, %v1951
  %v1953 = vsub.f32 1.0, %v1952
  %v1954 = vmul.f32 %v1951, %v1953
  %v1955 = vadd.f32 %v1951, %v1954
  %vm1956 = vweird.f32 %v1944
  %vm1957 = vweird.f32 %v1951
  %vm1958 = vmor %vm1956, %vm1957
  %v1959 = vsel %vm1958, %v1951, %v1955
  %v1960 = vand.u32 2147483647, %v1944
  %vm1961 = vcmp.eq.f32.partialorder %v1960, 8.507059e+37
  %v1962 = vand.u32 %v1944, 2147483648
  %v1963 = vor.u32 1.1754944e-38, %v1962
  %v1964 = vsel %vm1961, %v1963, %v1959
  %v1965 = vmul.f32 %v1937, %v1964
  %v1966 = vrcp.pop %v1947
  %v1967 = vmul.f32 %v1947, %v1966
  %v1968 = vsub.f32 1.0, %v1967
  %v1969 = vmul.f32 %v1966, %v1968
  %v1970 = vadd.f32 %v1966, %v1969
  %vm1971 = vweird.f32 %v1947
  %vm1972 = vweird.f32 %v1966
  %vm1973 = vmor %vm1971, %vm1972
  %v1974 = vsel %vm1973, %v1966, %v1970
  %v1975 = vand.u32 2147483647, %v1947
  %vm1976 = vcmp.eq.f32.partialorder %v1975, 8.507059e+37
  %v1977 = vand.u32 %v1947, 2147483648
  %v1978 = vor.u32 1.1754944e-38, %v1977
  %v1979 = vsel %vm1976, %v1978, %v1974
  %v1980 = vmul.f32 %v1939, %v1979
  %v1981 = vrcp.pop %v1950
  %v1982 = vmul.f32 %v1950, %v1981
  %v1983 = vsub.f32 1.0, %v1982
  %v1984 = vmul.f32 %v1981, %v1983
  %v1985 = vadd.f32 %v1981, %v1984
  %vm1986 = vweird.f32 %v1950
  %vm1987 = vweird.f32 %v1981
  %vm1988 = vmor %vm1986, %vm1987
  %v1989 = vsel %vm1988, %v1981, %v1985
  %v1990 = vand.u32 2147483647, %v1950
  %vm1991 = vcmp.eq.f32.partialorder %v1990, 8.507059e+37
  %v1992 = vand.u32 %v1950, 2147483648
  %v1993 = vor.u32 1.1754944e-38, %v1992
  %v1994 = vsel %vm1991, %v1993, %v1989
  %v1995 = vmul.f32 %v1941, %v1994
  %v1996 = vmul.f32 %v1965, 0.1
  %v1997 = vmul.f32 %v1980, 0.1
  %v1998 = vmul.f32 %v1995, 0.1
  %v1999 = vmul.f32 %v221, 0.9
  %v2000 = vmul.f32 %v222, 0.9
  %v2001 = vmul.f32 %v223, 0.9
  %v2002 = vadd.f32 %v1996, %v1999
  %v2003 = vadd.f32 %v1997, %v2000
  %v2004 = vadd.f32 %v1998, %v2001
  %v2006 = vsel %vm333, %v2002, 0
  %v2009 = vsel %vm333, %v2003, 0
  %v2012 = vsel %vm333, %v2004, 0
  %2014 = vmatpush.msra.mxu0 0.0
  %2015 = vmatpush.msra.mxu0 0.0
  %2016 = vmatpush.msra.mxu0 0.0
  %2017 = vmatpush.msra.mxu0 0.0
  %2018 = vmatpush.msra.mxu0 0.0
  %2019 = vmatpush.msra.mxu0 0.0
  %2020 = vmatpush.msra.mxu0 0.0
  %2021 = vmatpush.msra.mxu0 0.0
  %2022 = vmatpush.msra.mxu0 0.0
  %2023 = vmatpush.msra.mxu0 0.0
  %2024 = vmatpush.msra.mxu0 0.0
  %2025 = vmatpush.msra.mxu0 0.0
  %2026 = vmatpush.msra.mxu0 0.0
  %2027 = vmatpush.msra.mxu0 0.0
  %2028 = vmatpush.msra.mxu0 %v361
  %2029 = vmatpush.msra.mxu0 %v358
  %2030 = vmatmul.f32.gmra.mxu0 %v2006
  %v2031 = vpop.f32.mrf.mxu0
  %v2032 = vadd.f32 %v587, %v2031
  %2033 = vmatmul.f32.gmra.mxu0 %v2009
  %v2034 = vpop.f32.mrf.mxu0
  %v2035 = vadd.f32 %v587, %v2034
  %2036 = vmatmul.f32.gmra.mxu0 %v2012
  %v2037 = vpop.f32.mrf.mxu0
  %v2038 = vadd.f32 %v587, %v2037
  %2039 = vdwg.mxu0
  %v2040 = vld [vmem:[%s51] sm:$0xff]
  %v2041 = vld [vmem:[%s51 + $0x8] sm:$0xff]
  %v2042 = vld [vmem:[%s51 + $0x10] sm:$0xff]
  %v2043 = vld [vmem:[%s51 + $0x18] sm:$0xff]
  %v2044 = vld [vmem:[%s57] sm:$0x1]
  %v2045 = vld [vmem:[%s63] sm:$0xff]
  %v2046 = vld [vmem:[%s63 + $0x8] sm:$0xff]
  %v2047 = vld [vmem:[%s63 + $0x10] sm:$0xff]
  %v2048 = vld [vmem:[%s63 + $0x18] sm:$0xff]
  %v2049 = vld [vmem:[%s63 + $0x20] sm:$0xff]
  %v2050 = vld [vmem:[%s63 + $0x28] sm:$0xff]
  %v2051 = vld [vmem:[%s63 + $0x30] sm:$0x3]
  %v2052 = vld [vmem:[%s69] sm:$0xff]
  %v2053 = vld [vmem:[%s69 + $0x8] sm:$0xff]
  %v2054 = vld [vmem:[%s69 + $0x10] sm:$0xff]
  %v2055 = vld [vmem:[%s69 + $0x18] sm:$0xff]
  %v2056 = vld [vmem:[%s69 + $0x20] sm:$0xff]
  %v2057 = vld [vmem:[%s69 + $0x28] sm:$0xff]
  %v2058 = vld [vmem:[%s69 + $0x30] sm:$0x3]
  %v2060 = vperm.slane %v2044, 0
  %v2063 = vsel %vm368, %v1722, 0
  %v2066 = vsel %vm368, %v1725, 0
  %v2069 = vsel %vm368, %v1728, 0
  %v2072 = vsel %vm368, %v1877, 0
  %v2075 = vsel %vm368, %v1880, 0
  %v2078 = vsel %vm368, %v1883, 0
  %v2081 = vsel %vm368, %v2032, 0
  %v2084 = vsel %vm368, %v2035, 0
  %v2087 = vsel %vm368, %v2038, 0
  %2089 = vmatpush.msra.mxu0 0.0
  %2090 = vmatpush.msra.mxu0 0.0
  %2091 = vmatpush.msra.mxu0 0.0
  %2092 = vmatpush.msra.mxu0 0.0
  %2093 = vmatpush.msra.mxu0 0.0
  %2094 = vmatpush.msra.mxu0 0.0
  %2095 = vmatpush.msra.mxu0 0.0
  %2096 = vmatpush.msra.mxu0 0.0
  %2097 = vmatpush.msra.mxu0 0.0
  %2098 = vmatpush.msra.mxu0 0.0
  %2099 = vmatpush.msra.mxu0 0.0
  %2100 = vmatpush.msra.mxu0 0.0
  %2101 = vmatpush.msra.mxu0 %v2043
  %2102 = vmatpush.msra.mxu0 %v2042
  %2103 = vmatpush.msra.mxu0 %v2041
  %2104 = vmatpush.msra.mxu0 %v2040
  %2105 = vmatmul.f32.gmra.mxu0 %v2063
  %v2106 = vpop.f32.mrf.mxu0
  %v2107 = vadd.f32 %v2060, %v2106
  %2108 = vmatmul.f32.gmra.mxu0 %v2066
  %v2109 = vpop.f32.mrf.mxu0
  %v2110 = vadd.f32 %v2060, %v2109
  %2111 = vmatmul.f32.gmra.mxu0 %v2069
  %v2112 = vpop.f32.mrf.mxu0
  %v2113 = vadd.f32 %v2060, %v2112
  %2114 = vmatmul.f32.gmra.mxu0 %v2072
  %v2115 = vpop.f32.mrf.mxu0
  %v2116 = vadd.f32 %v2060, %v2115
  %2117 = vmatmul.f32.gmra.mxu0 %v2075
  %v2118 = vpop.f32.mrf.mxu0
  %v2119 = vadd.f32 %v2060, %v2118
  %2120 = vmatmul.f32.gmra.mxu0 %v2078
  %v2121 = vpop.f32.mrf.mxu0
  %v2122 = vadd.f32 %v2060, %v2121
  %2123 = vmatmul.f32.gmra.mxu0 %v2081
  %v2124 = vpop.f32.mrf.mxu0
  %v2125 = vadd.f32 %v2060, %v2124
  %2126 = vmatmul.f32.gmra.mxu0 %v2084
  %v2127 = vpop.f32.mrf.mxu0
  %v2128 = vadd.f32 %v2060, %v2127
  %2129 = vmatmul.f32.gmra.mxu0 %v2087
  %v2130 = vpop.f32.mrf.mxu0
  %v2131 = vadd.f32 %v2060, %v2130
  %2132 = vdwg.mxu0
  %v2134 = vsel %vm1144, %v2107, 0
  %v2137 = vsel %vm1144, %v2110, 0
  %v2140 = vsel %vm1144, %v2113, 0
  %v2143 = vsel %vm1144, %v2116, 0
  %v2146 = vsel %vm1144, %v2119, 0
  %v2149 = vsel %vm1144, %v2122, 0
  %v2152 = vsel %vm1144, %v2125, 0
  %v2155 = vsel %vm1144, %v2128, 0
  %v2158 = vsel %vm1144, %v2131, 0
  %v2161 = vsel %vm1181, %v2058, 0
  %2163 = vmatpush.msra.mxu0 0.0
  %2164 = vmatpush.msra.mxu0 0.0
  %2165 = vmatpush.msra.mxu0 0.0
  %2166 = vmatpush.msra.mxu0 0.0
  %2167 = vmatpush.msra.mxu0 0.0
  %2168 = vmatpush.msra.mxu0 0.0
  %2169 = vmatpush.msra.mxu0 0.0
  %2170 = vmatpush.msra.mxu0 0.0
  %2171 = vmatpush.msra.mxu0 0.0
  %2172 = vmatpush.msra.mxu0 %v2161
  %2173 = vmatpush.msra.mxu0 %v2057
  %2174 = vmatpush.msra.mxu0 %v2056
  %2175 = vmatpush.msra.mxu0 %v2055
  %2176 = vmatpush.msra.mxu0 %v2054
  %2177 = vmatpush.msra.mxu0 %v2053
  %2178 = vmatpush.msra.mxu0 %v2052
  %2179 = vmatmul.f32.gmra.mxu0 %v2134
  %v2180 = vpop.f32.mrf.mxu0
  %v2181 = vadd.f32 0.0, %v2180
  %2182 = vmatmul.f32.gmra.mxu0 %v2137
  %v2183 = vpop.f32.mrf.mxu0
  %v2184 = vadd.f32 0.0, %v2183
  %2185 = vmatmul.f32.gmra.mxu0 %v2140
  %v2186 = vpop.f32.mrf.mxu0
  %v2187 = vadd.f32 0.0, %v2186
  %2188 = vmatmul.f32.gmra.mxu0 %v2143
  %v2189 = vpop.f32.mrf.mxu0
  %v2190 = vadd.f32 0.0, %v2189
  %2191 = vmatmul.f32.gmra.mxu0 %v2146
  %v2192 = vpop.f32.mrf.mxu0
  %v2193 = vadd.f32 0.0, %v2192
  %2194 = vmatmul.f32.gmra.mxu0 %v2149
  %v2195 = vpop.f32.mrf.mxu0
  %v2196 = vadd.f32 0.0, %v2195
  %2197 = vmatmul.f32.gmra.mxu0 %v2152
  %v2198 = vpop.f32.mrf.mxu0
  %v2199 = vadd.f32 0.0, %v2198
  %2200 = vmatmul.f32.gmra.mxu0 %v2155
  %v2201 = vpop.f32.mrf.mxu0
  %v2202 = vadd.f32 0.0, %v2201
  %2203 = vmatmul.f32.gmra.mxu0 %v2158
  %v2204 = vpop.f32.mrf.mxu0
  %v2205 = vadd.f32 0.0, %v2204
  %2206 = vdwg.mxu0
  %v2208 = vsel %vm1181, %v2051, 0
  %2210 = vmatpush.msra.mxu0 0.0
  %2211 = vmatpush.msra.mxu0 0.0
  %2212 = vmatpush.msra.mxu0 0.0
  %2213 = vmatpush.msra.mxu0 0.0
  %2214 = vmatpush.msra.mxu0 0.0
  %2215 = vmatpush.msra.mxu0 0.0
  %2216 = vmatpush.msra.mxu0 0.0
  %2217 = vmatpush.msra.mxu0 0.0
  %2218 = vmatpush.msra.mxu0 0.0
  %2219 = vmatpush.msra.mxu0 %v2208
  %2220 = vmatpush.msra.mxu0 %v2050
  %2221 = vmatpush.msra.mxu0 %v2049
  %2222 = vmatpush.msra.mxu0 %v2048
  %2223 = vmatpush.msra.mxu0 %v2047
  %2224 = vmatpush.msra.mxu0 %v2046
  %2225 = vmatpush.msra.mxu0 %v2045
  %2226 = vmatmul.f32.gmra.mxu0 %v2143
  %v2227 = vpop.f32.mrf.mxu0
  %v2228 = vadd.f32 0.0, %v2227
  %2229 = vmatmul.f32.gmra.mxu0 %v2146
  %v2230 = vpop.f32.mrf.mxu0
  %v2231 = vadd.f32 0.0, %v2230
  %2232 = vmatmul.f32.gmra.mxu0 %v2149
  %v2233 = vpop.f32.mrf.mxu0
  %v2234 = vadd.f32 0.0, %v2233
  %2235 = vdwg.mxu0
  %v2236 = vadd.f32 %v2228, %v2181
  %v2237 = vadd.f32 %v2231, %v2184
  %v2238 = vadd.f32 %v2234, %v2187
  %vm2239 = vcmp.gt.f32.partialorder %v2236, 0.0
  %vm2240 = vcmp.gt.f32.partialorder %v2237, 0.0
  %vm2241 = vcmp.gt.f32.partialorder %v2238, 0.0
  %v2242 = vmul.f32 %v2236, 0.2
  %v2243 = vmul.f32 %v2237, 0.2
  %v2244 = vmul.f32 %v2238, 0.2
  %v2245 = vsel %vm2239, %v2236, %v2242
  %v2246 = vsel %vm2240, %v2237, %v2243
  %v2247 = vsel %vm2241, %v2238, %v2244
  %v2248 = vadd.f32 %v2228, %v2190
  %v2249 = vadd.f32 %v2231, %v2193
  %v2250 = vadd.f32 %v2234, %v2196
  %vm2251 = vcmp.gt.f32.partialorder %v2248, 0.0
  %vm2252 = vcmp.gt.f32.partialorder %v2249, 0.0
  %vm2253 = vcmp.gt.f32.partialorder %v2250, 0.0
  %v2254 = vmul.f32 %v2248, 0.2
  %v2255 = vmul.f32 %v2249, 0.2
  %v2256 = vmul.f32 %v2250, 0.2
  %v2257 = vsel %vm2251, %v2248, %v2254
  %v2258 = vsel %vm2252, %v2249, %v2255
  %v2259 = vsel %vm2253, %v2250, %v2256
  %v2260 = vadd.f32 %v2228, %v2199
  %v2261 = vadd.f32 %v2231, %v2202
  %v2262 = vadd.f32 %v2234, %v2205
  %vm2263 = vcmp.gt.f32.partialorder %v2260, 0.0
  %vm2264 = vcmp.gt.f32.partialorder %v2261, 0.0
  %vm2265 = vcmp.gt.f32.partialorder %v2262, 0.0
  %v2266 = vmul.f32 %v2260, 0.2
  %v2267 = vmul.f32 %v2261, 0.2
  %v2268 = vmul.f32 %v2262, 0.2
  %v2269 = vsel %vm2263, %v2260, %v2266
  %v2270 = vsel %vm2264, %v2261, %v2267
  %v2271 = vsel %vm2265, %v2262, %v2268
  %v2272 = vmax.f32 %v2245, %v2257
  %v2273 = vmax.f32 %v2246, %v2258
  %v2274 = vmax.f32 %v2247, %v2259
  %v2275 = vmax.f32 %v2272, %v2269
  %v2276 = vmax.f32 %v2273, %v2270
  %v2277 = vmax.f32 %v2274, %v2271
  %v2278 = vsub.f32 %v2245, %v2275
  %v2279 = vsub.f32 %v2246, %v2276
  %v2280 = vsub.f32 %v2247, %v2277
  %v2281 = vmul.f32 %v2278, 1.442695
  %v2282 = vpow.pop %v2281
  %v2283 = vmul.f32 %v2279, 1.442695
  %v2284 = vpow.pop %v2283
  %v2285 = vmul.f32 %v2280, 1.442695
  %v2286 = vpow.pop %v2285
  %v2287 = vsub.f32 %v2257, %v2275
  %v2288 = vsub.f32 %v2258, %v2276
  %v2289 = vsub.f32 %v2259, %v2277
  %v2290 = vmul.f32 %v2287, 1.442695
  %v2291 = vpow.pop %v2290
  %v2292 = vmul.f32 %v2288, 1.442695
  %v2293 = vpow.pop %v2292
  %v2294 = vmul.f32 %v2289, 1.442695
  %v2295 = vpow.pop %v2294
  %v2296 = vsub.f32 %v2269, %v2275
  %v2297 = vsub.f32 %v2270, %v2276
  %v2298 = vsub.f32 %v2271, %v2277
  %v2299 = vmul.f32 %v2296, 1.442695
  %v2300 = vpow.pop %v2299
  %v2301 = vmul.f32 %v2297, 1.442695
  %v2302 = vpow.pop %v2301
  %v2303 = vmul.f32 %v2298, 1.442695
  %v2304 = vpow.pop %v2303
  %v2305 = vadd.f32 %v2282, %v2291
  %v2306 = vadd.f32 %v2284, %v2293
  %v2307 = vadd.f32 %v2286, %v2295
  %v2308 = vadd.f32 %v2305, %v2300
  %v2309 = vadd.f32 %v2306, %v2302
  %v2310 = vadd.f32 %v2307, %v2304
  %v2311 = vrcp.pop %v2308
  %v2312 = vmul.f32 %v2308, %v2311
  %v2313 = vsub.f32 1.0, %v2312
  %v2314 = vmul.f32 %v2311, %v2313
  %v2315 = vadd.f32 %v2311, %v2314
  %vm2316 = vweird.f32 %v2308
  %vm2317 = vweird.f32 %v2311
  %vm2318 = vmor %vm2316, %vm2317
  %v2319 = vsel %vm2318, %v2311, %v2315
  %v2320 = vand.u32 2147483647, %v2308
  %vm2321 = vcmp.eq.f32.partialorder %v2320, 8.507059e+37
  %v2322 = vand.u32 %v2308, 2147483648
  %v2323 = vor.u32 1.1754944e-38, %v2322
  %v2324 = vsel %vm2321, %v2323, %v2319
  %v2325 = vmul.f32 1.0, %v2324
  %v2326 = vrcp.pop %v2309
  %v2327 = vmul.f32 %v2309, %v2326
  %v2328 = vsub.f32 1.0, %v2327
  %v2329 = vmul.f32 %v2326, %v2328
  %v2330 = vadd.f32 %v2326, %v2329
  %vm2331 = vweird.f32 %v2309
  %vm2332 = vweird.f32 %v2326
  %vm2333 = vmor %vm2331, %vm2332
  %v2334 = vsel %vm2333, %v2326, %v2330
  %v2335 = vand.u32 2147483647, %v2309
  %vm2336 = vcmp.eq.f32.partialorder %v2335, 8.507059e+37
  %v2337 = vand.u32 %v2309, 2147483648
  %v2338 = vor.u32 1.1754944e-38, %v2337
  %v2339 = vsel %vm2336, %v2338, %v2334
  %v2340 = vmul.f32 1.0, %v2339
  %v2341 = vrcp.pop %v2310
  %v2342 = vmul.f32 %v2310, %v2341
  %v2343 = vsub.f32 1.0, %v2342
  %v2344 = vmul.f32 %v2341, %v2343
  %v2345 = vadd.f32 %v2341, %v2344
  %vm2346 = vweird.f32 %v2310
  %vm2347 = vweird.f32 %v2341
  %vm2348 = vmor %vm2346, %vm2347
  %v2349 = vsel %vm2348, %v2341, %v2345
  %v2350 = vand.u32 2147483647, %v2310
  %vm2351 = vcmp.eq.f32.partialorder %v2350, 8.507059e+37
  %v2352 = vand.u32 %v2310, 2147483648
  %v2353 = vor.u32 1.1754944e-38, %v2352
  %v2354 = vsel %vm2351, %v2353, %v2349
  %v2355 = vmul.f32 1.0, %v2354
  %v2356 = vmul.f32 %v2282, %v2325
  %v2357 = vmul.f32 %v2284, %v2340
  %v2358 = vmul.f32 %v2286, %v2355
  %2360 = vset.pattern.permute.xlu0 0
  %2361 = vperm.xlu0 %2360, %v2356
  %v2362 = vpop.permute.xlu0 %2361
  %2365 = vset.pattern.permute.xlu0 0
  %2366 = vperm.xlu0 %2365, %v2357
  %v2367 = vpop.permute.xlu0 %2366
  %2370 = vset.pattern.permute.xlu0 0
  %2371 = vperm.xlu0 %2370, %v2358
  %v2372 = vpop.permute.xlu0 %2371
  %v2374 = vmul.f32 %v2362, %v1722
  %v2375 = vmul.f32 %v2367, %v1725
  %v2376 = vmul.f32 %v2372, %v1728
  %v2377 = vmul.f32 %v2291, %v2325
  %v2378 = vmul.f32 %v2293, %v2340
  %v2379 = vmul.f32 %v2295, %v2355
  %2381 = vset.pattern.permute.xlu0 0
  %2382 = vperm.xlu0 %2381, %v2377
  %v2383 = vpop.permute.xlu0 %2382
  %2386 = vset.pattern.permute.xlu0 0
  %2387 = vperm.xlu0 %2386, %v2378
  %v2388 = vpop.permute.xlu0 %2387
  %2391 = vset.pattern.permute.xlu0 0
  %2392 = vperm.xlu0 %2391, %v2379
  %v2393 = vpop.permute.xlu0 %2392
  %v2395 = vmul.f32 %v2383, %v1877
  %v2396 = vmul.f32 %v2388, %v1880
  %v2397 = vmul.f32 %v2393, %v1883
  %v2398 = vadd.f32 %v2374, %v2395
  %v2399 = vadd.f32 %v2375, %v2396
  %v2400 = vadd.f32 %v2376, %v2397
  %v2401 = vmul.f32 %v2300, %v2325
  %v2402 = vmul.f32 %v2302, %v2340
  %v2403 = vmul.f32 %v2304, %v2355
  %2405 = vset.pattern.permute.xlu0 0
  %2406 = vperm.xlu0 %2405, %v2401
  %v2407 = vpop.permute.xlu0 %2406
  %2410 = vset.pattern.permute.xlu0 0
  %2411 = vperm.xlu0 %2410, %v2402
  %v2412 = vpop.permute.xlu0 %2411
  %2415 = vset.pattern.permute.xlu0 0
  %2416 = vperm.xlu0 %2415, %v2403
  %v2417 = vpop.permute.xlu0 %2416
  %v2419 = vmul.f32 %v2407, %v2032
  %v2420 = vmul.f32 %v2412, %v2035
  %v2421 = vmul.f32 %v2417, %v2038
  %v2422 = vadd.f32 %v2398, %v2419
  %v2423 = vadd.f32 %v2399, %v2420
  %v2424 = vadd.f32 %v2400, %v2421
  %v2425 = vmax.f32 %v2422, 0.0
  %v2426 = vmax.f32 %v2423, 0.0
  %v2427 = vmax.f32 %v2424, 0.0
  %v2428 = vld [vmem:[%s37] sm:$0xff]
  %v2429 = vld [vmem:[%s37 + $0x8] sm:$0xff]
  %v2430 = vld [vmem:[%s37 + $0x10] sm:$0xff]
  %v2431 = vld [vmem:[%s37 + $0x18] sm:$0xff]
  %v2432 = vld [vmem:[%s43] sm:$0x1]
  %2433 = vmatpush.msra.mxu0 0.0
  %2434 = vmatpush.msra.mxu0 0.0
  %2435 = vmatpush.msra.mxu0 0.0
  %2436 = vmatpush.msra.mxu0 0.0
  %2437 = vmatpush.msra.mxu0 0.0
  %2438 = vmatpush.msra.mxu0 0.0
  %2439 = vmatpush.msra.mxu0 0.0
  %2440 = vmatpush.msra.mxu0 0.0
  %2441 = vmatpush.msra.mxu0 0.0
  %2442 = vmatpush.msra.mxu0 0.0
  %2443 = vmatpush.msra.mxu0 0.0
  %2444 = vmatpush.msra.mxu0 0.0
  %2445 = vmatpush.msra.mxu0 %v2431
  %2446 = vmatpush.msra.mxu0 %v2430
  %2447 = vmatpush.msra.mxu0 %v2429
  %2448 = vmatpush.msra.mxu0 %v2428
  %2449 = vmatmul.f32.gmra.mxu0 %v834
  %v2450 = vpop.f32.mrf.mxu0
  %v2451 = vadd.f32 0.0, %v2450
  %2452 = vmatmul.f32.gmra.mxu0 %v837
  %v2453 = vpop.f32.mrf.mxu0
  %v2454 = vadd.f32 0.0, %v2453
  %2455 = vdwg.mxu0
  %v2457 = vsel %vm368, %v2432, 0
  %2459 = vmatpush.xpose.msra.mxu0 0.0
  %2460 = vmatpush.xpose.msra.mxu0 0.0
  %2461 = vmatpush.xpose.msra.mxu0 0.0
  %2462 = vmatpush.xpose.msra.mxu0 0.0
  %2463 = vmatpush.xpose.msra.mxu0 0.0
  %2464 = vmatpush.xpose.msra.mxu0 0.0
  %2465 = vmatpush.xpose.msra.mxu0 0.0
  %2466 = vmatpush.xpose.msra.mxu0 0.0
  %2467 = vmatpush.xpose.msra.mxu0 0.0
  %2468 = vmatpush.xpose.msra.mxu0 0.0
  %2469 = vmatpush.xpose.msra.mxu0 0.0
  %2470 = vmatpush.xpose.msra.mxu0 0.0
  %2471 = vmatpush.xpose.msra.mxu0 %v379
  %2472 = vmatpush.xpose.msra.mxu0 %v376
  %2473 = vmatpush.xpose.msra.mxu0 %v373
  %2474 = vmatpush.xpose.msra.mxu0 %v370
  %2475 = vmatmul.f32.gmra.mxu0 %v2457
  %v2476 = vpop.f32.mrf.mxu0
  %v2477 = vadd.f32 0.0, %v2476
  %2478 = vdwg.mxu0
  %2480 = vset.pattern.permute.xlu0 0
  %2481 = vperm.xlu0 %2480, %v2451
  %v2482 = vpop.permute.xlu0 %2481
  %2485 = vset.pattern.permute.xlu0 0
  %2486 = vperm.xlu0 %2485, %v2454
  %v2487 = vpop.permute.xlu0 %2486
  %v2489 = vperm.slane %v2477, 0
  %v2490 = vadd.f32 %v2482, %v2489
  %v2491 = vadd.f32 %v2487, %v2489
  %vm2492 = vcmp.gt.f32.partialorder %v2490, 0.0
  %vm2493 = vcmp.gt.f32.partialorder %v2491, 0.0
  %v2494 = vmul.f32 %v2490, 0.2
  %v2495 = vmul.f32 %v2491, 0.2
  %v2496 = vsel %vm2492, %v2490, %v2494
  %v2497 = vsel %vm2493, %v2491, %v2495
  %vm2498 = vcmp.gt.f32.partialorder %v224, 0.0
  %vm2499 = vcmp.gt.f32.partialorder %v225, 0.0
  %v2500 = vsel %vm2498, %v2496, -9e+15
  %v2501 = vsel %vm2499, %v2497, -9e+15
  %v2502 = vsel %vm368, %v2500, -inf
  %2503 = vmax.xlane.f32.xlu0 %v2502
  %v2504 = vpop.xlane.xlu0 %2503
  %v2505 = vsel %vm368, %v2501, -inf
  %2506 = vmax.xlane.f32.xlu0 %v2505
  %v2507 = vpop.xlane.xlu0 %2506
  %v2508 = vsub.f32 %v2500, %v2504
  %v2509 = vsub.f32 %v2501, %v2507
  %v2510 = vmul.f32 %v2508, 1.442695
  %v2511 = vpow.pop %v2510
  %v2512 = vmul.f32 %v2509, 1.442695
  %v2513 = vpow.pop %v2512
  %v2514 = vsel %vm368, %v2511, 0.0
  %2515 = vadd.xlane.f32.xlu0 %v2514
  %v2516 = vpop.xlane.xlu0 %2515
  %v2517 = vsel %vm368, %v2513, 0.0
  %2518 = vadd.xlane.f32.xlu0 %v2517
  %v2519 = vpop.xlane.xlu0 %2518
  %v2520 = vrcp.pop %v2516
  %v2521 = vmul.f32 %v2516, %v2520
  %v2522 = vsub.f32 1.0, %v2521
  %v2523 = vmul.f32 %v2520, %v2522
  %v2524 = vadd.f32 %v2520, %v2523
  %vm2525 = vweird.f32 %v2516
  %vm2526 = vweird.f32 %v2520
  %vm2527 = vmor %vm2525, %vm2526
  %v2528 = vsel %vm2527, %v2520, %v2524
  %v2529 = vand.u32 2147483647, %v2516
  %vm2530 = vcmp.eq.f32.partialorder %v2529, 8.507059e+37
  %v2531 = vand.u32 %v2516, 2147483648
  %v2532 = vor.u32 1.1754944e-38, %v2531
  %v2533 = vsel %vm2530, %v2532, %v2528
  %v2534 = vmul.f32 %v2511, %v2533
  %v2535 = vrcp.pop %v2519
  %v2536 = vmul.f32 %v2519, %v2535
  %v2537 = vsub.f32 1.0, %v2536
  %v2538 = vmul.f32 %v2535, %v2537
  %v2539 = vadd.f32 %v2535, %v2538
  %vm2540 = vweird.f32 %v2519
  %vm2541 = vweird.f32 %v2535
  %vm2542 = vmor %vm2540, %vm2541
  %v2543 = vsel %vm2542, %v2535, %v2539
  %v2544 = vand.u32 2147483647, %v2519
  %vm2545 = vcmp.eq.f32.partialorder %v2544, 8.507059e+37
  %v2546 = vand.u32 %v2519, 2147483648
  %v2547 = vor.u32 1.1754944e-38, %v2546
  %v2548 = vsel %vm2545, %v2547, %v2543
  %v2549 = vmul.f32 %v2513, %v2548
  %v2550 = vmul.f32 %v2534, 0.1
  %v2551 = vmul.f32 %v2549, 0.1
  %v2552 = vmul.f32 %v224, 0.9
  %v2553 = vmul.f32 %v225, 0.9
  %v2554 = vadd.f32 %v2550, %v2552
  %v2555 = vadd.f32 %v2551, %v2553
  %v2557 = vsel %vm368, %v2554, 0
  %v2560 = vsel %vm368, %v2555, 0
  %2562 = vmatpush.msra.mxu0 0.0
  %2563 = vmatpush.msra.mxu0 0.0
  %2564 = vmatpush.msra.mxu0 0.0
  %2565 = vmatpush.msra.mxu0 0.0
  %2566 = vmatpush.msra.mxu0 0.0
  %2567 = vmatpush.msra.mxu0 0.0
  %2568 = vmatpush.msra.mxu0 0.0
  %2569 = vmatpush.msra.mxu0 0.0
  %2570 = vmatpush.msra.mxu0 0.0
  %2571 = vmatpush.msra.mxu0 0.0
  %2572 = vmatpush.msra.mxu0 0.0
  %2573 = vmatpush.msra.mxu0 0.0
  %2574 = vmatpush.msra.mxu0 %v285
  %2575 = vmatpush.msra.mxu0 %v282
  %2576 = vmatpush.msra.mxu0 %v279
  %2577 = vmatpush.msra.mxu0 %v276
  %2578 = vmatmul.f32.gmra.mxu0 %v2557
  %v2579 = vpop.f32.mrf.mxu0
  %v2580 = vadd.f32 %v587, %v2579
  %2581 = vmatmul.f32.gmra.mxu0 %v2560
  %v2582 = vpop.f32.mrf.mxu0
  %v2583 = vadd.f32 %v587, %v2582
  %2584 = vdwg.mxu0
  %2585 = vmatpush.xpose.msra.mxu0 0.0
  %2586 = vmatpush.xpose.msra.mxu0 0.0
  %2587 = vmatpush.xpose.msra.mxu0 0.0
  %2588 = vmatpush.xpose.msra.mxu0 0.0
  %2589 = vmatpush.xpose.msra.mxu0 0.0
  %2590 = vmatpush.xpose.msra.mxu0 0.0
  %2591 = vmatpush.xpose.msra.mxu0 0.0
  %2592 = vmatpush.xpose.msra.mxu0 0.0
  %2593 = vmatpush.xpose.msra.mxu0 0.0
  %2594 = vmatpush.xpose.msra.mxu0 0.0
  %2595 = vmatpush.xpose.msra.mxu0 0.0
  %2596 = vmatpush.xpose.msra.mxu0 0.0
  %2597 = vmatpush.xpose.msra.mxu0 0.0
  %2598 = vmatpush.xpose.msra.mxu0 %v637
  %2599 = vmatpush.xpose.msra.mxu0 %v634
  %2600 = vmatpush.xpose.msra.mxu0 %v631
  %2601 = vmatmul.f32.gmra.mxu0 %v2457
  %v2602 = vpop.f32.mrf.mxu0
  %v2603 = vadd.f32 0.0, %v2602
  %2604 = vdwg.mxu0
  %v2605 = vperm.slane %v2603, 0
  %v2606 = vadd.f32 %v2482, %v2605
  %v2607 = vadd.f32 %v2487, %v2605
  %vm2608 = vcmp.gt.f32.partialorder %v2606, 0.0
  %vm2609 = vcmp.gt.f32.partialorder %v2607, 0.0
  %v2610 = vmul.f32 %v2606, 0.2
  %v2611 = vmul.f32 %v2607, 0.2
  %v2612 = vsel %vm2608, %v2606, %v2610
  %v2613 = vsel %vm2609, %v2607, %v2611
  %vm2614 = vcmp.gt.f32.partialorder %v226, 0.0
  %vm2615 = vcmp.gt.f32.partialorder %v227, 0.0
  %v2616 = vsel %vm2614, %v2612, -9e+15
  %v2617 = vsel %vm2615, %v2613, -9e+15
  %v2618 = vsel %vm293, %v2616, -inf
  %2619 = vmax.xlane.f32.xlu0 %v2618
  %v2620 = vpop.xlane.xlu0 %2619
  %v2621 = vsel %vm293, %v2617, -inf
  %2622 = vmax.xlane.f32.xlu0 %v2621
  %v2623 = vpop.xlane.xlu0 %2622
  %v2624 = vsub.f32 %v2616, %v2620
  %v2625 = vsub.f32 %v2617, %v2623
  %v2626 = vmul.f32 %v2624, 1.442695
  %v2627 = vpow.pop %v2626
  %v2628 = vmul.f32 %v2625, 1.442695
  %v2629 = vpow.pop %v2628
  %v2630 = vsel %vm293, %v2627, 0.0
  %2631 = vadd.xlane.f32.xlu0 %v2630
  %v2632 = vpop.xlane.xlu0 %2631
  %v2633 = vsel %vm293, %v2629, 0.0
  %2634 = vadd.xlane.f32.xlu0 %v2633
  %v2635 = vpop.xlane.xlu0 %2634
  %v2636 = vrcp.pop %v2632
  %v2637 = vmul.f32 %v2632, %v2636
  %v2638 = vsub.f32 1.0, %v2637
  %v2639 = vmul.f32 %v2636, %v2638
  %v2640 = vadd.f32 %v2636, %v2639
  %vm2641 = vweird.f32 %v2632
  %vm2642 = vweird.f32 %v2636
  %vm2643 = vmor %vm2641, %vm2642
  %v2644 = vsel %vm2643, %v2636, %v2640
  %v2645 = vand.u32 2147483647, %v2632
  %vm2646 = vcmp.eq.f32.partialorder %v2645, 8.507059e+37
  %v2647 = vand.u32 %v2632, 2147483648
  %v2648 = vor.u32 1.1754944e-38, %v2647
  %v2649 = vsel %vm2646, %v2648, %v2644
  %v2650 = vmul.f32 %v2627, %v2649
  %v2651 = vrcp.pop %v2635
  %v2652 = vmul.f32 %v2635, %v2651
  %v2653 = vsub.f32 1.0, %v2652
  %v2654 = vmul.f32 %v2651, %v2653
  %v2655 = vadd.f32 %v2651, %v2654
  %vm2656 = vweird.f32 %v2635
  %vm2657 = vweird.f32 %v2651
  %vm2658 = vmor %vm2656, %vm2657
  %v2659 = vsel %vm2658, %v2651, %v2655
  %v2660 = vand.u32 2147483647, %v2635
  %vm2661 = vcmp.eq.f32.partialorder %v2660, 8.507059e+37
  %v2662 = vand.u32 %v2635, 2147483648
  %v2663 = vor.u32 1.1754944e-38, %v2662
  %v2664 = vsel %vm2661, %v2663, %v2659
  %v2665 = vmul.f32 %v2629, %v2664
  %v2666 = vmul.f32 %v2650, 0.1
  %v2667 = vmul.f32 %v2665, 0.1
  %v2668 = vmul.f32 %v226, 0.9
  %v2669 = vmul.f32 %v227, 0.9
  %v2670 = vadd.f32 %v2666, %v2668
  %v2671 = vadd.f32 %v2667, %v2669
  %v2673 = vsel %vm293, %v2670, 0
  %v2676 = vsel %vm293, %v2671, 0
  %2678 = vmatpush.msra.mxu0 0.0
  %2679 = vmatpush.msra.mxu0 0.0
  %2680 = vmatpush.msra.mxu0 0.0
  %2681 = vmatpush.msra.mxu0 0.0
  %2682 = vmatpush.msra.mxu0 0.0
  %2683 = vmatpush.msra.mxu0 0.0
  %2684 = vmatpush.msra.mxu0 0.0
  %2685 = vmatpush.msra.mxu0 0.0
  %2686 = vmatpush.msra.mxu0 0.0
  %2687 = vmatpush.msra.mxu0 0.0
  %2688 = vmatpush.msra.mxu0 0.0
  %2689 = vmatpush.msra.mxu0 0.0
  %2690 = vmatpush.msra.mxu0 0.0
  %2691 = vmatpush.msra.mxu0 %v327
  %2692 = vmatpush.msra.mxu0 %v324
  %2693 = vmatpush.msra.mxu0 %v321
  %2694 = vmatmul.f32.gmra.mxu0 %v2673
  %v2695 = vpop.f32.mrf.mxu0
  %v2696 = vadd.f32 %v587, %v2695
  %2697 = vmatmul.f32.gmra.mxu0 %v2676
  %v2698 = vpop.f32.mrf.mxu0
  %v2699 = vadd.f32 %v587, %v2698
  %2700 = vdwg.mxu0
  %2701 = vmatpush.xpose.msra.mxu0 0.0
  %2702 = vmatpush.xpose.msra.mxu0 0.0
  %2703 = vmatpush.xpose.msra.mxu0 0.0
  %2704 = vmatpush.xpose.msra.mxu0 0.0
  %2705 = vmatpush.xpose.msra.mxu0 0.0
  %2706 = vmatpush.xpose.msra.mxu0 0.0
  %2707 = vmatpush.xpose.msra.mxu0 0.0
  %2708 = vmatpush.xpose.msra.mxu0 0.0
  %2709 = vmatpush.xpose.msra.mxu0 0.0
  %2710 = vmatpush.xpose.msra.mxu0 0.0
  %2711 = vmatpush.xpose.msra.mxu0 0.0
  %2712 = vmatpush.xpose.msra.mxu0 0.0
  %2713 = vmatpush.xpose.msra.mxu0 0.0
  %2714 = vmatpush.xpose.msra.mxu0 0.0
  %2715 = vmatpush.xpose.msra.mxu0 %v837
  %2716 = vmatpush.xpose.msra.mxu0 %v834
  %2717 = vmatmul.f32.gmra.mxu0 %v2457
  %v2718 = vpop.f32.mrf.mxu0
  %v2719 = vadd.f32 0.0, %v2718
  %2720 = vdwg.mxu0
  %v2721 = vperm.slane %v2719, 0
  %v2722 = vadd.f32 %v2482, %v2721
  %v2723 = vadd.f32 %v2487, %v2721
  %vm2724 = vcmp.gt.f32.partialorder %v2722, 0.0
  %vm2725 = vcmp.gt.f32.partialorder %v2723, 0.0
  %v2726 = vmul.f32 %v2722, 0.2
  %v2727 = vmul.f32 %v2723, 0.2
  %v2728 = vsel %vm2724, %v2722, %v2726
  %v2729 = vsel %vm2725, %v2723, %v2727
  %vm2730 = vcmp.gt.f32.partialorder %v228, 0.0
  %vm2731 = vcmp.gt.f32.partialorder %v229, 0.0
  %v2732 = vsel %vm2730, %v2728, -9e+15
  %v2733 = vsel %vm2731, %v2729, -9e+15
  %v2734 = vsel %vm333, %v2732, -inf
  %2735 = vmax.xlane.f32.xlu0 %v2734
  %v2736 = vpop.xlane.xlu0 %2735
  %v2737 = vsel %vm333, %v2733, -inf
  %2738 = vmax.xlane.f32.xlu0 %v2737
  %v2739 = vpop.xlane.xlu0 %2738
  %v2740 = vsub.f32 %v2732, %v2736
  %v2741 = vsub.f32 %v2733, %v2739
  %v2742 = vmul.f32 %v2740, 1.442695
  %v2743 = vpow.pop %v2742
  %v2744 = vmul.f32 %v2741, 1.442695
  %v2745 = vpow.pop %v2744
  %v2746 = vsel %vm333, %v2743, 0.0
  %2747 = vadd.xlane.f32.xlu0 %v2746
  %v2748 = vpop.xlane.xlu0 %2747
  %v2749 = vsel %vm333, %v2745, 0.0
  %2750 = vadd.xlane.f32.xlu0 %v2749
  %v2751 = vpop.xlane.xlu0 %2750
  %v2752 = vrcp.pop %v2748
  %v2753 = vmul.f32 %v2748, %v2752
  %v2754 = vsub.f32 1.0, %v2753
  %v2755 = vmul.f32 %v2752, %v2754
  %v2756 = vadd.f32 %v2752, %v2755
  %vm2757 = vweird.f32 %v2748
  %vm2758 = vweird.f32 %v2752
  %vm2759 = vmor %vm2757, %vm2758
  %v2760 = vsel %vm2759, %v2752, %v2756
  %v2761 = vand.u32 2147483647, %v2748
  %vm2762 = vcmp.eq.f32.partialorder %v2761, 8.507059e+37
  %v2763 = vand.u32 %v2748, 2147483648
  %v2764 = vor.u32 1.1754944e-38, %v2763
  %v2765 = vsel %vm2762, %v2764, %v2760
  %v2766 = vmul.f32 %v2743, %v2765
  %v2767 = vrcp.pop %v2751
  %v2768 = vmul.f32 %v2751, %v2767
  %v2769 = vsub.f32 1.0, %v2768
  %v2770 = vmul.f32 %v2767, %v2769
  %v2771 = vadd.f32 %v2767, %v2770
  %vm2772 = vweird.f32 %v2751
  %vm2773 = vweird.f32 %v2767
  %vm2774 = vmor %vm2772, %vm2773
  %v2775 = vsel %vm2774, %v2767, %v2771
  %v2776 = vand.u32 2147483647, %v2751
  %vm2777 = vcmp.eq.f32.partialorder %v2776, 8.507059e+37
  %v2778 = vand.u32 %v2751, 2147483648
  %v2779 = vor.u32 1.1754944e-38, %v2778
  %v2780 = vsel %vm2777, %v2779, %v2775
  %v2781 = vmul.f32 %v2745, %v2780
  %v2782 = vmul.f32 %v2766, 0.1
  %v2783 = vmul.f32 %v2781, 0.1
  %v2784 = vmul.f32 %v228, 0.9
  %v2785 = vmul.f32 %v229, 0.9
  %v2786 = vadd.f32 %v2782, %v2784
  %v2787 = vadd.f32 %v2783, %v2785
  %v2789 = vsel %vm333, %v2786, 0
  %v2792 = vsel %vm333, %v2787, 0
  %2794 = vmatpush.msra.mxu0 0.0
  %2795 = vmatpush.msra.mxu0 0.0
  %2796 = vmatpush.msra.mxu0 0.0
  %2797 = vmatpush.msra.mxu0 0.0
  %2798 = vmatpush.msra.mxu0 0.0
  %2799 = vmatpush.msra.mxu0 0.0
  %2800 = vmatpush.msra.mxu0 0.0
  %2801 = vmatpush.msra.mxu0 0.0
  %2802 = vmatpush.msra.mxu0 0.0
  %2803 = vmatpush.msra.mxu0 0.0
  %2804 = vmatpush.msra.mxu0 0.0
  %2805 = vmatpush.msra.mxu0 0.0
  %2806 = vmatpush.msra.mxu0 0.0
  %2807 = vmatpush.msra.mxu0 0.0
  %2808 = vmatpush.msra.mxu0 %v361
  %2809 = vmatpush.msra.mxu0 %v358
  %2810 = vmatmul.f32.gmra.mxu0 %v2789
  %v2811 = vpop.f32.mrf.mxu0
  %v2812 = vadd.f32 %v587, %v2811
  %2813 = vmatmul.f32.gmra.mxu0 %v2792
  %v2814 = vpop.f32.mrf.mxu0
  %v2815 = vadd.f32 %v587, %v2814
  %2816 = vdwg.mxu0
  %v2817 = vld [vmem:[%s53] sm:$0xff]
  %v2818 = vld [vmem:[%s53 + $0x8] sm:$0xff]
  %v2819 = vld [vmem:[%s53 + $0x10] sm:$0xff]
  %v2820 = vld [vmem:[%s53 + $0x18] sm:$0xff]
  %v2821 = vld [vmem:[%s59] sm:$0x1]
  %v2822 = vld [vmem:[%s65] sm:$0xff]
  %v2823 = vld [vmem:[%s65 + $0x8] sm:$0xff]
  %v2824 = vld [vmem:[%s65 + $0x10] sm:$0xff]
  %v2825 = vld [vmem:[%s65 + $0x18] sm:$0xff]
  %v2826 = vld [vmem:[%s65 + $0x20] sm:$0xff]
  %v2827 = vld [vmem:[%s65 + $0x28] sm:$0xff]
  %v2828 = vld [vmem:[%s65 + $0x30] sm:$0x3]
  %v2829 = vld [vmem:[%s71] sm:$0xff]
  %v2830 = vld [vmem:[%s71 + $0x8] sm:$0xff]
  %v2831 = vld [vmem:[%s71 + $0x10] sm:$0xff]
  %v2832 = vld [vmem:[%s71 + $0x18] sm:$0xff]
  %v2833 = vld [vmem:[%s71 + $0x20] sm:$0xff]
  %v2834 = vld [vmem:[%s71 + $0x28] sm:$0xff]
  %v2835 = vld [vmem:[%s71 + $0x30] sm:$0x3]
  %v2837 = vperm.slane %v2821, 0
  %v2840 = vsel %vm368, %v2580, 0
  %v2843 = vsel %vm368, %v2583, 0
  %v2846 = vsel %vm368, %v2696, 0
  %v2849 = vsel %vm368, %v2699, 0
  %v2852 = vsel %vm368, %v2812, 0
  %v2855 = vsel %vm368, %v2815, 0
  %2857 = vmatpush.msra.mxu0 0.0
  %2858 = vmatpush.msra.mxu0 0.0
  %2859 = vmatpush.msra.mxu0 0.0
  %2860 = vmatpush.msra.mxu0 0.0
  %2861 = vmatpush.msra.mxu0 0.0
  %2862 = vmatpush.msra.mxu0 0.0
  %2863 = vmatpush.msra.mxu0 0.0
  %2864 = vmatpush.msra.mxu0 0.0
  %2865 = vmatpush.msra.mxu0 0.0
  %2866 = vmatpush.msra.mxu0 0.0
  %2867 = vmatpush.msra.mxu0 0.0
  %2868 = vmatpush.msra.mxu0 0.0
  %2869 = vmatpush.msra.mxu0 %v2820
  %2870 = vmatpush.msra.mxu0 %v2819
  %2871 = vmatpush.msra.mxu0 %v2818
  %2872 = vmatpush.msra.mxu0 %v2817
  %2873 = vmatmul.f32.gmra.mxu0 %v2840
  %v2874 = vpop.f32.mrf.mxu0
  %v2875 = vadd.f32 %v2837, %v2874
  %2876 = vmatmul.f32.gmra.mxu0 %v2843
  %v2877 = vpop.f32.mrf.mxu0
  %v2878 = vadd.f32 %v2837, %v2877
  %2879 = vmatmul.f32.gmra.mxu0 %v2846
  %v2880 = vpop.f32.mrf.mxu0
  %v2881 = vadd.f32 %v2837, %v2880
  %2882 = vmatmul.f32.gmra.mxu0 %v2849
  %v2883 = vpop.f32.mrf.mxu0
  %v2884 = vadd.f32 %v2837, %v2883
  %2885 = vmatmul.f32.gmra.mxu0 %v2852
  %v2886 = vpop.f32.mrf.mxu0
  %v2887 = vadd.f32 %v2837, %v2886
  %2888 = vmatmul.f32.gmra.mxu0 %v2855
  %v2889 = vpop.f32.mrf.mxu0
  %v2890 = vadd.f32 %v2837, %v2889
  %2891 = vdwg.mxu0
  %v2893 = vsel %vm1144, %v2875, 0
  %v2896 = vsel %vm1144, %v2878, 0
  %v2899 = vsel %vm1144, %v2881, 0
  %v2902 = vsel %vm1144, %v2884, 0
  %v2905 = vsel %vm1144, %v2887, 0
  %v2908 = vsel %vm1144, %v2890, 0
  %v2911 = vsel %vm1181, %v2835, 0
  %2913 = vmatpush.msra.mxu0 0.0
  %2914 = vmatpush.msra.mxu0 0.0
  %2915 = vmatpush.msra.mxu0 0.0
  %2916 = vmatpush.msra.mxu0 0.0
  %2917 = vmatpush.msra.mxu0 0.0
  %2918 = vmatpush.msra.mxu0 0.0
  %2919 = vmatpush.msra.mxu0 0.0
  %2920 = vmatpush.msra.mxu0 0.0
  %2921 = vmatpush.msra.mxu0 0.0
  %2922 = vmatpush.msra.mxu0 %v2911
  %2923 = vmatpush.msra.mxu0 %v2834
  %2924 = vmatpush.msra.mxu0 %v2833
  %2925 = vmatpush.msra.mxu0 %v2832
  %2926 = vmatpush.msra.mxu0 %v2831
  %2927 = vmatpush.msra.mxu0 %v2830
  %2928 = vmatpush.msra.mxu0 %v2829
  %2929 = vmatmul.f32.gmra.mxu0 %v2893
  %v2930 = vpop.f32.mrf.mxu0
  %v2931 = vadd.f32 0.0, %v2930
  %2932 = vmatmul.f32.gmra.mxu0 %v2896
  %v2933 = vpop.f32.mrf.mxu0
  %v2934 = vadd.f32 0.0, %v2933
  %2935 = vmatmul.f32.gmra.mxu0 %v2899
  %v2936 = vpop.f32.mrf.mxu0
  %v2937 = vadd.f32 0.0, %v2936
  %2938 = vmatmul.f32.gmra.mxu0 %v2902
  %v2939 = vpop.f32.mrf.mxu0
  %v2940 = vadd.f32 0.0, %v2939
  %2941 = vmatmul.f32.gmra.mxu0 %v2905
  %v2942 = vpop.f32.mrf.mxu0
  %v2943 = vadd.f32 0.0, %v2942
  %2944 = vmatmul.f32.gmra.mxu0 %v2908
  %v2945 = vpop.f32.mrf.mxu0
  %v2946 = vadd.f32 0.0, %v2945
  %2947 = vdwg.mxu0
  %v2949 = vsel %vm1181, %v2828, 0
  %2951 = vmatpush.msra.mxu0 0.0
  %2952 = vmatpush.msra.mxu0 0.0
  %2953 = vmatpush.msra.mxu0 0.0
  %2954 = vmatpush.msra.mxu0 0.0
  %2955 = vmatpush.msra.mxu0 0.0
  %2956 = vmatpush.msra.mxu0 0.0
  %2957 = vmatpush.msra.mxu0 0.0
  %2958 = vmatpush.msra.mxu0 0.0
  %2959 = vmatpush.msra.mxu0 0.0
  %2960 = vmatpush.msra.mxu0 %v2949
  %2961 = vmatpush.msra.mxu0 %v2827
  %2962 = vmatpush.msra.mxu0 %v2826
  %2963 = vmatpush.msra.mxu0 %v2825
  %2964 = vmatpush.msra.mxu0 %v2824
  %2965 = vmatpush.msra.mxu0 %v2823
  %2966 = vmatpush.msra.mxu0 %v2822
  %2967 = vmatmul.f32.gmra.mxu0 %v2905
  %v2968 = vpop.f32.mrf.mxu0
  %v2969 = vadd.f32 0.0, %v2968
  %2970 = vmatmul.f32.gmra.mxu0 %v2908
  %v2971 = vpop.f32.mrf.mxu0
  %v2972 = vadd.f32 0.0, %v2971
  %2973 = vdwg.mxu0
  %v2974 = vadd.f32 %v2969, %v2931
  %v2975 = vadd.f32 %v2972, %v2934
  %vm2976 = vcmp.gt.f32.partialorder %v2974, 0.0
  %vm2977 = vcmp.gt.f32.partialorder %v2975, 0.0
  %v2978 = vmul.f32 %v2974, 0.2
  %v2979 = vmul.f32 %v2975, 0.2
  %v2980 = vsel %vm2976, %v2974, %v2978
  %v2981 = vsel %vm2977, %v2975, %v2979
  %v2982 = vadd.f32 %v2969, %v2937
  %v2983 = vadd.f32 %v2972, %v2940
  %vm2984 = vcmp.gt.f32.partialorder %v2982, 0.0
  %vm2985 = vcmp.gt.f32.partialorder %v2983, 0.0
  %v2986 = vmul.f32 %v2982, 0.2
  %v2987 = vmul.f32 %v2983, 0.2
  %v2988 = vsel %vm2984, %v2982, %v2986
  %v2989 = vsel %vm2985, %v2983, %v2987
  %v2990 = vadd.f32 %v2969, %v2943
  %v2991 = vadd.f32 %v2972, %v2946
  %vm2992 = vcmp.gt.f32.partialorder %v2990, 0.0
  %vm2993 = vcmp.gt.f32.partialorder %v2991, 0.0
  %v2994 = vmul.f32 %v2990, 0.2
  %v2995 = vmul.f32 %v2991, 0.2
  %v2996 = vsel %vm2992, %v2990, %v2994
  %v2997 = vsel %vm2993, %v2991, %v2995
  %v2998 = vmax.f32 %v2980, %v2988
  %v2999 = vmax.f32 %v2981, %v2989
  %v3000 = vmax.f32 %v2998, %v2996
  %v3001 = vmax.f32 %v2999, %v2997
  %v3002 = vsub.f32 %v2980, %v3000
  %v3003 = vsub.f32 %v2981, %v3001
  %v3004 = vmul.f32 %v3002, 1.442695
  %v3005 = vpow.pop %v3004
  %v3006 = vmul.f32 %v3003, 1.442695
  %v3007 = vpow.pop %v3006
  %v3008 = vsub.f32 %v2988, %v3000
  %v3009 = vsub.f32 %v2989, %v3001
  %v3010 = vmul.f32 %v3008, 1.442695
  %v3011 = vpow.pop %v3010
  %v3012 = vmul.f32 %v3009, 1.442695
  %v3013 = vpow.pop %v3012
  %v3014 = vsub.f32 %v2996, %v3000
  %v3015 = vsub.f32 %v2997, %v3001
  %v3016 = vmul.f32 %v3014, 1.442695
  %v3017 = vpow.pop %v3016
  %v3018 = vmul.f32 %v3015, 1.442695
  %v3019 = vpow.pop %v3018
  %v3020 = vadd.f32 %v3005, %v3011
  %v3021 = vadd.f32 %v3007, %v3013
  %v3022 = vadd.f32 %v3020, %v3017
  %v3023 = vadd.f32 %v3021, %v3019
  %v3024 = vrcp.pop %v3022
  %v3025 = vmul.f32 %v3022, %v3024
  %v3026 = vsub.f32 1.0, %v3025
  %v3027 = vmul.f32 %v3024, %v3026
  %v3028 = vadd.f32 %v3024, %v3027
  %vm3029 = vweird.f32 %v3022
  %vm3030 = vweird.f32 %v3024
  %vm3031 = vmor %vm3029, %vm3030
  %v3032 = vsel %vm3031, %v3024, %v3028
  %v3033 = vand.u32 2147483647, %v3022
  %vm3034 = vcmp.eq.f32.partialorder %v3033, 8.507059e+37
  %v3035 = vand.u32 %v3022, 2147483648
  %v3036 = vor.u32 1.1754944e-38, %v3035
  %v3037 = vsel %vm3034, %v3036, %v3032
  %v3038 = vmul.f32 1.0, %v3037
  %v3039 = vrcp.pop %v3023
  %v3040 = vmul.f32 %v3023, %v3039
  %v3041 = vsub.f32 1.0, %v3040
  %v3042 = vmul.f32 %v3039, %v3041
  %v3043 = vadd.f32 %v3039, %v3042
  %vm3044 = vweird.f32 %v3023
  %vm3045 = vweird.f32 %v3039
  %vm3046 = vmor %vm3044, %vm3045
  %v3047 = vsel %vm3046, %v3039, %v3043
  %v3048 = vand.u32 2147483647, %v3023
  %vm3049 = vcmp.eq.f32.partialorder %v3048, 8.507059e+37
  %v3050 = vand.u32 %v3023, 2147483648
  %v3051 = vor.u32 1.1754944e-38, %v3050
  %v3052 = vsel %vm3049, %v3051, %v3047
  %v3053 = vmul.f32 1.0, %v3052
  %v3054 = vmul.f32 %v3005, %v3038
  %v3055 = vmul.f32 %v3007, %v3053
  %3057 = vset.pattern.permute.xlu0 0
  %3058 = vperm.xlu0 %3057, %v3054
  %v3059 = vpop.permute.xlu0 %3058
  %3062 = vset.pattern.permute.xlu0 0
  %3063 = vperm.xlu0 %3062, %v3055
  %v3064 = vpop.permute.xlu0 %3063
  %v3066 = vmul.f32 %v3059, %v2580
  %v3067 = vmul.f32 %v3064, %v2583
  %v3068 = vmul.f32 %v3011, %v3038
  %v3069 = vmul.f32 %v3013, %v3053
  %3071 = vset.pattern.permute.xlu0 0
  %3072 = vperm.xlu0 %3071, %v3068
  %v3073 = vpop.permute.xlu0 %3072
  %3076 = vset.pattern.permute.xlu0 0
  %3077 = vperm.xlu0 %3076, %v3069
  %v3078 = vpop.permute.xlu0 %3077
  %v3080 = vmul.f32 %v3073, %v2696
  %v3081 = vmul.f32 %v3078, %v2699
  %v3082 = vadd.f32 %v3066, %v3080
  %v3083 = vadd.f32 %v3067, %v3081
  %v3084 = vmul.f32 %v3017, %v3038
  %v3085 = vmul.f32 %v3019, %v3053
  %3087 = vset.pattern.permute.xlu0 0
  %3088 = vperm.xlu0 %3087, %v3084
  %v3089 = vpop.permute.xlu0 %3088
  %3092 = vset.pattern.permute.xlu0 0
  %3093 = vperm.xlu0 %3092, %v3085
  %v3094 = vpop.permute.xlu0 %3093
  %v3096 = vmul.f32 %v3089, %v2812
  %v3097 = vmul.f32 %v3094, %v2815
  %v3098 = vadd.f32 %v3082, %v3096
  %v3099 = vadd.f32 %v3083, %v3097
  %v3100 = vmax.f32 %v3098, 0.0
  %v3101 = vmax.f32 %v3099, 0.0
  %v3103 = vsel %vm368, %v1522, 0
  %v3106 = vsel %vm368, %v1523, 0
  %v3109 = vsel %vm368, %v1524, 0
  %v3112 = vsel %vm368, %v1525, 0
  %3114 = vmatpush.msra.mxu0 0.0
  %3115 = vmatpush.msra.mxu0 0.0
  %3116 = vmatpush.msra.mxu0 0.0
  %3117 = vmatpush.msra.mxu0 0.0
  %3118 = vmatpush.msra.mxu0 0.0
  %3119 = vmatpush.msra.mxu0 0.0
  %3120 = vmatpush.msra.mxu0 0.0
  %3121 = vmatpush.msra.mxu0 0.0
  %3122 = vmatpush.msra.mxu0 0.0
  %3123 = vmatpush.msra.mxu0 0.0
  %3124 = vmatpush.msra.mxu0 0.0
  %3125 = vmatpush.msra.mxu0 0.0
  %3126 = vmatpush.msra.mxu0 %v234
  %3127 = vmatpush.msra.mxu0 %v233
  %3128 = vmatpush.msra.mxu0 %v232
  %3129 = vmatpush.msra.mxu0 %v231
  %3130 = vmatmul.f32.gmra.mxu0 %v3103
  %v3131 = vpop.f32.mrf.mxu0
  %v3132 = vadd.f32 0.0, %v3131
  %3133 = vmatmul.f32.gmra.mxu0 %v3106
  %v3134 = vpop.f32.mrf.mxu0
  %v3135 = vadd.f32 0.0, %v3134
  %3136 = vmatmul.f32.gmra.mxu0 %v3109
  %v3137 = vpop.f32.mrf.mxu0
  %v3138 = vadd.f32 0.0, %v3137
  %3139 = vmatmul.f32.gmra.mxu0 %v3112
  %v3140 = vpop.f32.mrf.mxu0
  %v3141 = vadd.f32 0.0, %v3140
  %3142 = vdwg.mxu0
  %v3144 = vsel %vm368, %v2425, 0
  %v3147 = vsel %vm368, %v2426, 0
  %v3150 = vsel %vm368, %v2427, 0
  %3152 = vmatpush.msra.mxu0 0.0
  %3153 = vmatpush.msra.mxu0 0.0
  %3154 = vmatpush.msra.mxu0 0.0
  %3155 = vmatpush.msra.mxu0 0.0
  %3156 = vmatpush.msra.mxu0 0.0
  %3157 = vmatpush.msra.mxu0 0.0
  %3158 = vmatpush.msra.mxu0 0.0
  %3159 = vmatpush.msra.mxu0 0.0
  %3160 = vmatpush.msra.mxu0 0.0
  %3161 = vmatpush.msra.mxu0 0.0
  %3162 = vmatpush.msra.mxu0 0.0
  %3163 = vmatpush.msra.mxu0 0.0
  %3164 = vmatpush.msra.mxu0 %v234
  %3165 = vmatpush.msra.mxu0 %v233
  %3166 = vmatpush.msra.mxu0 %v232
  %3167 = vmatpush.msra.mxu0 %v231
  %3168 = vmatmul.f32.gmra.mxu0 %v3144
  %v3169 = vpop.f32.mrf.mxu0
  %v3170 = vadd.f32 0.0, %v3169
  %3171 = vmatmul.f32.gmra.mxu0 %v3147
  %v3172 = vpop.f32.mrf.mxu0
  %v3173 = vadd.f32 0.0, %v3172
  %3174 = vmatmul.f32.gmra.mxu0 %v3150
  %v3175 = vpop.f32.mrf.mxu0
  %v3176 = vadd.f32 0.0, %v3175
  %3177 = vdwg.mxu0
  %v3179 = vsel %vm368, %v3100, 0
  %v3182 = vsel %vm368, %v3101, 0
  %3184 = vmatpush.msra.mxu0 0.0
  %3185 = vmatpush.msra.mxu0 0.0
  %3186 = vmatpush.msra.mxu0 0.0
  %3187 = vmatpush.msra.mxu0 0.0
  %3188 = vmatpush.msra.mxu0 0.0
  %3189 = vmatpush.msra.mxu0 0.0
  %3190 = vmatpush.msra.mxu0 0.0
  %3191 = vmatpush.msra.mxu0 0.0
  %3192 = vmatpush.msra.mxu0 0.0
  %3193 = vmatpush.msra.mxu0 0.0
  %3194 = vmatpush.msra.mxu0 0.0
  %3195 = vmatpush.msra.mxu0 0.0
  %3196 = vmatpush.msra.mxu0 %v234
  %3197 = vmatpush.msra.mxu0 %v233
  %3198 = vmatpush.msra.mxu0 %v232
  %3199 = vmatpush.msra.mxu0 %v231
  %3200 = vmatmul.f32.gmra.mxu0 %v3179
  %v3201 = vpop.f32.mrf.mxu0
  %v3202 = vadd.f32 0.0, %v3201
  %3203 = vmatmul.f32.gmra.mxu0 %v3182
  %v3204 = vpop.f32.mrf.mxu0
  %v3205 = vadd.f32 0.0, %v3204
  %3206 = vdwg.mxu0
  %v3208 = vperm.slane %v235, 0
  %v3211 = vsel %vm368, %v203, 0
  %v3214 = vsel %vm368, %v204, 0
  %v3217 = vsel %vm368, %v205, 0
  %v3220 = vsel %vm368, %v206, 0
  %3222 = vmatpush.msra.mxu0 0.0
  %3223 = vmatpush.msra.mxu0 0.0
  %3224 = vmatpush.msra.mxu0 0.0
  %3225 = vmatpush.msra.mxu0 0.0
  %3226 = vmatpush.msra.mxu0 0.0
  %3227 = vmatpush.msra.mxu0 0.0
  %3228 = vmatpush.msra.mxu0 0.0
  %3229 = vmatpush.msra.mxu0 0.0
  %3230 = vmatpush.msra.mxu0 0.0
  %3231 = vmatpush.msra.mxu0 0.0
  %3232 = vmatpush.msra.mxu0 0.0
  %3233 = vmatpush.msra.mxu0 0.0
  %3234 = vmatpush.msra.mxu0 %v3141
  %3235 = vmatpush.msra.mxu0 %v3138
  %3236 = vmatpush.msra.mxu0 %v3135
  %3237 = vmatpush.msra.mxu0 %v3132
  %3238 = vmatmul.f32.gmra.mxu0 %v3211
  %v3239 = vpop.f32.mrf.mxu0
  %v3240 = vadd.f32 %v3208, %v3239
  %3241 = vmatmul.f32.gmra.mxu0 %v3214
  %v3242 = vpop.f32.mrf.mxu0
  %v3243 = vadd.f32 %v3208, %v3242
  %3244 = vmatmul.f32.gmra.mxu0 %v3217
  %v3245 = vpop.f32.mrf.mxu0
  %v3246 = vadd.f32 %v3208, %v3245
  %3247 = vmatmul.f32.gmra.mxu0 %v3220
  %v3248 = vpop.f32.mrf.mxu0
  %v3249 = vadd.f32 %v3208, %v3248
  %3250 = vdwg.mxu0
  %v3252 = vsel %vm293, %v207, 0
  %v3255 = vsel %vm293, %v208, 0
  %v3258 = vsel %vm293, %v209, 0
  %v3261 = vsel %vm293, %v210, 0
  %3263 = vmatpush.msra.mxu0 0.0
  %3264 = vmatpush.msra.mxu0 0.0
  %3265 = vmatpush.msra.mxu0 0.0
  %3266 = vmatpush.msra.mxu0 0.0
  %3267 = vmatpush.msra.mxu0 0.0
  %3268 = vmatpush.msra.mxu0 0.0
  %3269 = vmatpush.msra.mxu0 0.0
  %3270 = vmatpush.msra.mxu0 0.0
  %3271 = vmatpush.msra.mxu0 0.0
  %3272 = vmatpush.msra.mxu0 0.0
  %3273 = vmatpush.msra.mxu0 0.0
  %3274 = vmatpush.msra.mxu0 0.0
  %3275 = vmatpush.msra.mxu0 0.0
  %3276 = vmatpush.msra.mxu0 %v3176
  %3277 = vmatpush.msra.mxu0 %v3173
  %3278 = vmatpush.msra.mxu0 %v3170
  %3279 = vmatmul.f32.gmra.mxu0 %v3252
  %v3280 = vpop.f32.mrf.mxu0
  %v3281 = vadd.f32 %v3208, %v3280
  %3282 = vmatmul.f32.gmra.mxu0 %v3255
  %v3283 = vpop.f32.mrf.mxu0
  %v3284 = vadd.f32 %v3208, %v3283
  %3285 = vmatmul.f32.gmra.mxu0 %v3258
  %v3286 = vpop.f32.mrf.mxu0
  %v3287 = vadd.f32 %v3208, %v3286
  %3288 = vmatmul.f32.gmra.mxu0 %v3261
  %v3289 = vpop.f32.mrf.mxu0
  %v3290 = vadd.f32 %v3208, %v3289
  %3291 = vdwg.mxu0
  %v3293 = vsel %vm333, %v211, 0
  %v3296 = vsel %vm333, %v212, 0
  %v3299 = vsel %vm333, %v213, 0
  %v3302 = vsel %vm333, %v214, 0
  %3304 = vmatpush.msra.mxu0 0.0
  %3305 = vmatpush.msra.mxu0 0.0
  %3306 = vmatpush.msra.mxu0 0.0
  %3307 = vmatpush.msra.mxu0 0.0
  %3308 = vmatpush.msra.mxu0 0.0
  %3309 = vmatpush.msra.mxu0 0.0
  %3310 = vmatpush.msra.mxu0 0.0
  %3311 = vmatpush.msra.mxu0 0.0
  %3312 = vmatpush.msra.mxu0 0.0
  %3313 = vmatpush.msra.mxu0 0.0
  %3314 = vmatpush.msra.mxu0 0.0
  %3315 = vmatpush.msra.mxu0 0.0
  %3316 = vmatpush.msra.mxu0 0.0
  %3317 = vmatpush.msra.mxu0 0.0
  %3318 = vmatpush.msra.mxu0 %v3205
  %3319 = vmatpush.msra.mxu0 %v3202
  %3320 = vmatmul.f32.gmra.mxu0 %v3293
  %v3321 = vpop.f32.mrf.mxu0
  %v3322 = vadd.f32 %v3208, %v3321
  %3323 = vmatmul.f32.gmra.mxu0 %v3296
  %v3324 = vpop.f32.mrf.mxu0
  %v3325 = vadd.f32 %v3208, %v3324
  %3326 = vmatmul.f32.gmra.mxu0 %v3299
  %v3327 = vpop.f32.mrf.mxu0
  %v3328 = vadd.f32 %v3208, %v3327
  %3329 = vmatmul.f32.gmra.mxu0 %v3302
  %v3330 = vpop.f32.mrf.mxu0
  %v3331 = vadd.f32 %v3208, %v3330
  %3332 = vdwg.mxu0
  %v3333 = vld [vmem:[%s73] sm:$0x3f]
  %v3334 = vld [vmem:[%s79] sm:$0x1]
  %v3335 = vld [vmem:[%s85] sm:$0xff]
  %v3336 = vld [vmem:[%s85 + $0x8] sm:$0xff]
  %v3337 = vld [vmem:[%s85 + $0x10] sm:$0xff]
  %v3338 = vld [vmem:[%s85 + $0x18] sm:$0xff]
  %v3339 = vld [vmem:[%s85 + $0x20] sm:$0xff]
  %v3340 = vld [vmem:[%s85 + $0x28] sm:$0xff]
  %v3341 = vld [vmem:[%s85 + $0x30] sm:$0x3]
  %v3342 = vld [vmem:[%s91] sm:$0xff]
  %v3343 = vld [vmem:[%s91 + $0x8] sm:$0xff]
  %v3344 = vld [vmem:[%s91 + $0x10] sm:$0xff]
  %v3345 = vld [vmem:[%s91 + $0x18] sm:$0xff]
  %v3346 = vld [vmem:[%s91 + $0x20] sm:$0xff]
  %v3347 = vld [vmem:[%s91 + $0x28] sm:$0xff]
  %v3348 = vld [vmem:[%s91 + $0x30] sm:$0x3]
  %v3350 = vperm.slane %v3334, 0
  %vm3352 = vcmask 48128
  %v3354 = vsel %vm3352, %v3240, 0
  %v3357 = vsel %vm3352, %v3243, 0
  %v3360 = vsel %vm3352, %v3246, 0
  %v3363 = vsel %vm3352, %v3249, 0
  %v3366 = vsel %vm3352, %v3281, 0
  %v3369 = vsel %vm3352, %v3284, 0
  %v3372 = vsel %vm3352, %v3287, 0
  %v3375 = vsel %vm3352, %v3290, 0
  %v3378 = vsel %vm3352, %v3322, 0
  %v3381 = vsel %vm3352, %v3325, 0
  %v3384 = vsel %vm3352, %v3328, 0
  %v3387 = vsel %vm3352, %v3331, 0
  %vm3389 = vcmask 1045504
  %v3391 = vsel %vm3389, %v3333, 0
  %3393 = vmatpush.msra.mxu0 0.0
  %3394 = vmatpush.msra.mxu0 0.0
  %3395 = vmatpush.msra.mxu0 0.0
  %3396 = vmatpush.msra.mxu0 0.0
  %3397 = vmatpush.msra.mxu0 0.0
  %3398 = vmatpush.msra.mxu0 0.0
  %3399 = vmatpush.msra.mxu0 0.0
  %3400 = vmatpush.msra.mxu0 0.0
  %3401 = vmatpush.msra.mxu0 0.0
  %3402 = vmatpush.msra.mxu0 0.0
  %3403 = vmatpush.msra.mxu0 0.0
  %3404 = vmatpush.msra.mxu0 0.0
  %3405 = vmatpush.msra.mxu0 0.0
  %3406 = vmatpush.msra.mxu0 0.0
  %3407 = vmatpush.msra.mxu0 0.0
  %3408 = vmatpush.msra.mxu0 %v3391
  %3409 = vmatmul.f32.gmra.mxu0 %v3354
  %v3410 = vpop.f32.mrf.mxu0
  %v3411 = vadd.f32 %v3350, %v3410
  %3412 = vmatmul.f32.gmra.mxu0 %v3357
  %v3413 = vpop.f32.mrf.mxu0
  %v3414 = vadd.f32 %v3350, %v3413
  %3415 = vmatmul.f32.gmra.mxu0 %v3360
  %v3416 = vpop.f32.mrf.mxu0
  %v3417 = vadd.f32 %v3350, %v3416
  %3418 = vmatmul.f32.gmra.mxu0 %v3363
  %v3419 = vpop.f32.mrf.mxu0
  %v3420 = vadd.f32 %v3350, %v3419
  %3421 = vmatmul.f32.gmra.mxu0 %v3366
  %v3422 = vpop.f32.mrf.mxu0
  %v3423 = vadd.f32 %v3350, %v3422
  %3424 = vmatmul.f32.gmra.mxu0 %v3369
  %v3425 = vpop.f32.mrf.mxu0
  %v3426 = vadd.f32 %v3350, %v3425
  %3427 = vmatmul.f32.gmra.mxu0 %v3372
  %v3428 = vpop.f32.mrf.mxu0
  %v3429 = vadd.f32 %v3350, %v3428
  %3430 = vmatmul.f32.gmra.mxu0 %v3375
  %v3431 = vpop.f32.mrf.mxu0
  %v3432 = vadd.f32 %v3350, %v3431
  %3433 = vmatmul.f32.gmra.mxu0 %v3378
  %v3434 = vpop.f32.mrf.mxu0
  %v3435 = vadd.f32 %v3350, %v3434
  %3436 = vmatmul.f32.gmra.mxu0 %v3381
  %v3437 = vpop.f32.mrf.mxu0
  %v3438 = vadd.f32 %v3350, %v3437
  %3439 = vmatmul.f32.gmra.mxu0 %v3384
  %v3440 = vpop.f32.mrf.mxu0
  %v3441 = vadd.f32 %v3350, %v3440
  %3442 = vmatmul.f32.gmra.mxu0 %v3387
  %v3443 = vpop.f32.mrf.mxu0
  %v3444 = vadd.f32 %v3350, %v3443
  %3445 = vdwg.mxu0
  %v3447 = vsel %vm1144, %v3411, 0
  %v3450 = vsel %vm1144, %v3414, 0
  %v3453 = vsel %vm1144, %v3417, 0
  %v3456 = vsel %vm1144, %v3420, 0
  %v3459 = vsel %vm1144, %v3423, 0
  %v3462 = vsel %vm1144, %v3426, 0
  %v3465 = vsel %vm1144, %v3429, 0
  %v3468 = vsel %vm1144, %v3432, 0
  %v3471 = vsel %vm1144, %v3435, 0
  %v3474 = vsel %vm1144, %v3438, 0
  %v3477 = vsel %vm1144, %v3441, 0
  %v3480 = vsel %vm1144, %v3444, 0
  %v3483 = vsel %vm1181, %v3348, 0
  %3485 = vmatpush.msra.mxu0 0.0
  %3486 = vmatpush.msra.mxu0 0.0
  %3487 = vmatpush.msra.mxu0 0.0
  %3488 = vmatpush.msra.mxu0 0.0
  %3489 = vmatpush.msra.mxu0 0.0
  %3490 = vmatpush.msra.mxu0 0.0
  %3491 = vmatpush.msra.mxu0 0.0
  %3492 = vmatpush.msra.mxu0 0.0
  %3493 = vmatpush.msra.mxu0 0.0
  %3494 = vmatpush.msra.mxu0 %v3483
  %3495 = vmatpush.msra.mxu0 %v3347
  %3496 = vmatpush.msra.mxu0 %v3346
  %3497 = vmatpush.msra.mxu0 %v3345
  %3498 = vmatpush.msra.mxu0 %v3344
  %3499 = vmatpush.msra.mxu0 %v3343
  %3500 = vmatpush.msra.mxu0 %v3342
  %3501 = vmatmul.f32.gmra.mxu0 %v3447
  %v3502 = vpop.f32.mrf.mxu0
  %v3503 = vadd.f32 0.0, %v3502
  %3504 = vmatmul.f32.gmra.mxu0 %v3450
  %v3505 = vpop.f32.mrf.mxu0
  %v3506 = vadd.f32 0.0, %v3505
  %3507 = vmatmul.f32.gmra.mxu0 %v3453
  %v3508 = vpop.f32.mrf.mxu0
  %v3509 = vadd.f32 0.0, %v3508
  %3510 = vmatmul.f32.gmra.mxu0 %v3456
  %v3511 = vpop.f32.mrf.mxu0
  %v3512 = vadd.f32 0.0, %v3511
  %3513 = vmatmul.f32.gmra.mxu0 %v3459
  %v3514 = vpop.f32.mrf.mxu0
  %v3515 = vadd.f32 0.0, %v3514
  %3516 = vmatmul.f32.gmra.mxu0 %v3462
  %v3517 = vpop.f32.mrf.mxu0
  %v3518 = vadd.f32 0.0, %v3517
  %3519 = vmatmul.f32.gmra.mxu0 %v3465
  %v3520 = vpop.f32.mrf.mxu0
  %v3521 = vadd.f32 0.0, %v3520
  %3522 = vmatmul.f32.gmra.mxu0 %v3468
  %v3523 = vpop.f32.mrf.mxu0
  %v3524 = vadd.f32 0.0, %v3523
  %3525 = vmatmul.f32.gmra.mxu0 %v3471
  %v3526 = vpop.f32.mrf.mxu0
  %v3527 = vadd.f32 0.0, %v3526
  %3528 = vmatmul.f32.gmra.mxu0 %v3474
  %v3529 = vpop.f32.mrf.mxu0
  %v3530 = vadd.f32 0.0, %v3529
  %3531 = vmatmul.f32.gmra.mxu0 %v3477
  %v3532 = vpop.f32.mrf.mxu0
  %v3533 = vadd.f32 0.0, %v3532
  %3534 = vmatmul.f32.gmra.mxu0 %v3480
  %v3535 = vpop.f32.mrf.mxu0
  %v3536 = vadd.f32 0.0, %v3535
  %3537 = vdwg.mxu0
  %v3539 = vsel %vm1181, %v3341, 0
  %3541 = vmatpush.msra.mxu0 0.0
  %3542 = vmatpush.msra.mxu0 0.0
  %3543 = vmatpush.msra.mxu0 0.0
  %3544 = vmatpush.msra.mxu0 0.0
  %3545 = vmatpush.msra.mxu0 0.0
  %3546 = vmatpush.msra.mxu0 0.0
  %3547 = vmatpush.msra.mxu0 0.0
  %3548 = vmatpush.msra.mxu0 0.0
  %3549 = vmatpush.msra.mxu0 0.0
  %3550 = vmatpush.msra.mxu0 %v3539
  %3551 = vmatpush.msra.mxu0 %v3340
  %3552 = vmatpush.msra.mxu0 %v3339
  %3553 = vmatpush.msra.mxu0 %v3338
  %3554 = vmatpush.msra.mxu0 %v3337
  %3555 = vmatpush.msra.mxu0 %v3336
  %3556 = vmatpush.msra.mxu0 %v3335
  %3557 = vmatmul.f32.gmra.mxu0 %v3447
  %v3558 = vpop.f32.mrf.mxu0
  %v3559 = vadd.f32 0.0, %v3558
  %3560 = vmatmul.f32.gmra.mxu0 %v3450
  %v3561 = vpop.f32.mrf.mxu0
  %v3562 = vadd.f32 0.0, %v3561
  %3563 = vmatmul.f32.gmra.mxu0 %v3453
  %v3564 = vpop.f32.mrf.mxu0
  %v3565 = vadd.f32 0.0, %v3564
  %3566 = vmatmul.f32.gmra.mxu0 %v3456
  %v3567 = vpop.f32.mrf.mxu0
  %v3568 = vadd.f32 0.0, %v3567
  %3569 = vdwg.mxu0
  %v3570 = vadd.f32 %v3559, %v3503
  %v3571 = vadd.f32 %v3562, %v3506
  %v3572 = vadd.f32 %v3565, %v3509
  %v3573 = vadd.f32 %v3568, %v3512
  %vm3574 = vcmp.gt.f32.partialorder %v3570, 0.0
  %vm3575 = vcmp.gt.f32.partialorder %v3571, 0.0
  %vm3576 = vcmp.gt.f32.partialorder %v3572, 0.0
  %vm3577 = vcmp.gt.f32.partialorder %v3573, 0.0
  %v3578 = vmul.f32 %v3570, 0.2
  %v3579 = vmul.f32 %v3571, 0.2
  %v3580 = vmul.f32 %v3572, 0.2
  %v3581 = vmul.f32 %v3573, 0.2
  %v3582 = vsel %vm3574, %v3570, %v3578
  %v3583 = vsel %vm3575, %v3571, %v3579
  %v3584 = vsel %vm3576, %v3572, %v3580
  %v3585 = vsel %vm3577, %v3573, %v3581
  %v3586 = vadd.f32 %v3559, %v3515
  %v3587 = vadd.f32 %v3562, %v3518
  %v3588 = vadd.f32 %v3565, %v3521
  %v3589 = vadd.f32 %v3568, %v3524
  %vm3590 = vcmp.gt.f32.partialorder %v3586, 0.0
  %vm3591 = vcmp.gt.f32.partialorder %v3587, 0.0
  %vm3592 = vcmp.gt.f32.partialorder %v3588, 0.0
  %vm3593 = vcmp.gt.f32.partialorder %v3589, 0.0
  %v3594 = vmul.f32 %v3586, 0.2
  %v3595 = vmul.f32 %v3587, 0.2
  %v3596 = vmul.f32 %v3588, 0.2
  %v3597 = vmul.f32 %v3589, 0.2
  %v3598 = vsel %vm3590, %v3586, %v3594
  %v3599 = vsel %vm3591, %v3587, %v3595
  %v3600 = vsel %vm3592, %v3588, %v3596
  %v3601 = vsel %vm3593, %v3589, %v3597
  %v3602 = vadd.f32 %v3559, %v3527
  %v3603 = vadd.f32 %v3562, %v3530
  %v3604 = vadd.f32 %v3565, %v3533
  %v3605 = vadd.f32 %v3568, %v3536
  %vm3606 = vcmp.gt.f32.partialorder %v3602, 0.0
  %vm3607 = vcmp.gt.f32.partialorder %v3603, 0.0
  %vm3608 = vcmp.gt.f32.partialorder %v3604, 0.0
  %vm3609 = vcmp.gt.f32.partialorder %v3605, 0.0
  %v3610 = vmul.f32 %v3602, 0.2
  %v3611 = vmul.f32 %v3603, 0.2
  %v3612 = vmul.f32 %v3604, 0.2
  %v3613 = vmul.f32 %v3605, 0.2
  %v3614 = vsel %vm3606, %v3602, %v3610
  %v3615 = vsel %vm3607, %v3603, %v3611
  %v3616 = vsel %vm3608, %v3604, %v3612
  %v3617 = vsel %vm3609, %v3605, %v3613
  %v3618 = vmax.f32 %v3582, %v3598
  %v3619 = vmax.f32 %v3583, %v3599
  %v3620 = vmax.f32 %v3584, %v3600
  %v3621 = vmax.f32 %v3585, %v3601
  %v3622 = vmax.f32 %v3618, %v3614
  %v3623 = vmax.f32 %v3619, %v3615
  %v3624 = vmax.f32 %v3620, %v3616
  %v3625 = vmax.f32 %v3621, %v3617
  %v3626 = vsub.f32 %v3582, %v3622
  %v3627 = vsub.f32 %v3583, %v3623
  %v3628 = vsub.f32 %v3584, %v3624
  %v3629 = vsub.f32 %v3585, %v3625
  %v3630 = vmul.f32 %v3626, 1.442695
  %v3631 = vpow.pop %v3630
  %v3632 = vmul.f32 %v3627, 1.442695
  %v3633 = vpow.pop %v3632
  %v3634 = vmul.f32 %v3628, 1.442695
  %v3635 = vpow.pop %v3634
  %v3636 = vmul.f32 %v3629, 1.442695
  %v3637 = vpow.pop %v3636
  %v3638 = vsub.f32 %v3598, %v3622
  %v3639 = vsub.f32 %v3599, %v3623
  %v3640 = vsub.f32 %v3600, %v3624
  %v3641 = vsub.f32 %v3601, %v3625
  %v3642 = vmul.f32 %v3638, 1.442695
  %v3643 = vpow.pop %v3642
  %v3644 = vmul.f32 %v3639, 1.442695
  %v3645 = vpow.pop %v3644
  %v3646 = vmul.f32 %v3640, 1.442695
  %v3647 = vpow.pop %v3646
  %v3648 = vmul.f32 %v3641, 1.442695
  %v3649 = vpow.pop %v3648
  %v3650 = vsub.f32 %v3614, %v3622
  %v3651 = vsub.f32 %v3615, %v3623
  %v3652 = vsub.f32 %v3616, %v3624
  %v3653 = vsub.f32 %v3617, %v3625
  %v3654 = vmul.f32 %v3650, 1.442695
  %v3655 = vpow.pop %v3654
  %v3656 = vmul.f32 %v3651, 1.442695
  %v3657 = vpow.pop %v3656
  %v3658 = vmul.f32 %v3652, 1.442695
  %v3659 = vpow.pop %v3658
  %v3660 = vmul.f32 %v3653, 1.442695
  %v3661 = vpow.pop %v3660
  %v3662 = vadd.f32 %v3631, %v3643
  %v3663 = vadd.f32 %v3633, %v3645
  %v3664 = vadd.f32 %v3635, %v3647
  %v3665 = vadd.f32 %v3637, %v3649
  %v3666 = vadd.f32 %v3662, %v3655
  %v3667 = vadd.f32 %v3663, %v3657
  %v3668 = vadd.f32 %v3664, %v3659
  %v3669 = vadd.f32 %v3665, %v3661
  %v3670 = vrcp.pop %v3666
  %v3671 = vmul.f32 %v3666, %v3670
  %v3672 = vsub.f32 1.0, %v3671
  %v3673 = vmul.f32 %v3670, %v3672
  %v3674 = vadd.f32 %v3670, %v3673
  %vm3675 = vweird.f32 %v3666
  %vm3676 = vweird.f32 %v3670
  %vm3677 = vmor %vm3675, %vm3676
  %v3678 = vsel %vm3677, %v3670, %v3674
  %v3679 = vand.u32 2147483647, %v3666
  %vm3680 = vcmp.eq.f32.partialorder %v3679, 8.507059e+37
  %v3681 = vand.u32 %v3666, 2147483648
  %v3682 = vor.u32 1.1754944e-38, %v3681
  %v3683 = vsel %vm3680, %v3682, %v3678
  %v3684 = vmul.f32 1.0, %v3683
  %v3685 = vrcp.pop %v3667
  %v3686 = vmul.f32 %v3667, %v3685
  %v3687 = vsub.f32 1.0, %v3686
  %v3688 = vmul.f32 %v3685, %v3687
  %v3689 = vadd.f32 %v3685, %v3688
  %vm3690 = vweird.f32 %v3667
  %vm3691 = vweird.f32 %v3685
  %vm3692 = vmor %vm3690, %vm3691
  %v3693 = vsel %vm3692, %v3685, %v3689
  %v3694 = vand.u32 2147483647, %v3667
  %vm3695 = vcmp.eq.f32.partialorder %v3694, 8.507059e+37
  %v3696 = vand.u32 %v3667, 2147483648
  %v3697 = vor.u32 1.1754944e-38, %v3696
  %v3698 = vsel %vm3695, %v3697, %v3693
  %v3699 = vmul.f32 1.0, %v3698
  %v3700 = vrcp.pop %v3668
  %v3701 = vmul.f32 %v3668, %v3700
  %v3702 = vsub.f32 1.0, %v3701
  %v3703 = vmul.f32 %v3700, %v3702
  %v3704 = vadd.f32 %v3700, %v3703
  %vm3705 = vweird.f32 %v3668
  %vm3706 = vweird.f32 %v3700
  %vm3707 = vmor %vm3705, %vm3706
  %v3708 = vsel %vm3707, %v3700, %v3704
  %v3709 = vand.u32 2147483647, %v3668
  %vm3710 = vcmp.eq.f32.partialorder %v3709, 8.507059e+37
  %v3711 = vand.u32 %v3668, 2147483648
  %v3712 = vor.u32 1.1754944e-38, %v3711
  %v3713 = vsel %vm3710, %v3712, %v3708
  %v3714 = vmul.f32 1.0, %v3713
  %v3715 = vrcp.pop %v3669
  %v3716 = vmul.f32 %v3669, %v3715
  %v3717 = vsub.f32 1.0, %v3716
  %v3718 = vmul.f32 %v3715, %v3717
  %v3719 = vadd.f32 %v3715, %v3718
  %vm3720 = vweird.f32 %v3669
  %vm3721 = vweird.f32 %v3715
  %vm3722 = vmor %vm3720, %vm3721
  %v3723 = vsel %vm3722, %v3715, %v3719
  %v3724 = vand.u32 2147483647, %v3669
  %vm3725 = vcmp.eq.f32.partialorder %v3724, 8.507059e+37
  %v3726 = vand.u32 %v3669, 2147483648
  %v3727 = vor.u32 1.1754944e-38, %v3726
  %v3728 = vsel %vm3725, %v3727, %v3723
  %v3729 = vmul.f32 1.0, %v3728
  %v3730 = vmul.f32 %v3631, %v3684
  %v3731 = vmul.f32 %v3633, %v3699
  %v3732 = vmul.f32 %v3635, %v3714
  %v3733 = vmul.f32 %v3637, %v3729
  %3735 = vset.pattern.permute.xlu0 0
  %3736 = vperm.xlu0 %3735, %v3730
  %v3737 = vpop.permute.xlu0 %3736
  %3740 = vset.pattern.permute.xlu0 0
  %3741 = vperm.xlu0 %3740, %v3731
  %v3742 = vpop.permute.xlu0 %3741
  %3745 = vset.pattern.permute.xlu0 0
  %3746 = vperm.xlu0 %3745, %v3732
  %v3747 = vpop.permute.xlu0 %3746
  %3750 = vset.pattern.permute.xlu0 0
  %3751 = vperm.xlu0 %3750, %v3733
  %v3752 = vpop.permute.xlu0 %3751
  %v3754 = vmul.f32 %v3737, %v3240
  %v3755 = vmul.f32 %v3742, %v3243
  %v3756 = vmul.f32 %v3747, %v3246
  %v3757 = vmul.f32 %v3752, %v3249
  %v3758 = vmul.f32 %v3643, %v3684
  %v3759 = vmul.f32 %v3645, %v3699
  %v3760 = vmul.f32 %v3647, %v3714
  %v3761 = vmul.f32 %v3649, %v3729
  %3763 = vset.pattern.permute.xlu0 0
  %3764 = vperm.xlu0 %3763, %v3758
  %v3765 = vpop.permute.xlu0 %3764
  %3768 = vset.pattern.permute.xlu0 0
  %3769 = vperm.xlu0 %3768, %v3759
  %v3770 = vpop.permute.xlu0 %3769
  %3773 = vset.pattern.permute.xlu0 0
  %3774 = vperm.xlu0 %3773, %v3760
  %v3775 = vpop.permute.xlu0 %3774
  %3778 = vset.pattern.permute.xlu0 0
  %3779 = vperm.xlu0 %3778, %v3761
  %v3780 = vpop.permute.xlu0 %3779
  %v3782 = vmul.f32 %v3765, %v3281
  %v3783 = vmul.f32 %v3770, %v3284
  %v3784 = vmul.f32 %v3775, %v3287
  %v3785 = vmul.f32 %v3780, %v3290
  %v3786 = vadd.f32 %v3754, %v3782
  %v3787 = vadd.f32 %v3755, %v3783
  %v3788 = vadd.f32 %v3756, %v3784
  %v3789 = vadd.f32 %v3757, %v3785
  %v3790 = vmul.f32 %v3655, %v3684
  %v3791 = vmul.f32 %v3657, %v3699
  %v3792 = vmul.f32 %v3659, %v3714
  %v3793 = vmul.f32 %v3661, %v3729
  %3795 = vset.pattern.permute.xlu0 0
  %3796 = vperm.xlu0 %3795, %v3790
  %v3797 = vpop.permute.xlu0 %3796
  %3800 = vset.pattern.permute.xlu0 0
  %3801 = vperm.xlu0 %3800, %v3791
  %v3802 = vpop.permute.xlu0 %3801
  %3805 = vset.pattern.permute.xlu0 0
  %3806 = vperm.xlu0 %3805, %v3792
  %v3807 = vpop.permute.xlu0 %3806
  %3810 = vset.pattern.permute.xlu0 0
  %3811 = vperm.xlu0 %3810, %v3793
  %v3812 = vpop.permute.xlu0 %3811
  %v3814 = vmul.f32 %v3797, %v3322
  %v3815 = vmul.f32 %v3802, %v3325
  %v3816 = vmul.f32 %v3807, %v3328
  %v3817 = vmul.f32 %v3812, %v3331
  %v3818 = vadd.f32 %v3786, %v3814
  %v3819 = vadd.f32 %v3787, %v3815
  %v3820 = vadd.f32 %v3788, %v3816
  %v3821 = vadd.f32 %v3789, %v3817
  %v3822 = vsel %vm3352, %v3818, -inf
  %3823 = vmax.xlane.f32.xlu0 %v3822
  %v3824 = vpop.xlane.xlu0 %3823
  %v3825 = vsel %vm3352, %v3819, -inf
  %3826 = vmax.xlane.f32.xlu0 %v3825
  %v3827 = vpop.xlane.xlu0 %3826
  %v3828 = vsel %vm3352, %v3820, -inf
  %3829 = vmax.xlane.f32.xlu0 %v3828
  %v3830 = vpop.xlane.xlu0 %3829
  %v3831 = vsel %vm3352, %v3821, -inf
  %3832 = vmax.xlane.f32.xlu0 %v3831
  %v3833 = vpop.xlane.xlu0 %3832
  %v3834 = vsub.f32 %v3818, %v3824
  %v3835 = vsub.f32 %v3819, %v3827
  %v3836 = vsub.f32 %v3820, %v3830
  %v3837 = vsub.f32 %v3821, %v3833
  %v3838 = vmul.f32 %v3834, 1.442695
  %v3839 = vpow.pop %v3838
  %v3840 = vmul.f32 %v3835, 1.442695
  %v3841 = vpow.pop %v3840
  %v3842 = vmul.f32 %v3836, 1.442695
  %v3843 = vpow.pop %v3842
  %v3844 = vmul.f32 %v3837, 1.442695
  %v3845 = vpow.pop %v3844
  %v3846 = vsel %vm3352, %v3839, 0.0
  %3847 = vadd.xlane.f32.xlu0 %v3846
  %v3848 = vpop.xlane.xlu0 %3847
  %v3849 = vsel %vm3352, %v3841, 0.0
  %3850 = vadd.xlane.f32.xlu0 %v3849
  %v3851 = vpop.xlane.xlu0 %3850
  %v3852 = vsel %vm3352, %v3843, 0.0
  %3853 = vadd.xlane.f32.xlu0 %v3852
  %v3854 = vpop.xlane.xlu0 %3853
  %v3855 = vsel %vm3352, %v3845, 0.0
  %3856 = vadd.xlane.f32.xlu0 %v3855
  %v3857 = vpop.xlane.xlu0 %3856
  %v3858 = vlog2.pop %v3848
  %v3859 = vmul.f32 %v3858, 0.6931472
  %v3860 = vlog2.pop %v3851
  %v3861 = vmul.f32 %v3860, 0.6931472
  %v3862 = vlog2.pop %v3854
  %v3863 = vmul.f32 %v3862, 0.6931472
  %v3864 = vlog2.pop %v3857
  %v3865 = vmul.f32 %v3864, 0.6931472
  %v3866 = vsub.f32 %v3834, %v3859
  %v3867 = vsub.f32 %v3835, %v3861
  %v3868 = vsub.f32 %v3836, %v3863
  %v3869 = vsub.f32 %v3837, %v3865
  %3870 = vst.msk [vmem:[%s97] sm:$0xff] %vm3352, %v3866
  %3871 = vst.msk [vmem:[%s97 + $0x8] sm:$0xff] %vm3352, %v3867
  %3872 = vst.msk [vmem:[%s97 + $0x10] sm:$0xff] %vm3352, %v3868
  %3873 = vst.msk [vmem:[%s97 + $0x18] sm:$0xff] %vm3352, %v3869
  %v3875 = vsel %vm368, %v215, 0
  %v3878 = vsel %vm368, %v216, 0
  %v3881 = vsel %vm368, %v217, 0
  %3883 = vmatpush.msra.mxu0 0.0
  %3884 = vmatpush.msra.mxu0 0.0
  %3885 = vmatpush.msra.mxu0 0.0
  %3886 = vmatpush.msra.mxu0 0.0
  %3887 = vmatpush.msra.mxu0 0.0
  %3888 = vmatpush.msra.mxu0 0.0
  %3889 = vmatpush.msra.mxu0 0.0
  %3890 = vmatpush.msra.mxu0 0.0
  %3891 = vmatpush.msra.mxu0 0.0
  %3892 = vmatpush.msra.mxu0 0.0
  %3893 = vmatpush.msra.mxu0 0.0
  %3894 = vmatpush.msra.mxu0 0.0
  %3895 = vmatpush.msra.mxu0 %v3141
  %3896 = vmatpush.msra.mxu0 %v3138
  %3897 = vmatpush.msra.mxu0 %v3135
  %3898 = vmatpush.msra.mxu0 %v3132
  %3899 = vmatmul.f32.gmra.mxu0 %v3875
  %v3900 = vpop.f32.mrf.mxu0
  %v3901 = vadd.f32 %v3208, %v3900
  %3902 = vmatmul.f32.gmra.mxu0 %v3878
  %v3903 = vpop.f32.mrf.mxu0
  %v3904 = vadd.f32 %v3208, %v3903
  %3905 = vmatmul.f32.gmra.mxu0 %v3881
  %v3906 = vpop.f32.mrf.mxu0
  %v3907 = vadd.f32 %v3208, %v3906
  %3908 = vdwg.mxu0
  %v3910 = vsel %vm293, %v218, 0
  %v3913 = vsel %vm293, %v219, 0
  %v3916 = vsel %vm293, %v220, 0
  %3918 = vmatpush.msra.mxu0 0.0
  %3919 = vmatpush.msra.mxu0 0.0
  %3920 = vmatpush.msra.mxu0 0.0
  %3921 = vmatpush.msra.mxu0 0.0
  %3922 = vmatpush.msra.mxu0 0.0
  %3923 = vmatpush.msra.mxu0 0.0
  %3924 = vmatpush.msra.mxu0 0.0
  %3925 = vmatpush.msra.mxu0 0.0
  %3926 = vmatpush.msra.mxu0 0.0
  %3927 = vmatpush.msra.mxu0 0.0
  %3928 = vmatpush.msra.mxu0 0.0
  %3929 = vmatpush.msra.mxu0 0.0
  %3930 = vmatpush.msra.mxu0 0.0
  %3931 = vmatpush.msra.mxu0 %v3176
  %3932 = vmatpush.msra.mxu0 %v3173
  %3933 = vmatpush.msra.mxu0 %v3170
  %3934 = vmatmul.f32.gmra.mxu0 %v3910
  %v3935 = vpop.f32.mrf.mxu0
  %v3936 = vadd.f32 %v3208, %v3935
  %3937 = vmatmul.f32.gmra.mxu0 %v3913
  %v3938 = vpop.f32.mrf.mxu0
  %v3939 = vadd.f32 %v3208, %v3938
  %3940 = vmatmul.f32.gmra.mxu0 %v3916
  %v3941 = vpop.f32.mrf.mxu0
  %v3942 = vadd.f32 %v3208, %v3941
  %3943 = vdwg.mxu0
  %v3945 = vsel %vm333, %v221, 0
  %v3948 = vsel %vm333, %v222, 0
  %v3951 = vsel %vm333, %v223, 0
  %3953 = vmatpush.msra.mxu0 0.0
  %3954 = vmatpush.msra.mxu0 0.0
  %3955 = vmatpush.msra.mxu0 0.0
  %3956 = vmatpush.msra.mxu0 0.0
  %3957 = vmatpush.msra.mxu0 0.0
  %3958 = vmatpush.msra.mxu0 0.0
  %3959 = vmatpush.msra.mxu0 0.0
  %3960 = vmatpush.msra.mxu0 0.0
  %3961 = vmatpush.msra.mxu0 0.0
  %3962 = vmatpush.msra.mxu0 0.0
  %3963 = vmatpush.msra.mxu0 0.0
  %3964 = vmatpush.msra.mxu0 0.0
  %3965 = vmatpush.msra.mxu0 0.0
  %3966 = vmatpush.msra.mxu0 0.0
  %3967 = vmatpush.msra.mxu0 %v3205
  %3968 = vmatpush.msra.mxu0 %v3202
  %3969 = vmatmul.f32.gmra.mxu0 %v3945
  %v3970 = vpop.f32.mrf.mxu0
  %v3971 = vadd.f32 %v3208, %v3970
  %3972 = vmatmul.f32.gmra.mxu0 %v3948
  %v3973 = vpop.f32.mrf.mxu0
  %v3974 = vadd.f32 %v3208, %v3973
  %3975 = vmatmul.f32.gmra.mxu0 %v3951
  %v3976 = vpop.f32.mrf.mxu0
  %v3977 = vadd.f32 %v3208, %v3976
  %3978 = vdwg.mxu0
  %v3979 = vld [vmem:[%s75] sm:$0x3f]
  %v3980 = vld [vmem:[%s81] sm:$0x1]
  %v3981 = vld [vmem:[%s87] sm:$0xff]
  %v3982 = vld [vmem:[%s87 + $0x8] sm:$0xff]
  %v3983 = vld [vmem:[%s87 + $0x10] sm:$0xff]
  %v3984 = vld [vmem:[%s87 + $0x18] sm:$0xff]
  %v3985 = vld [vmem:[%s87 + $0x20] sm:$0xff]
  %v3986 = vld [vmem:[%s87 + $0x28] sm:$0xff]
  %v3987 = vld [vmem:[%s87 + $0x30] sm:$0x3]
  %v3988 = vld [vmem:[%s93] sm:$0xff]
  %v3989 = vld [vmem:[%s93 + $0x8] sm:$0xff]
  %v3990 = vld [vmem:[%s93 + $0x10] sm:$0xff]
  %v3991 = vld [vmem:[%s93 + $0x18] sm:$0xff]
  %v3992 = vld [vmem:[%s93 + $0x20] sm:$0xff]
  %v3993 = vld [vmem:[%s93 + $0x28] sm:$0xff]
  %v3994 = vld [vmem:[%s93 + $0x30] sm:$0x3]
  %v3996 = vperm.slane %v3980, 0
  %v3999 = vsel %vm3352, %v3901, 0
  %v4002 = vsel %vm3352, %v3904, 0
  %v4005 = vsel %vm3352, %v3907, 0
  %v4008 = vsel %vm3352, %v3936, 0
  %v4011 = vsel %vm3352, %v3939, 0
  %v4014 = vsel %vm3352, %v3942, 0
  %v4017 = vsel %vm3352, %v3971, 0
  %v4020 = vsel %vm3352, %v3974, 0
  %v4023 = vsel %vm3352, %v3977, 0
  %v4026 = vsel %vm3389, %v3979, 0
  %4028 = vmatpush.msra.mxu0 0.0
  %4029 = vmatpush.msra.mxu0 0.0
  %4030 = vmatpush.msra.mxu0 0.0
  %4031 = vmatpush.msra.mxu0 0.0
  %4032 = vmatpush.msra.mxu0 0.0
  %4033 = vmatpush.msra.mxu0 0.0
  %4034 = vmatpush.msra.mxu0 0.0
  %4035 = vmatpush.msra.mxu0 0.0
  %4036 = vmatpush.msra.mxu0 0.0
  %4037 = vmatpush.msra.mxu0 0.0
  %4038 = vmatpush.msra.mxu0 0.0
  %4039 = vmatpush.msra.mxu0 0.0
  %4040 = vmatpush.msra.mxu0 0.0
  %4041 = vmatpush.msra.mxu0 0.0
  %4042 = vmatpush.msra.mxu0 0.0
  %4043 = vmatpush.msra.mxu0 %v4026
  %4044 = vmatmul.f32.gmra.mxu0 %v3999
  %v4045 = vpop.f32.mrf.mxu0
  %v4046 = vadd.f32 %v3996, %v4045
  %4047 = vmatmul.f32.gmra.mxu0 %v4002
  %v4048 = vpop.f32.mrf.mxu0
  %v4049 = vadd.f32 %v3996, %v4048
  %4050 = vmatmul.f32.gmra.mxu0 %v4005
  %v4051 = vpop.f32.mrf.mxu0
  %v4052 = vadd.f32 %v3996, %v4051
  %4053 = vmatmul.f32.gmra.mxu0 %v4008
  %v4054 = vpop.f32.mrf.mxu0
  %v4055 = vadd.f32 %v3996, %v4054
  %4056 = vmatmul.f32.gmra.mxu0 %v4011
  %v4057 = vpop.f32.mrf.mxu0
  %v4058 = vadd.f32 %v3996, %v4057
  %4059 = vmatmul.f32.gmra.mxu0 %v4014
  %v4060 = vpop.f32.mrf.mxu0
  %v4061 = vadd.f32 %v3996, %v4060
  %4062 = vmatmul.f32.gmra.mxu0 %v4017
  %v4063 = vpop.f32.mrf.mxu0
  %v4064 = vadd.f32 %v3996, %v4063
  %4065 = vmatmul.f32.gmra.mxu0 %v4020
  %v4066 = vpop.f32.mrf.mxu0
  %v4067 = vadd.f32 %v3996, %v4066
  %4068 = vmatmul.f32.gmra.mxu0 %v4023
  %v4069 = vpop.f32.mrf.mxu0
  %v4070 = vadd.f32 %v3996, %v4069
  %4071 = vdwg.mxu0
  %v4073 = vsel %vm1144, %v4046, 0
  %v4076 = vsel %vm1144, %v4049, 0
  %v4079 = vsel %vm1144, %v4052, 0
  %v4082 = vsel %vm1144, %v4055, 0
  %v4085 = vsel %vm1144, %v4058, 0
  %v4088 = vsel %vm1144, %v4061, 0
  %v4091 = vsel %vm1144, %v4064, 0
  %v4094 = vsel %vm1144, %v4067, 0
  %v4097 = vsel %vm1144, %v4070, 0
  %v4100 = vsel %vm1181, %v3994, 0
  %4102 = vmatpush.msra.mxu0 0.0
  %4103 = vmatpush.msra.mxu0 0.0
  %4104 = vmatpush.msra.mxu0 0.0
  %4105 = vmatpush.msra.mxu0 0.0
  %4106 = vmatpush.msra.mxu0 0.0
  %4107 = vmatpush.msra.mxu0 0.0
  %4108 = vmatpush.msra.mxu0 0.0
  %4109 = vmatpush.msra.mxu0 0.0
  %4110 = vmatpush.msra.mxu0 0.0
  %4111 = vmatpush.msra.mxu0 %v4100
  %4112 = vmatpush.msra.mxu0 %v3993
  %4113 = vmatpush.msra.mxu0 %v3992
  %4114 = vmatpush.msra.mxu0 %v3991
  %4115 = vmatpush.msra.mxu0 %v3990
  %4116 = vmatpush.msra.mxu0 %v3989
  %4117 = vmatpush.msra.mxu0 %v3988
  %4118 = vmatmul.f32.gmra.mxu0 %v4073
  %v4119 = vpop.f32.mrf.mxu0
  %v4120 = vadd.f32 0.0, %v4119
  %4121 = vmatmul.f32.gmra.mxu0 %v4076
  %v4122 = vpop.f32.mrf.mxu0
  %v4123 = vadd.f32 0.0, %v4122
  %4124 = vmatmul.f32.gmra.mxu0 %v4079
  %v4125 = vpop.f32.mrf.mxu0
  %v4126 = vadd.f32 0.0, %v4125
  %4127 = vmatmul.f32.gmra.mxu0 %v4082
  %v4128 = vpop.f32.mrf.mxu0
  %v4129 = vadd.f32 0.0, %v4128
  %4130 = vmatmul.f32.gmra.mxu0 %v4085
  %v4131 = vpop.f32.mrf.mxu0
  %v4132 = vadd.f32 0.0, %v4131
  %4133 = vmatmul.f32.gmra.mxu0 %v4088
  %v4134 = vpop.f32.mrf.mxu0
  %v4135 = vadd.f32 0.0, %v4134
  %4136 = vmatmul.f32.gmra.mxu0 %v4091
  %v4137 = vpop.f32.mrf.mxu0
  %v4138 = vadd.f32 0.0, %v4137
  %4139 = vmatmul.f32.gmra.mxu0 %v4094
  %v4140 = vpop.f32.mrf.mxu0
  %v4141 = vadd.f32 0.0, %v4140
  %4142 = vmatmul.f32.gmra.mxu0 %v4097
  %v4143 = vpop.f32.mrf.mxu0
  %v4144 = vadd.f32 0.0, %v4143
  %4145 = vdwg.mxu0
  %v4147 = vsel %vm1181, %v3987, 0
  %4149 = vmatpush.msra.mxu0 0.0
  %4150 = vmatpush.msra.mxu0 0.0
  %4151 = vmatpush.msra.mxu0 0.0
  %4152 = vmatpush.msra.mxu0 0.0
  %4153 = vmatpush.msra.mxu0 0.0
  %4154 = vmatpush.msra.mxu0 0.0
  %4155 = vmatpush.msra.mxu0 0.0
  %4156 = vmatpush.msra.mxu0 0.0
  %4157 = vmatpush.msra.mxu0 0.0
  %4158 = vmatpush.msra.mxu0 %v4147
  %4159 = vmatpush.msra.mxu0 %v3986
  %4160 = vmatpush.msra.mxu0 %v3985
  %4161 = vmatpush.msra.mxu0 %v3984
  %4162 = vmatpush.msra.mxu0 %v3983
  %4163 = vmatpush.msra.mxu0 %v3982
  %4164 = vmatpush.msra.mxu0 %v3981
  %4165 = vmatmul.f32.gmra.mxu0 %v4082
  %v4166 = vpop.f32.mrf.mxu0
  %v4167 = vadd.f32 0.0, %v4166
  %4168 = vmatmul.f32.gmra.mxu0 %v4085
  %v4169 = vpop.f32.mrf.mxu0
  %v4170 = vadd.f32 0.0, %v4169
  %4171 = vmatmul.f32.gmra.mxu0 %v4088
  %v4172 = vpop.f32.mrf.mxu0
  %v4173 = vadd.f32 0.0, %v4172
  %4174 = vdwg.mxu0
  %v4175 = vadd.f32 %v4167, %v4120
  %v4176 = vadd.f32 %v4170, %v4123
  %v4177 = vadd.f32 %v4173, %v4126
  %vm4178 = vcmp.gt.f32.partialorder %v4175, 0.0
  %vm4179 = vcmp.gt.f32.partialorder %v4176, 0.0
  %vm4180 = vcmp.gt.f32.partialorder %v4177, 0.0
  %v4181 = vmul.f32 %v4175, 0.2
  %v4182 = vmul.f32 %v4176, 0.2
  %v4183 = vmul.f32 %v4177, 0.2
  %v4184 = vsel %vm4178, %v4175, %v4181
  %v4185 = vsel %vm4179, %v4176, %v4182
  %v4186 = vsel %vm4180, %v4177, %v4183
  %v4187 = vadd.f32 %v4167, %v4129
  %v4188 = vadd.f32 %v4170, %v4132
  %v4189 = vadd.f32 %v4173, %v4135
  %vm4190 = vcmp.gt.f32.partialorder %v4187, 0.0
  %vm4191 = vcmp.gt.f32.partialorder %v4188, 0.0
  %vm4192 = vcmp.gt.f32.partialorder %v4189, 0.0
  %v4193 = vmul.f32 %v4187, 0.2
  %v4194 = vmul.f32 %v4188, 0.2
  %v4195 = vmul.f32 %v4189, 0.2
  %v4196 = vsel %vm4190, %v4187, %v4193
  %v4197 = vsel %vm4191, %v4188, %v4194
  %v4198 = vsel %vm4192, %v4189, %v4195
  %v4199 = vadd.f32 %v4167, %v4138
  %v4200 = vadd.f32 %v4170, %v4141
  %v4201 = vadd.f32 %v4173, %v4144
  %vm4202 = vcmp.gt.f32.partialorder %v4199, 0.0
  %vm4203 = vcmp.gt.f32.partialorder %v4200, 0.0
  %vm4204 = vcmp.gt.f32.partialorder %v4201, 0.0
  %v4205 = vmul.f32 %v4199, 0.2
  %v4206 = vmul.f32 %v4200, 0.2
  %v4207 = vmul.f32 %v4201, 0.2
  %v4208 = vsel %vm4202, %v4199, %v4205
  %v4209 = vsel %vm4203, %v4200, %v4206
  %v4210 = vsel %vm4204, %v4201, %v4207
  %v4211 = vmax.f32 %v4184, %v4196
  %v4212 = vmax.f32 %v4185, %v4197
  %v4213 = vmax.f32 %v4186, %v4198
  %v4214 = vmax.f32 %v4211, %v4208
  %v4215 = vmax.f32 %v4212, %v4209
  %v4216 = vmax.f32 %v4213, %v4210
  %v4217 = vsub.f32 %v4184, %v4214
  %v4218 = vsub.f32 %v4185, %v4215
  %v4219 = vsub.f32 %v4186, %v4216
  %v4220 = vmul.f32 %v4217, 1.442695
  %v4221 = vpow.pop %v4220
  %v4222 = vmul.f32 %v4218, 1.442695
  %v4223 = vpow.pop %v4222
  %v4224 = vmul.f32 %v4219, 1.442695
  %v4225 = vpow.pop %v4224
  %v4226 = vsub.f32 %v4196, %v4214
  %v4227 = vsub.f32 %v4197, %v4215
  %v4228 = vsub.f32 %v4198, %v4216
  %v4229 = vmul.f32 %v4226, 1.442695
  %v4230 = vpow.pop %v4229
  %v4231 = vmul.f32 %v4227, 1.442695
  %v4232 = vpow.pop %v4231
  %v4233 = vmul.f32 %v4228, 1.442695
  %v4234 = vpow.pop %v4233
  %v4235 = vsub.f32 %v4208, %v4214
  %v4236 = vsub.f32 %v4209, %v4215
  %v4237 = vsub.f32 %v4210, %v4216
  %v4238 = vmul.f32 %v4235, 1.442695
  %v4239 = vpow.pop %v4238
  %v4240 = vmul.f32 %v4236, 1.442695
  %v4241 = vpow.pop %v4240
  %v4242 = vmul.f32 %v4237, 1.442695
  %v4243 = vpow.pop %v4242
  %v4244 = vadd.f32 %v4221, %v4230
  %v4245 = vadd.f32 %v4223, %v4232
  %v4246 = vadd.f32 %v4225, %v4234
  %v4247 = vadd.f32 %v4244, %v4239
  %v4248 = vadd.f32 %v4245, %v4241
  %v4249 = vadd.f32 %v4246, %v4243
  %v4250 = vrcp.pop %v4247
  %v4251 = vmul.f32 %v4247, %v4250
  %v4252 = vsub.f32 1.0, %v4251
  %v4253 = vmul.f32 %v4250, %v4252
  %v4254 = vadd.f32 %v4250, %v4253
  %vm4255 = vweird.f32 %v4247
  %vm4256 = vweird.f32 %v4250
  %vm4257 = vmor %vm4255, %vm4256
  %v4258 = vsel %vm4257, %v4250, %v4254
  %v4259 = vand.u32 2147483647, %v4247
  %vm4260 = vcmp.eq.f32.partialorder %v4259, 8.507059e+37
  %v4261 = vand.u32 %v4247, 2147483648
  %v4262 = vor.u32 1.1754944e-38, %v4261
  %v4263 = vsel %vm4260, %v4262, %v4258
  %v4264 = vmul.f32 1.0, %v4263
  %v4265 = vrcp.pop %v4248
  %v4266 = vmul.f32 %v4248, %v4265
  %v4267 = vsub.f32 1.0, %v4266
  %v4268 = vmul.f32 %v4265, %v4267
  %v4269 = vadd.f32 %v4265, %v4268
  %vm4270 = vweird.f32 %v4248
  %vm4271 = vweird.f32 %v4265
  %vm4272 = vmor %vm4270, %vm4271
  %v4273 = vsel %vm4272, %v4265, %v4269
  %v4274 = vand.u32 2147483647, %v4248
  %vm4275 = vcmp.eq.f32.partialorder %v4274, 8.507059e+37
  %v4276 = vand.u32 %v4248, 2147483648
  %v4277 = vor.u32 1.1754944e-38, %v4276
  %v4278 = vsel %vm4275, %v4277, %v4273
  %v4279 = vmul.f32 1.0, %v4278
  %v4280 = vrcp.pop %v4249
  %v4281 = vmul.f32 %v4249, %v4280
  %v4282 = vsub.f32 1.0, %v4281
  %v4283 = vmul.f32 %v4280, %v4282
  %v4284 = vadd.f32 %v4280, %v4283
  %vm4285 = vweird.f32 %v4249
  %vm4286 = vweird.f32 %v4280
  %vm4287 = vmor %vm4285, %vm4286
  %v4288 = vsel %vm4287, %v4280, %v4284
  %v4289 = vand.u32 2147483647, %v4249
  %vm4290 = vcmp.eq.f32.partialorder %v4289, 8.507059e+37
  %v4291 = vand.u32 %v4249, 2147483648
  %v4292 = vor.u32 1.1754944e-38, %v4291
  %v4293 = vsel %vm4290, %v4292, %v4288
  %v4294 = vmul.f32 1.0, %v4293
  %v4295 = vmul.f32 %v4221, %v4264
  %v4296 = vmul.f32 %v4223, %v4279
  %v4297 = vmul.f32 %v4225, %v4294
  %4299 = vset.pattern.permute.xlu0 0
  %4300 = vperm.xlu0 %4299, %v4295
  %v4301 = vpop.permute.xlu0 %4300
  %4304 = vset.pattern.permute.xlu0 0
  %4305 = vperm.xlu0 %4304, %v4296
  %v4306 = vpop.permute.xlu0 %4305
  %4309 = vset.pattern.permute.xlu0 0
  %4310 = vperm.xlu0 %4309, %v4297
  %v4311 = vpop.permute.xlu0 %4310
  %v4313 = vmul.f32 %v4301, %v3901
  %v4314 = vmul.f32 %v4306, %v3904
  %v4315 = vmul.f32 %v4311, %v3907
  %v4316 = vmul.f32 %v4230, %v4264
  %v4317 = vmul.f32 %v4232, %v4279
  %v4318 = vmul.f32 %v4234, %v4294
  %4320 = vset.pattern.permute.xlu0 0
  %4321 = vperm.xlu0 %4320, %v4316
  %v4322 = vpop.permute.xlu0 %4321
  %4325 = vset.pattern.permute.xlu0 0
  %4326 = vperm.xlu0 %4325, %v4317
  %v4327 = vpop.permute.xlu0 %4326
  %4330 = vset.pattern.permute.xlu0 0
  %4331 = vperm.xlu0 %4330, %v4318
  %v4332 = vpop.permute.xlu0 %4331
  %v4334 = vmul.f32 %v4322, %v3936
  %v4335 = vmul.f32 %v4327, %v3939
  %v4336 = vmul.f32 %v4332, %v3942
  %v4337 = vadd.f32 %v4313, %v4334
  %v4338 = vadd.f32 %v4314, %v4335
  %v4339 = vadd.f32 %v4315, %v4336
  %v4340 = vmul.f32 %v4239, %v4264
  %v4341 = vmul.f32 %v4241, %v4279
  %v4342 = vmul.f32 %v4243, %v4294
  %4344 = vset.pattern.permute.xlu0 0
  %4345 = vperm.xlu0 %4344, %v4340
  %v4346 = vpop.permute.xlu0 %4345
  %4349 = vset.pattern.permute.xlu0 0
  %4350 = vperm.xlu0 %4349, %v4341
  %v4351 = vpop.permute.xlu0 %4350
  %4354 = vset.pattern.permute.xlu0 0
  %4355 = vperm.xlu0 %4354, %v4342
  %v4356 = vpop.permute.xlu0 %4355
  %v4358 = vmul.f32 %v4346, %v3971
  %v4359 = vmul.f32 %v4351, %v3974
  %v4360 = vmul.f32 %v4356, %v3977
  %v4361 = vadd.f32 %v4337, %v4358
  %v4362 = vadd.f32 %v4338, %v4359
  %v4363 = vadd.f32 %v4339, %v4360
  %v4364 = vsel %vm3352, %v4361, -inf
  %4365 = vmax.xlane.f32.xlu0 %v4364
  %v4366 = vpop.xlane.xlu0 %4365
  %v4367 = vsel %vm3352, %v4362, -inf
  %4368 = vmax.xlane.f32.xlu0 %v4367
  %v4369 = vpop.xlane.xlu0 %4368
  %v4370 = vsel %vm3352, %v4363, -inf
  %4371 = vmax.xlane.f32.xlu0 %v4370
  %v4372 = vpop.xlane.xlu0 %4371
  %v4373 = vsub.f32 %v4361, %v4366
  %v4374 = vsub.f32 %v4362, %v4369
  %v4375 = vsub.f32 %v4363, %v4372
  %v4376 = vmul.f32 %v4373, 1.442695
  %v4377 = vpow.pop %v4376
  %v4378 = vmul.f32 %v4374, 1.442695
  %v4379 = vpow.pop %v4378
  %v4380 = vmul.f32 %v4375, 1.442695
  %v4381 = vpow.pop %v4380
  %v4382 = vsel %vm3352, %v4377, 0.0
  %4383 = vadd.xlane.f32.xlu0 %v4382
  %v4384 = vpop.xlane.xlu0 %4383
  %v4385 = vsel %vm3352, %v4379, 0.0
  %4386 = vadd.xlane.f32.xlu0 %v4385
  %v4387 = vpop.xlane.xlu0 %4386
  %v4388 = vsel %vm3352, %v4381, 0.0
  %4389 = vadd.xlane.f32.xlu0 %v4388
  %v4390 = vpop.xlane.xlu0 %4389
  %v4391 = vlog2.pop %v4384
  %v4392 = vmul.f32 %v4391, 0.6931472
  %v4393 = vlog2.pop %v4387
  %v4394 = vmul.f32 %v4393, 0.6931472
  %v4395 = vlog2.pop %v4390
  %v4396 = vmul.f32 %v4395, 0.6931472
  %v4397 = vsub.f32 %v4373, %v4392
  %v4398 = vsub.f32 %v4374, %v4394
  %v4399 = vsub.f32 %v4375, %v4396
  %4400 = vst.msk [vmem:[%s99] sm:$0xff] %vm3352, %v4397
  %4401 = vst.msk [vmem:[%s99 + $0x8] sm:$0xff] %vm3352, %v4398
  %4402 = vst.msk [vmem:[%s99 + $0x10] sm:$0xff] %vm3352, %v4399
  %v4404 = vsel %vm368, %v224, 0
  %v4407 = vsel %vm368, %v225, 0
  %4409 = vmatpush.msra.mxu0 0.0
  %4410 = vmatpush.msra.mxu0 0.0
  %4411 = vmatpush.msra.mxu0 0.0
  %4412 = vmatpush.msra.mxu0 0.0
  %4413 = vmatpush.msra.mxu0 0.0
  %4414 = vmatpush.msra.mxu0 0.0
  %4415 = vmatpush.msra.mxu0 0.0
  %4416 = vmatpush.msra.mxu0 0.0
  %4417 = vmatpush.msra.mxu0 0.0
  %4418 = vmatpush.msra.mxu0 0.0
  %4419 = vmatpush.msra.mxu0 0.0
  %4420 = vmatpush.msra.mxu0 0.0
  %4421 = vmatpush.msra.mxu0 %v3141
  %4422 = vmatpush.msra.mxu0 %v3138
  %4423 = vmatpush.msra.mxu0 %v3135
  %4424 = vmatpush.msra.mxu0 %v3132
  %4425 = vmatmul.f32.gmra.mxu0 %v4404
  %v4426 = vpop.f32.mrf.mxu0
  %v4427 = vadd.f32 %v3208, %v4426
  %4428 = vmatmul.f32.gmra.mxu0 %v4407
  %v4429 = vpop.f32.mrf.mxu0
  %v4430 = vadd.f32 %v3208, %v4429
  %4431 = vdwg.mxu0
  %v4433 = vsel %vm293, %v226, 0
  %v4436 = vsel %vm293, %v227, 0
  %4438 = vmatpush.msra.mxu0 0.0
  %4439 = vmatpush.msra.mxu0 0.0
  %4440 = vmatpush.msra.mxu0 0.0
  %4441 = vmatpush.msra.mxu0 0.0
  %4442 = vmatpush.msra.mxu0 0.0
  %4443 = vmatpush.msra.mxu0 0.0
  %4444 = vmatpush.msra.mxu0 0.0
  %4445 = vmatpush.msra.mxu0 0.0
  %4446 = vmatpush.msra.mxu0 0.0
  %4447 = vmatpush.msra.mxu0 0.0
  %4448 = vmatpush.msra.mxu0 0.0
  %4449 = vmatpush.msra.mxu0 0.0
  %4450 = vmatpush.msra.mxu0 0.0
  %4451 = vmatpush.msra.mxu0 %v3176
  %4452 = vmatpush.msra.mxu0 %v3173
  %4453 = vmatpush.msra.mxu0 %v3170
  %4454 = vmatmul.f32.gmra.mxu0 %v4433
  %v4455 = vpop.f32.mrf.mxu0
  %v4456 = vadd.f32 %v3208, %v4455
  %4457 = vmatmul.f32.gmra.mxu0 %v4436
  %v4458 = vpop.f32.mrf.mxu0
  %v4459 = vadd.f32 %v3208, %v4458
  %4460 = vdwg.mxu0
  %v4462 = vsel %vm333, %v228, 0
  %v4465 = vsel %vm333, %v229, 0
  %4467 = vmatpush.msra.mxu0 0.0
  %4468 = vmatpush.msra.mxu0 0.0
  %4469 = vmatpush.msra.mxu0 0.0
  %4470 = vmatpush.msra.mxu0 0.0
  %4471 = vmatpush.msra.mxu0 0.0
  %4472 = vmatpush.msra.mxu0 0.0
  %4473 = vmatpush.msra.mxu0 0.0
  %4474 = vmatpush.msra.mxu0 0.0
  %4475 = vmatpush.msra.mxu0 0.0
  %4476 = vmatpush.msra.mxu0 0.0
  %4477 = vmatpush.msra.mxu0 0.0
  %4478 = vmatpush.msra.mxu0 0.0
  %4479 = vmatpush.msra.mxu0 0.0
  %4480 = vmatpush.msra.mxu0 0.0
  %4481 = vmatpush.msra.mxu0 %v3205
  %4482 = vmatpush.msra.mxu0 %v3202
  %4483 = vmatmul.f32.gmra.mxu0 %v4462
  %v4484 = vpop.f32.mrf.mxu0
  %v4485 = vadd.f32 %v3208, %v4484
  %4486 = vmatmul.f32.gmra.mxu0 %v4465
  %v4487 = vpop.f32.mrf.mxu0
  %v4488 = vadd.f32 %v3208, %v4487
  %4489 = vdwg.mxu0
  %v4490 = vld [vmem:[%s77] sm:$0x3f]
  %v4491 = vld [vmem:[%s83] sm:$0x1]
  %v4492 = vld [vmem:[%s89] sm:$0xff]
  %v4493 = vld [vmem:[%s89 + $0x8] sm:$0xff]
  %v4494 = vld [vmem:[%s89 + $0x10] sm:$0xff]
  %v4495 = vld [vmem:[%s89 + $0x18] sm:$0xff]
  %v4496 = vld [vmem:[%s89 + $0x20] sm:$0xff]
  %v4497 = vld [vmem:[%s89 + $0x28] sm:$0xff]
  %v4498 = vld [vmem:[%s89 + $0x30] sm:$0x3]
  %v4499 = vld [vmem:[%s95] sm:$0xff]
  %v4500 = vld [vmem:[%s95 + $0x8] sm:$0xff]
  %v4501 = vld [vmem:[%s95 + $0x10] sm:$0xff]
  %v4502 = vld [vmem:[%s95 + $0x18] sm:$0xff]
  %v4503 = vld [vmem:[%s95 + $0x20] sm:$0xff]
  %v4504 = vld [vmem:[%s95 + $0x28] sm:$0xff]
  %v4505 = vld [vmem:[%s95 + $0x30] sm:$0x3]
  %v4507 = vperm.slane %v4491, 0
  %v4510 = vsel %vm3352, %v4427, 0
  %v4513 = vsel %vm3352, %v4430, 0
  %v4516 = vsel %vm3352, %v4456, 0
  %v4519 = vsel %vm3352, %v4459, 0
  %v4522 = vsel %vm3352, %v4485, 0
  %v4525 = vsel %vm3352, %v4488, 0
  %v4528 = vsel %vm3389, %v4490, 0
  %4530 = vmatpush.msra.mxu0 0.0
  %4531 = vmatpush.msra.mxu0 0.0
  %4532 = vmatpush.msra.mxu0 0.0
  %4533 = vmatpush.msra.mxu0 0.0
  %4534 = vmatpush.msra.mxu0 0.0
  %4535 = vmatpush.msra.mxu0 0.0
  %4536 = vmatpush.msra.mxu0 0.0
  %4537 = vmatpush.msra.mxu0 0.0
  %4538 = vmatpush.msra.mxu0 0.0
  %4539 = vmatpush.msra.mxu0 0.0
  %4540 = vmatpush.msra.mxu0 0.0
  %4541 = vmatpush.msra.mxu0 0.0
  %4542 = vmatpush.msra.mxu0 0.0
  %4543 = vmatpush.msra.mxu0 0.0
  %4544 = vmatpush.msra.mxu0 0.0
  %4545 = vmatpush.msra.mxu0 %v4528
  %4546 = vmatmul.f32.gmra.mxu0 %v4510
  %v4547 = vpop.f32.mrf.mxu0
  %v4548 = vadd.f32 %v4507, %v4547
  %4549 = vmatmul.f32.gmra.mxu0 %v4513
  %v4550 = vpop.f32.mrf.mxu0
  %v4551 = vadd.f32 %v4507, %v4550
  %4552 = vmatmul.f32.gmra.mxu0 %v4516
  %v4553 = vpop.f32.mrf.mxu0
  %v4554 = vadd.f32 %v4507, %v4553
  %4555 = vmatmul.f32.gmra.mxu0 %v4519
  %v4556 = vpop.f32.mrf.mxu0
  %v4557 = vadd.f32 %v4507, %v4556
  %4558 = vmatmul.f32.gmra.mxu0 %v4522
  %v4559 = vpop.f32.mrf.mxu0
  %v4560 = vadd.f32 %v4507, %v4559
  %4561 = vmatmul.f32.gmra.mxu0 %v4525
  %v4562 = vpop.f32.mrf.mxu0
  %v4563 = vadd.f32 %v4507, %v4562
  %4564 = vdwg.mxu0
  %v4566 = vsel %vm1144, %v4548, 0
  %v4569 = vsel %vm1144, %v4551, 0
  %v4572 = vsel %vm1144, %v4554, 0
  %v4575 = vsel %vm1144, %v4557, 0
  %v4578 = vsel %vm1144, %v4560, 0
  %v4581 = vsel %vm1144, %v4563, 0
  %v4584 = vsel %vm1181, %v4505, 0
  %4586 = vmatpush.msra.mxu0 0.0
  %4587 = vmatpush.msra.mxu0 0.0
  %4588 = vmatpush.msra.mxu0 0.0
  %4589 = vmatpush.msra.mxu0 0.0
  %4590 = vmatpush.msra.mxu0 0.0
  %4591 = vmatpush.msra.mxu0 0.0
  %4592 = vmatpush.msra.mxu0 0.0
  %4593 = vmatpush.msra.mxu0 0.0
  %4594 = vmatpush.msra.mxu0 0.0
  %4595 = vmatpush.msra.mxu0 %v4584
  %4596 = vmatpush.msra.mxu0 %v4504
  %4597 = vmatpush.msra.mxu0 %v4503
  %4598 = vmatpush.msra.mxu0 %v4502
  %4599 = vmatpush.msra.mxu0 %v4501
  %4600 = vmatpush.msra.mxu0 %v4500
  %4601 = vmatpush.msra.mxu0 %v4499
  %4602 = vmatmul.f32.gmra.mxu0 %v4566
  %v4603 = vpop.f32.mrf.mxu0
  %v4604 = vadd.f32 0.0, %v4603
  %4605 = vmatmul.f32.gmra.mxu0 %v4569
  %v4606 = vpop.f32.mrf.mxu0
  %v4607 = vadd.f32 0.0, %v4606
  %4608 = vmatmul.f32.gmra.mxu0 %v4572
  %v4609 = vpop.f32.mrf.mxu0
  %v4610 = vadd.f32 0.0, %v4609
  %4611 = vmatmul.f32.gmra.mxu0 %v4575
  %v4612 = vpop.f32.mrf.mxu0
  %v4613 = vadd.f32 0.0, %v4612
  %4614 = vmatmul.f32.gmra.mxu0 %v4578
  %v4615 = vpop.f32.mrf.mxu0
  %v4616 = vadd.f32 0.0, %v4615
  %4617 = vmatmul.f32.gmra.mxu0 %v4581
  %v4618 = vpop.f32.mrf.mxu0
  %v4619 = vadd.f32 0.0, %v4618
  %4620 = vdwg.mxu0
  %v4622 = vsel %vm1181, %v4498, 0
  %4624 = vmatpush.msra.mxu0 0.0
  %4625 = vmatpush.msra.mxu0 0.0
  %4626 = vmatpush.msra.mxu0 0.0
  %4627 = vmatpush.msra.mxu0 0.0
  %4628 = vmatpush.msra.mxu0 0.0
  %4629 = vmatpush.msra.mxu0 0.0
  %4630 = vmatpush.msra.mxu0 0.0
  %4631 = vmatpush.msra.mxu0 0.0
  %4632 = vmatpush.msra.mxu0 0.0
  %4633 = vmatpush.msra.mxu0 %v4622
  %4634 = vmatpush.msra.mxu0 %v4497
  %4635 = vmatpush.msra.mxu0 %v4496
  %4636 = vmatpush.msra.mxu0 %v4495
  %4637 = vmatpush.msra.mxu0 %v4494
  %4638 = vmatpush.msra.mxu0 %v4493
  %4639 = vmatpush.msra.mxu0 %v4492
  %4640 = vmatmul.f32.gmra.mxu0 %v4578
  %v4641 = vpop.f32.mrf.mxu0
  %v4642 = vadd.f32 0.0, %v4641
  %4643 = vmatmul.f32.gmra.mxu0 %v4581
  %v4644 = vpop.f32.mrf.mxu0
  %v4645 = vadd.f32 0.0, %v4644
  %4646 = vdwg.mxu0
  %v4647 = vadd.f32 %v4642, %v4604
  %v4648 = vadd.f32 %v4645, %v4607
  %vm4649 = vcmp.gt.f32.partialorder %v4647, 0.0
  %vm4650 = vcmp.gt.f32.partialorder %v4648, 0.0
  %v4651 = vmul.f32 %v4647, 0.2
  %v4652 = vmul.f32 %v4648, 0.2
  %v4653 = vsel %vm4649, %v4647, %v4651
  %v4654 = vsel %vm4650, %v4648, %v4652
  %v4655 = vadd.f32 %v4642, %v4610
  %v4656 = vadd.f32 %v4645, %v4613
  %vm4657 = vcmp.gt.f32.partialorder %v4655, 0.0
  %vm4658 = vcmp.gt.f32.partialorder %v4656, 0.0
  %v4659 = vmul.f32 %v4655, 0.2
  %v4660 = vmul.f32 %v4656, 0.2
  %v4661 = vsel %vm4657, %v4655, %v4659
  %v4662 = vsel %vm4658, %v4656, %v4660
  %v4663 = vadd.f32 %v4642, %v4616
  %v4664 = vadd.f32 %v4645, %v4619
  %vm4665 = vcmp.gt.f32.partialorder %v4663, 0.0
  %vm4666 = vcmp.gt.f32.partialorder %v4664, 0.0
  %v4667 = vmul.f32 %v4663, 0.2
  %v4668 = vmul.f32 %v4664, 0.2
  %v4669 = vsel %vm4665, %v4663, %v4667
  %v4670 = vsel %vm4666, %v4664, %v4668
  %v4671 = vmax.f32 %v4653, %v4661
  %v4672 = vmax.f32 %v4654, %v4662
  %v4673 = vmax.f32 %v4671, %v4669
  %v4674 = vmax.f32 %v4672, %v4670
  %v4675 = vsub.f32 %v4653, %v4673
  %v4676 = vsub.f32 %v4654, %v4674
  %v4677 = vmul.f32 %v4675, 1.442695
  %v4678 = vpow.pop %v4677
  %v4679 = vmul.f32 %v4676, 1.442695
  %v4680 = vpow.pop %v4679
  %v4681 = vsub.f32 %v4661, %v4673
  %v4682 = vsub.f32 %v4662, %v4674
  %v4683 = vmul.f32 %v4681, 1.442695
  %v4684 = vpow.pop %v4683
  %v4685 = vmul.f32 %v4682, 1.442695
  %v4686 = vpow.pop %v4685
  %v4687 = vsub.f32 %v4669, %v4673
  %v4688 = vsub.f32 %v4670, %v4674
  %v4689 = vmul.f32 %v4687, 1.442695
  %v4690 = vpow.pop %v4689
  %v4691 = vmul.f32 %v4688, 1.442695
  %v4692 = vpow.pop %v4691
  %v4693 = vadd.f32 %v4678, %v4684
  %v4694 = vadd.f32 %v4680, %v4686
  %v4695 = vadd.f32 %v4693, %v4690
  %v4696 = vadd.f32 %v4694, %v4692
  %v4697 = vrcp.pop %v4695
  %v4698 = vmul.f32 %v4695, %v4697
  %v4699 = vsub.f32 1.0, %v4698
  %v4700 = vmul.f32 %v4697, %v4699
  %v4701 = vadd.f32 %v4697, %v4700
  %vm4702 = vweird.f32 %v4695
  %vm4703 = vweird.f32 %v4697
  %vm4704 = vmor %vm4702, %vm4703
  %v4705 = vsel %vm4704, %v4697, %v4701
  %v4706 = vand.u32 2147483647, %v4695
  %vm4707 = vcmp.eq.f32.partialorder %v4706, 8.507059e+37
  %v4708 = vand.u32 %v4695, 2147483648
  %v4709 = vor.u32 1.1754944e-38, %v4708
  %v4710 = vsel %vm4707, %v4709, %v4705
  %v4711 = vmul.f32 1.0, %v4710
  %v4712 = vrcp.pop %v4696
  %v4713 = vmul.f32 %v4696, %v4712
  %v4714 = vsub.f32 1.0, %v4713
  %v4715 = vmul.f32 %v4712, %v4714
  %v4716 = vadd.f32 %v4712, %v4715
  %vm4717 = vweird.f32 %v4696
  %vm4718 = vweird.f32 %v4712
  %vm4719 = vmor %vm4717, %vm4718
  %v4720 = vsel %vm4719, %v4712, %v4716
  %v4721 = vand.u32 2147483647, %v4696
  %vm4722 = vcmp.eq.f32.partialorder %v4721, 8.507059e+37
  %v4723 = vand.u32 %v4696, 2147483648
  %v4724 = vor.u32 1.1754944e-38, %v4723
  %v4725 = vsel %vm4722, %v4724, %v4720
  %v4726 = vmul.f32 1.0, %v4725
  %v4727 = vmul.f32 %v4678, %v4711
  %v4728 = vmul.f32 %v4680, %v4726
  %4730 = vset.pattern.permute.xlu0 0
  %4731 = vperm.xlu0 %4730, %v4727
  %v4732 = vpop.permute.xlu0 %4731
  %4735 = vset.pattern.permute.xlu0 0
  %4736 = vperm.xlu0 %4735, %v4728
  %v4737 = vpop.permute.xlu0 %4736
  %v4739 = vmul.f32 %v4732, %v4427
  %v4740 = vmul.f32 %v4737, %v4430
  %v4741 = vmul.f32 %v4684, %v4711
  %v4742 = vmul.f32 %v4686, %v4726
  %4744 = vset.pattern.permute.xlu0 0
  %4745 = vperm.xlu0 %4744, %v4741
  %v4746 = vpop.permute.xlu0 %4745
  %4749 = vset.pattern.permute.xlu0 0
  %4750 = vperm.xlu0 %4749, %v4742
  %v4751 = vpop.permute.xlu0 %4750
  %v4753 = vmul.f32 %v4746, %v4456
  %v4754 = vmul.f32 %v4751, %v4459
  %v4755 = vadd.f32 %v4739, %v4753
  %v4756 = vadd.f32 %v4740, %v4754
  %v4757 = vmul.f32 %v4690, %v4711
  %v4758 = vmul.f32 %v4692, %v4726
  %4760 = vset.pattern.permute.xlu0 0
  %4761 = vperm.xlu0 %4760, %v4757
  %v4762 = vpop.permute.xlu0 %4761
  %4765 = vset.pattern.permute.xlu0 0
  %4766 = vperm.xlu0 %4765, %v4758
  %v4767 = vpop.permute.xlu0 %4766
  %v4769 = vmul.f32 %v4762, %v4485
  %v4770 = vmul.f32 %v4767, %v4488
  %v4771 = vadd.f32 %v4755, %v4769
  %v4772 = vadd.f32 %v4756, %v4770
  %v4773 = vsel %vm3352, %v4771, -inf
  %4774 = vmax.xlane.f32.xlu0 %v4773
  %v4775 = vpop.xlane.xlu0 %4774
  %v4776 = vsel %vm3352, %v4772, -inf
  %4777 = vmax.xlane.f32.xlu0 %v4776
  %v4778 = vpop.xlane.xlu0 %4777
  %v4779 = vsub.f32 %v4771, %v4775
  %v4780 = vsub.f32 %v4772, %v4778
  %v4781 = vmul.f32 %v4779, 1.442695
  %v4782 = vpow.pop %v4781
  %v4783 = vmul.f32 %v4780, 1.442695
  %v4784 = vpow.pop %v4783
  %v4785 = vsel %vm3352, %v4782, 0.0
  %4786 = vadd.xlane.f32.xlu0 %v4785
  %v4787 = vpop.xlane.xlu0 %4786
  %v4788 = vsel %vm3352, %v4784, 0.0
  %4789 = vadd.xlane.f32.xlu0 %v4788
  %v4790 = vpop.xlane.xlu0 %4789
  %v4791 = vlog2.pop %v4787
  %v4792 = vmul.f32 %v4791, 0.6931472
  %v4793 = vlog2.pop %v4790
  %v4794 = vmul.f32 %v4793, 0.6931472
  %v4795 = vsub.f32 %v4779, %v4792
  %v4796 = vsub.f32 %v4780, %v4794
  %4797 = vst.msk [vmem:[%s101] sm:$0xff] %vm3352, %v4795
  %4798 = vst.msk [vmem:[%s101 + $0x8] sm:$0xff] %vm3352, %v4796
  // Predicated region
  $region194: #{tpu_custom_call.1} parent=0 // pred_check
    _
  $region195: #{tpu_custom_call.1} parent=0 // pred_check_branch
    %4800 = sbr.rel (0) target = $region197
  $region196: #{tpu_custom_call.1} parent=0 // pred_region
    _
  $region197: #{tpu_custom_call.1} parent=0 // pred_fallthru
    _
  // Predicated region
  $region198: #{tpu_custom_call.1} parent=0 // pred_check
    _
  $region199: #{tpu_custom_call.1} parent=0 // pred_check_branch
    %4802 = sbr.rel (0) target = $region201
  $region200: #{tpu_custom_call.1} parent=0 // pred_region
    _
  $region201: #{tpu_custom_call.1} parent=0 // pred_fallthru
    _
  // Predicated region
  $region202: #{tpu_custom_call.1} parent=0 // pred_check
    _
  $region203: #{tpu_custom_call.1} parent=0 // pred_check_branch
    %4804 = sbr.rel (0) target = $region205
  $region204: #{tpu_custom_call.1} parent=0 // pred_region
    _
  $region205: #{tpu_custom_call.1} parent=0 // pred_fallthru
    _
  // Predicated region
  $region206: #{tpu_custom_call.1} parent=0 // pred_check
    _
  $region207: #{tpu_custom_call.1} parent=0 // pred_check_branch
    %4806 = sbr.rel (0) target = $region209
  $region208: #{tpu_custom_call.1} parent=0 // pred_region
    _
  $region209: #{tpu_custom_call.1} parent=0 // pred_fallthru
    _
  // Predicated region
  $region210: #{tpu_custom_call.1} parent=0 // pred_check
    _
  $region211: #{tpu_custom_call.1} parent=0 // pred_check_branch
    %4808 = sbr.rel (0) target = $region213
  $region212: #{tpu_custom_call.1} parent=0 // pred_region
    _
  $region213: #{tpu_custom_call.1} parent=0 // pred_fallthru
    _
  // Predicated region
  $region214: #{tpu_custom_call.1} parent=0 // pred_check
    _
  $region215: #{tpu_custom_call.1} parent=0 // pred_check_branch
    %4810 = sbr.rel (0) target = $region217
  $region216: #{tpu_custom_call.1} parent=0 // pred_region
    _
  $region217: #{tpu_custom_call.1} parent=0 // pred_fallthru
    _

</llo_original>
